<compile_context>
chip_gen: v7x
topology: tpu7x:2x2x1
jax: 0.10.0
libtpu: 0.0.40
codegen_flags: <defaults>
</compile_context>

<pallas_src>
import math

import jax
import jax.numpy as jnp
from jax.experimental import pallas as pl
from jax.experimental.pallas import tpu as pltpu

# Scaled-down, shape-consistent demo config (n_embd multiple of 128 for lane
# density; hidden = 4 * n_embd exactly as in the PyTorch module).
CONFIG = {
    "n_embd": 128,
    "mlp_ratio": 4,
}

_SQRT_HALF = 1.0 / math.sqrt(2.0)


def _erf_approx(z):
    """Abramowitz & Stegun 7.1.26 erf approximation (|err| <= 1.5e-7 in f32).

    The divide is lowered to an approximate EUP reciprocal so the dominant
    GELU work stays off the VALU where possible; exp also runs on the EUP.
    """
    a1, a2, a3, a4, a5 = (0.254829592, -0.284496736, 1.421413741,
                          -1.453152027, 1.061405429)
    p = 0.3275911
    az = jnp.abs(z)
    t = pl.reciprocal(1.0 + p * az, approx=True)          # EUP, not VALU div
    poly = ((((a5 * t + a4) * t + a3) * t + a2) * t + a1) * t
    y = 1.0 - poly * jnp.exp(-az * az)                    # exp on EUP
    return jnp.where(z >= 0.0, y, -y)


def _gelu_exact(x):
    # torch.nn.GELU() default: 0.5 * x * (1 + erf(x / sqrt(2)))
    return 0.5 * x * (1.0 + _erf_approx(x * _SQRT_HALF))


def _mlp_kernel(x_ref, wfc_ref, bfc_ref, wproj_ref, bproj_ref, o_ref):
    # x block: (TM, C) bf16.  Weights are bf16 and VMEM-resident (constant
    # index map); biases are f32 and added to the f32 MXU accumulator.
    x = x_ref[...]                                                # (TM, C) bf16

    h = jnp.dot(x, wfc_ref[...], preferred_element_type=jnp.float32)
    h = h + bfc_ref[...]                                          # (TM, 4C) f32
    h = _gelu_exact(h)                                            # f32 GELU
    # TODO(synk): on v6e/v7x the GELU could run in bf16 (bf16 VPU/EUP) for
    # ~2x VALU/EUP throughput; kept f32 here for accuracy headroom.

    out = jnp.dot(h.astype(jnp.bfloat16), wproj_ref[...],
                  preferred_element_type=jnp.float32)
    out = out + bproj_ref[...]                                    # (TM, C) f32

    o_ref[...] = out.astype(o_ref.dtype)


def _build_mlp_call(m_pad, tm, C, H, out_dtype, *, single_buffer_weights,
                    vmem_limit_bytes, cost_estimate):
    if single_buffer_weights:
        def resident(shape):
            # Constant block index across the grid -> no need to double-buffer.
            return pl.BlockSpec(shape, lambda i: (0, 0),
                                pipeline_mode=pl.Buffered(1))
    else:
        def resident(shape):
            return pl.BlockSpec(shape, lambda i: (0, 0))

    return pl.pallas_call(
        _mlp_kernel,
        out_shape=jax.ShapeDtypeStruct((m_pad, C), out_dtype),
        grid_spec=pltpu.PrefetchScalarGridSpec(
            num_scalar_prefetch=0,
            grid=(m_pad // tm,),
            in_specs=[
                pl.BlockSpec((tm, C), lambda i: (i, 0)),   # x row block (bf16)
                resident((C, H)),                          # W_fc   (bf16)
                resident((1, H)),                          # b_fc   (f32)
                resident((H, C)),                          # W_proj (bf16)
                resident((1, C)),                          # b_proj (f32)
            ],
            out_specs=pl.BlockSpec((tm, C), lambda i: (i, 0)),
        ),
        compiler_params=pltpu.CompilerParams(
            dimension_semantics=("parallel",),
            vmem_limit_bytes=vmem_limit_bytes),
        cost_estimate=cost_estimate,
    )


def mlp_forward(x, w_fc, b_fc, w_proj, b_proj, *, block_rows=512):
    """x: (B, T, C) f32.  Weights use (in, out) convention: y = x @ W + b."""
    B, T, C = x.shape
    H = w_fc.shape[1]
    assert w_fc.shape == (C, H)
    assert w_proj.shape == (H, C)

    # Flatten batch*sequence into one row axis so every matmul is MXU-filling.
    M = B * T
    x2 = x.reshape(M, C)

    # --- row-tile selection ---------------------------------------------
    # Prefer big row tiles (per-grid-step overhead ~0.35us / ~600 cycles),
    # but keep >= 2 grid steps when M allows so both v7x TensorCores get
    # work and the x/out DMAs can pipeline behind compute.
    tm = None
    for cand in (1024, 512, 256, 128):
        if cand <= block_rows and pl.cdiv(M, cand) >= 2:
            tm = cand
            break
    if tm is None:                       # tiny M: one full-extent row block
        tm = min(max(block_rows, 8), pl.cdiv(M, 8) * 8)

    m_pad = pl.cdiv(M, tm) * tm
    if m_pad != M:
        x2 = jnp.pad(x2, ((0, m_pad - M), (0, 0)))

    # --- bf16 MXU operands, f32 accumulation / bias / output --------------
    x2 = x2.astype(jnp.bfloat16)
    w_fc_b = w_fc.astype(jnp.bfloat16)
    w_proj_b = w_proj.astype(jnp.bfloat16)
    b_fc2 = b_fc.reshape(1, H).astype(jnp.float32)
    b_proj2 = b_proj.reshape(1, C).astype(jnp.float32)

    # --- explicit VMEM budget ---------------------------------------------
    w_bytes = (C * H + H * C) * 2                 # bf16 resident weights
    bias_bytes = (H + C) * 4
    x_tile = tm * C * 2                           # bf16 input tile
    o_tile = tm * C * 4                           # f32 output tile
    h_tile = tm * H * 4                           # f32 hidden activation
    needed = (2 * (x_tile + o_tile)               # double-buffered x / out
              + 2 * (w_bytes + bias_bytes)        # conservative (if 2-buffered)
              + 2 * h_tile + (2 << 20))           # activations + slack
    vmem_limit = int(min(max(needed, 32 << 20), 64 << 20))

    cost = pl.CostEstimate(
        flops=4 * m_pad * C * H,                  # two matmuls: 2*M*C*H each
        transcendentals=2 * m_pad * H,            # exp + approx reciprocal
        bytes_accessed=(m_pad * C * 2 + w_bytes + bias_bytes + m_pad * C * 4))

    args = (x2, w_fc_b, b_fc2, w_proj_b, b_proj2)
    try:
        out2 = _build_mlp_call(m_pad, tm, C, H, x.dtype,
                               single_buffer_weights=True,
                               vmem_limit_bytes=vmem_limit,
                               cost_estimate=cost)(*args)
    except Exception:
        # Fallback if this Pallas build rejects Buffered(1) on pallas_call
        # BlockSpecs; identical kernel, default (double) buffering.
        out2 = _build_mlp_call(m_pad, tm, C, H, x.dtype,
                               single_buffer_weights=False,
                               vmem_limit_bytes=vmem_limit,
                               cost_estimate=cost)(*args)

    return out2[:M].reshape(B, T, C)


# --------------------------- pure-JAX reference ------------------------------
def reference(x, w_fc, b_fc, w_proj, b_proj):
    h = x @ w_fc + b_fc.reshape(1, 1, -1)
    h = jax.nn.gelu(h, approximate=False)   # exact erf GELU == torch.nn.GELU()
    return h @ w_proj + b_proj.reshape(1, 1, -1)


if __name__ == "__main__":
    B, T = 2, 128
    C = CONFIG["n_embd"]
    H = CONFIG["mlp_ratio"] * C

    key = jax.random.PRNGKey(0)
    kx, k1, k2, k3, k4 = jax.random.split(key, 5)

    x = jax.random.normal(kx, (B, T, C), dtype=jnp.float32)

    # deterministic "Linear" params (scaled normals), W stored as (in, out)
    w_fc = jax.random.normal(k1, (C, H), dtype=jnp.float32) * (1.0 / math.sqrt(C))
    b_fc = jax.random.normal(k2, (H,), dtype=jnp.float32) * 0.02
    w_proj = jax.random.normal(k3, (H, C), dtype=jnp.float32) * (1.0 / math.sqrt(H))
    b_proj = jax.random.normal(k4, (C,), dtype=jnp.float32) * 0.02

    out = mlp_forward(x, w_fc, b_fc, w_proj, b_proj)
    out = jax.block_until_ready(out)

    ref = reference(x, w_fc, b_fc, w_proj, b_proj)
    assert out.shape == (B, T, C)
    err = float(jnp.max(jnp.abs(out - ref)))
    # bf16 MXU operands (with f32 accumulation) dominate the error budget vs
    # the f32 reference; the erf approximation / approx reciprocal contribute
    # < 1e-5.  Expected max-abs error ~1e-2 at these magnitudes.
    assert err < 5e-2, f"mismatch vs f32 reference: {err}"

    print("KERNEL_OK")
</pallas_src>

<mosaic_0001>
module attributes {stable_mosaic.version = 11 : i64} {
  func.func @_mlp_kernel(%arg0: i32, %arg1: memref<128x128xbf16, #tpu.memory_space<vmem>>, %arg2: memref<128x512xbf16, #tpu.memory_space<vmem>>, %arg3: memref<1x512xf32, #tpu.memory_space<vmem>>, %arg4: memref<512x128xbf16, #tpu.memory_space<vmem>>, %arg5: memref<1x128xf32, #tpu.memory_space<vmem>>, %arg6: memref<128x128xf32, #tpu.memory_space<vmem>>) attributes {dimension_semantics = [#tpu.dimension_semantics<parallel>], iteration_bounds = array<i64: 2>, scalar_prefetch = 0 : i64, scratch_operands = 0 : i64, tpu.core_type = #tpu.core_type<tc>, window_params = [{transform_indices = @transform_0, window_bounds = array<i64: 128, 128>}, {pipeline_mode = #tpu.pipeline_mode<synchronous>, transform_indices = @transform_1, window_bounds = array<i64: 128, 512>}, {pipeline_mode = #tpu.pipeline_mode<synchronous>, transform_indices = @transform_2, window_bounds = array<i64: 1, 512>}, {pipeline_mode = #tpu.pipeline_mode<synchronous>, transform_indices = @transform_3, window_bounds = array<i64: 512, 128>}, {pipeline_mode = #tpu.pipeline_mode<synchronous>, transform_indices = @transform_4, window_bounds = array<i64: 1, 128>}, {transform_indices = @transform_5, window_bounds = array<i64: 128, 128>}]} {
    %c0 = arith.constant 0 : index
    %c0_0 = arith.constant 0 : index
    %0 = vector.load %arg1[%c0, %c0_0] : memref<128x128xbf16, #tpu.memory_space<vmem>>, vector<128x128xbf16>
    %c0_1 = arith.constant 0 : index
    %c0_2 = arith.constant 0 : index
    %1 = vector.load %arg2[%c0_1, %c0_2] : memref<128x512xbf16, #tpu.memory_space<vmem>>, vector<128x512xbf16>
    %cst = arith.constant dense<0.000000e+00> : vector<128x512xf32>
    %2 = tpu.matmul %0, %1, %cst {dimension_numbers = #tpu.dot_dimension_numbers<[1], [0], [0], [1], [0, 0, 1, 1], [], []>} : vector<128x128xbf16>, vector<128x512xbf16>, vector<128x512xf32> -> vector<128x512xf32>
    %c0_3 = arith.constant 0 : index
    %c0_4 = arith.constant 0 : index
    %3 = vector.load %arg3[%c0_3, %c0_4] : memref<1x512xf32, #tpu.memory_space<vmem>>, vector<1x512xf32>
    %4 = vector.broadcast %3 : vector<1x512xf32> to vector<128x512xf32>
    %5 = arith.addf %2, %4 : vector<128x512xf32>
    %cst_5 = arith.constant 5.000000e-01 : f32
    %6 = vector.broadcast %cst_5 : f32 to vector<128x512xf32>
    %7 = arith.mulf %6, %5 : vector<128x512xf32>
    %cst_6 = arith.constant 0.707106769 : f32
    %8 = vector.broadcast %cst_6 : f32 to vector<128x512xf32>
    %9 = arith.mulf %5, %8 : vector<128x512xf32>
    %10 = math.absf %9 : vector<128x512xf32>
    %cst_7 = arith.constant 0.327591091 : f32
    %11 = vector.broadcast %cst_7 : f32 to vector<128x512xf32>
    %12 = arith.mulf %11, %10 : vector<128x512xf32>
    %cst_8 = arith.constant 1.000000e+00 : f32
    %13 = vector.broadcast %cst_8 : f32 to vector<128x512xf32>
    %14 = arith.addf %13, %12 : vector<128x512xf32>
    %15 = tpu.reciprocal %14 {approx = true} : vector<128x512xf32> -> vector<128x512xf32>
    %cst_9 = arith.constant 1.06140542 : f32
    %16 = vector.broadcast %cst_9 : f32 to vector<128x512xf32>
    %17 = arith.mulf %16, %15 : vector<128x512xf32>
    %cst_10 = arith.constant -1.45315206 : f32
    %18 = vector.broadcast %cst_10 : f32 to vector<128x512xf32>
    %19 = arith.addf %17, %18 : vector<128x512xf32>
    %20 = arith.mulf %19, %15 : vector<128x512xf32>
    %cst_11 = arith.constant 1.42141378 : f32
    %21 = vector.broadcast %cst_11 : f32 to vector<128x512xf32>
    %22 = arith.addf %20, %21 : vector<128x512xf32>
    %23 = arith.mulf %22, %15 : vector<128x512xf32>
    %cst_12 = arith.constant -0.284496725 : f32
    %24 = vector.broadcast %cst_12 : f32 to vector<128x512xf32>
    %25 = arith.addf %23, %24 : vector<128x512xf32>
    %26 = arith.mulf %25, %15 : vector<128x512xf32>
    %cst_13 = arith.constant 0.254829586 : f32
    %27 = vector.broadcast %cst_13 : f32 to vector<128x512xf32>
    %28 = arith.addf %26, %27 : vector<128x512xf32>
    %29 = arith.mulf %28, %15 : vector<128x512xf32>
    %cst_14 = arith.constant 0.000000e+00 : f32
    %30 = vector.broadcast %cst_14 : f32 to vector<128x512xf32>
    %31 = arith.subf %30, %10 : vector<128x512xf32>
    %32 = arith.mulf %31, %10 : vector<128x512xf32>
    %33 = math.exp %32 : vector<128x512xf32>
    %34 = arith.mulf %29, %33 : vector<128x512xf32>
    %cst_15 = arith.constant 1.000000e+00 : f32
    %35 = vector.broadcast %cst_15 : f32 to vector<128x512xf32>
    %36 = arith.subf %35, %34 : vector<128x512xf32>
    %cst_16 = arith.constant 0.000000e+00 : f32
    %37 = vector.broadcast %cst_16 : f32 to vector<128x512xf32>
    %38 = arith.cmpf oge, %9, %37 : vector<128x512xf32>
    %cst_17 = arith.constant 0.000000e+00 : f32
    %39 = vector.broadcast %cst_17 : f32 to vector<128x512xf32>
    %40 = arith.subf %39, %36 : vector<128x512xf32>
    %41 = arith.select %38, %36, %40 : vector<128x512xi1>, vector<128x512xf32>
    %cst_18 = arith.constant 1.000000e+00 : f32
    %42 = vector.broadcast %cst_18 : f32 to vector<128x512xf32>
    %43 = arith.addf %42, %41 : vector<128x512xf32>
    %44 = arith.mulf %7, %43 : vector<128x512xf32>
    %45 = arith.truncf %44 : vector<128x512xf32> to vector<128x512xbf16>
    %c0_19 = arith.constant 0 : index
    %c0_20 = arith.constant 0 : index
    %46 = vector.load %arg4[%c0_19, %c0_20] : memref<512x128xbf16, #tpu.memory_space<vmem>>, vector<512x128xbf16>
    %cst_21 = arith.constant dense<0.000000e+00> : vector<128x128xf32>
    %47 = tpu.matmul %45, %46, %cst_21 {dimension_numbers = #tpu.dot_dimension_numbers<[1], [0], [0], [1], [0, 0, 1, 1], [], []>} : vector<128x512xbf16>, vector<512x128xbf16>, vector<128x128xf32> -> vector<128x128xf32>
    %c0_22 = arith.constant 0 : index
    %c0_23 = arith.constant 0 : index
    %48 = vector.load %arg5[%c0_22, %c0_23] : memref<1x128xf32, #tpu.memory_space<vmem>>, vector<1x128xf32>
    %49 = vector.broadcast %48 : vector<1x128xf32> to vector<128x128xf32>
    %50 = arith.addf %47, %49 : vector<128x128xf32>
    %c0_24 = arith.constant 0 : index
    %c0_25 = arith.constant 0 : index
    %51 = vector.load %arg6[%c0_24, %c0_25] : memref<128x128xf32, #tpu.memory_space<vmem>>, vector<128x128xf32>
    tpu.vector_store %arg6[%c0_24, %c0_25], %50 {strides = array<i32>} : memref<128x128xf32, #tpu.memory_space<vmem>>, vector<128x128xf32>,
    return
  }
  func.func @transform_0(%arg0: i32) -> (i32, i32) {
    %c0_i32 = arith.constant 0 : i32
    %c0_i32_0 = arith.constant 0 : i32
    return %arg0, %c0_i32 : i32, i32
  }
  func.func @transform_1(%arg0: i32) -> (i32, i32) {
    %c0_i32 = arith.constant 0 : i32
    %c0_i32_0 = arith.constant 0 : i32
    %c0_i32_1 = arith.constant 0 : i32
    return %c0_i32, %c0_i32_0 : i32, i32
  }
  func.func @transform_2(%arg0: i32) -> (i32, i32) {
    %c0_i32 = arith.constant 0 : i32
    %c0_i32_0 = arith.constant 0 : i32
    %c0_i32_1 = arith.constant 0 : i32
    return %c0_i32, %c0_i32_0 : i32, i32
  }
  func.func @transform_3(%arg0: i32) -> (i32, i32) {
    %c0_i32 = arith.constant 0 : i32
    %c0_i32_0 = arith.constant 0 : i32
    %c0_i32_1 = arith.constant 0 : i32
    return %c0_i32, %c0_i32_0 : i32, i32
  }
  func.func @transform_4(%arg0: i32) -> (i32, i32) {
    %c0_i32 = arith.constant 0 : i32
    %c0_i32_0 = arith.constant 0 : i32
    %c0_i32_1 = arith.constant 0 : i32
    return %c0_i32, %c0_i32_0 : i32, i32
  }
  func.func @transform_5(%arg0: i32) -> (i32, i32) {
    %c0_i32 = arith.constant 0 : i32
    %c0_i32_0 = arith.constant 0 : i32
    return %arg0, %c0_i32 : i32, i32
  }
}

module attributes {stable_mosaic.version = 11 : i64} {
  func.func @_mlp_kernel(%arg0: i32, %arg1: memref<128x128xbf16, #tpu.memory_space<vmem>>, %arg2: memref<128x512xbf16, #tpu.memory_space<vmem>>, %arg3: memref<1x512xf32, #tpu.memory_space<vmem>>, %arg4: memref<512x128xbf16, #tpu.memory_space<vmem>>, %arg5: memref<1x128xf32, #tpu.memory_space<vmem>>, %arg6: memref<128x128xf32, #tpu.memory_space<vmem>>) attributes {dimension_semantics = [#tpu.dimension_semantics<parallel>], iteration_bounds = array<i64: 2>, scalar_prefetch = 0 : i64, scratch_operands = 0 : i64, tpu.core_type = #tpu.core_type<tc>, window_params = [{transform_indices = @transform_0, window_bounds = array<i64: 128, 128>}, {pipeline_mode = #tpu.pipeline_mode<synchronous>, transform_indices = @transform_1, window_bounds = array<i64: 128, 512>}, {pipeline_mode = #tpu.pipeline_mode<synchronous>, transform_indices = @transform_2, window_bounds = array<i64: 1, 512>}, {pipeline_mode = #tpu.pipeline_mode<synchronous>, transform_indices = @transform_3, window_bounds = array<i64: 512, 128>}, {pipeline_mode = #tpu.pipeline_mode<synchronous>, transform_indices = @transform_4, window_bounds = array<i64: 1, 128>}, {transform_indices = @transform_5, window_bounds = array<i64: 128, 128>}]} {
    %c0 = arith.constant 0 : index
    %c0_0 = arith.constant 0 : index
    %0 = vector.load %arg1[%c0, %c0_0] : memref<128x128xbf16, #tpu.memory_space<vmem>>, vector<128x128xbf16>
    %c0_1 = arith.constant 0 : index
    %c0_2 = arith.constant 0 : index
    %1 = vector.load %arg2[%c0_1, %c0_2] : memref<128x512xbf16, #tpu.memory_space<vmem>>, vector<128x512xbf16>
    %cst = arith.constant dense<0.000000e+00> : vector<128x512xf32>
    %2 = tpu.matmul %0, %1, %cst {dimension_numbers = #tpu.dot_dimension_numbers<[1], [0], [0], [1], [0, 0, 1, 1], [], []>} : vector<128x128xbf16>, vector<128x512xbf16>, vector<128x512xf32> -> vector<128x512xf32>
    %c0_3 = arith.constant 0 : index
    %c0_4 = arith.constant 0 : index
    %3 = vector.load %arg3[%c0_3, %c0_4] : memref<1x512xf32, #tpu.memory_space<vmem>>, vector<1x512xf32>
    %4 = vector.broadcast %3 : vector<1x512xf32> to vector<128x512xf32>
    %5 = arith.addf %2, %4 : vector<128x512xf32>
    %cst_5 = arith.constant 5.000000e-01 : f32
    %6 = vector.broadcast %cst_5 : f32 to vector<128x512xf32>
    %7 = arith.mulf %6, %5 : vector<128x512xf32>
    %cst_6 = arith.constant 0.707106769 : f32
    %8 = vector.broadcast %cst_6 : f32 to vector<128x512xf32>
    %9 = arith.mulf %5, %8 : vector<128x512xf32>
    %10 = math.absf %9 : vector<128x512xf32>
    %cst_7 = arith.constant 0.327591091 : f32
    %11 = vector.broadcast %cst_7 : f32 to vector<128x512xf32>
    %12 = arith.mulf %11, %10 : vector<128x512xf32>
    %cst_8 = arith.constant 1.000000e+00 : f32
    %13 = vector.broadcast %cst_8 : f32 to vector<128x512xf32>
    %14 = arith.addf %13, %12 : vector<128x512xf32>
    %15 = tpu.reciprocal %14 {approx = true} : vector<128x512xf32> -> vector<128x512xf32>
    %cst_9 = arith.constant 1.06140542 : f32
    %16 = vector.broadcast %cst_9 : f32 to vector<128x512xf32>
    %17 = arith.mulf %16, %15 : vector<128x512xf32>
    %cst_10 = arith.constant -1.45315206 : f32
    %18 = vector.broadcast %cst_10 : f32 to vector<128x512xf32>
    %19 = arith.addf %17, %18 : vector<128x512xf32>
    %20 = arith.mulf %19, %15 : vector<128x512xf32>
    %cst_11 = arith.constant 1.42141378 : f32
    %21 = vector.broadcast %cst_11 : f32 to vector<128x512xf32>
    %22 = arith.addf %20, %21 : vector<128x512xf32>
    %23 = arith.mulf %22, %15 : vector<128x512xf32>
    %cst_12 = arith.constant -0.284496725 : f32
    %24 = vector.broadcast %cst_12 : f32 to vector<128x512xf32>
    %25 = arith.addf %23, %24 : vector<128x512xf32>
    %26 = arith.mulf %25, %15 : vector<128x512xf32>
    %cst_13 = arith.constant 0.254829586 : f32
    %27 = vector.broadcast %cst_13 : f32 to vector<128x512xf32>
    %28 = arith.addf %26, %27 : vector<128x512xf32>
    %29 = arith.mulf %28, %15 : vector<128x512xf32>
    %cst_14 = arith.constant 0.000000e+00 : f32
    %30 = vector.broadcast %cst_14 : f32 to vector<128x512xf32>
    %31 = arith.subf %30, %10 : vector<128x512xf32>
    %32 = arith.mulf %31, %10 : vector<128x512xf32>
    %33 = math.exp %32 : vector<128x512xf32>
    %34 = arith.mulf %29, %33 : vector<128x512xf32>
    %cst_15 = arith.constant 1.000000e+00 : f32
    %35 = vector.broadcast %cst_15 : f32 to vector<128x512xf32>
    %36 = arith.subf %35, %34 : vector<128x512xf32>
    %cst_16 = arith.constant 0.000000e+00 : f32
    %37 = vector.broadcast %cst_16 : f32 to vector<128x512xf32>
    %38 = arith.cmpf oge, %9, %37 : vector<128x512xf32>
    %cst_17 = arith.constant 0.000000e+00 : f32
    %39 = vector.broadcast %cst_17 : f32 to vector<128x512xf32>
    %40 = arith.subf %39, %36 : vector<128x512xf32>
    %41 = arith.select %38, %36, %40 : vector<128x512xi1>, vector<128x512xf32>
    %cst_18 = arith.constant 1.000000e+00 : f32
    %42 = vector.broadcast %cst_18 : f32 to vector<128x512xf32>
    %43 = arith.addf %42, %41 : vector<128x512xf32>
    %44 = arith.mulf %7, %43 : vector<128x512xf32>
    %45 = arith.truncf %44 : vector<128x512xf32> to vector<128x512xbf16>
    %c0_19 = arith.constant 0 : index
    %c0_20 = arith.constant 0 : index
    %46 = vector.load %arg4[%c0_19, %c0_20] : memref<512x128xbf16, #tpu.memory_space<vmem>>, vector<512x128xbf16>
    %cst_21 = arith.constant dense<0.000000e+00> : vector<128x128xf32>
    %47 = tpu.matmul %45, %46, %cst_21 {dimension_numbers = #tpu.dot_dimension_numbers<[1], [0], [0], [1], [0, 0, 1, 1], [], []>} : vector<128x512xbf16>, vector<512x128xbf16>, vector<128x128xf32> -> vector<128x128xf32>
    %c0_22 = arith.constant 0 : index
    %c0_23 = arith.constant 0 : index
    %48 = vector.load %arg5[%c0_22, %c0_23] : memref<1x128xf32, #tpu.memory_space<vmem>>, vector<1x128xf32>
    %49 = vector.broadcast %48 : vector<1x128xf32> to vector<128x128xf32>
    %50 = arith.addf %47, %49 : vector<128x128xf32>
    %c0_24 = arith.constant 0 : index
    %c0_25 = arith.constant 0 : index
    %51 = vector.load %arg6[%c0_24, %c0_25] : memref<128x128xf32, #tpu.memory_space<vmem>>, vector<128x128xf32>
    tpu.vector_store %arg6[%c0_24, %c0_25], %50 {strides = array<i32>} : memref<128x128xf32, #tpu.memory_space<vmem>>, vector<128x128xf32>,
    return
  }
  func.func @transform_0(%arg0: i32) -> (i32, i32) {
    %c0_i32 = arith.constant 0 : i32
    %c0_i32_0 = arith.constant 0 : i32
    return %arg0, %c0_i32 : i32, i32
  }
  func.func @transform_1(%arg0: i32) -> (i32, i32) {
    %c0_i32 = arith.constant 0 : i32
    %c0_i32_0 = arith.constant 0 : i32
    %c0_i32_1 = arith.constant 0 : i32
    return %c0_i32, %c0_i32_0 : i32, i32
  }
  func.func @transform_2(%arg0: i32) -> (i32, i32) {
    %c0_i32 = arith.constant 0 : i32
    %c0_i32_0 = arith.constant 0 : i32
    %c0_i32_1 = arith.constant 0 : i32
    return %c0_i32, %c0_i32_0 : i32, i32
  }
  func.func @transform_3(%arg0: i32) -> (i32, i32) {
    %c0_i32 = arith.constant 0 : i32
    %c0_i32_0 = arith.constant 0 : i32
    %c0_i32_1 = arith.constant 0 : i32
    return %c0_i32, %c0_i32_0 : i32, i32
  }
  func.func @transform_4(%arg0: i32) -> (i32, i32) {
    %c0_i32 = arith.constant 0 : i32
    %c0_i32_0 = arith.constant 0 : i32
    %c0_i32_1 = arith.constant 0 : i32
    return %c0_i32, %c0_i32_0 : i32, i32
  }
  func.func @transform_5(%arg0: i32) -> (i32, i32) {
    %c0_i32 = arith.constant 0 : i32
    %c0_i32_0 = arith.constant 0 : i32
    return %arg0, %c0_i32 : i32, i32
  }
}

</mosaic_0001>

<llo_original>
// kernel: tpu_custom_call.1
$region0: #{tpu_custom_call.1}
  #allocation0 [shape = 'u32[]', space=smem, size = 0x4, offset = 0x4, fixed_abs, tag = 'smem constant byte address 0x4 - core index']
  #allocation1 [shape = 'u32[144,128]{1,0:T(1,128)}', space=vmem, size = 0x12000, scoped, tag = 'internal scratch']
  %s0 = inlined_call_operand.hbm [shape: bf16[256,128], index: 0, kind: input, shape index: {}]
  %s1 = inlined_call_operand.hbm [shape: bf16[128,512], index: 1, kind: input, shape index: {}]
  %s2 = inlined_call_operand.vmem [shape: f32[1,512], index: 2, kind: input, shape index: {}]
  %s3 = inlined_call_operand.hbm [shape: bf16[512,128], index: 3, kind: input, shape index: {}]
  %s4 = inlined_call_operand.vmem [shape: f32[1,128], index: 4, kind: input, shape index: {}]
  %s5 = inlined_call_operand.hbm [shape: f32[256,128], index: 5, kind: output, shape index: {}]
  %s6 = sld [smem:[#allocation0]]
  $region65: #{tpu_custom_call.1} parent=0
    _
  %s8 = ssub.s32 1, %s6
  %s9 = scalar_select 0, %s8, %s6
  $region1: #{tpu_custom_call.1} parent=0
    #allocation2 [shape = 'u8[65536]{0}', space=vmem, size = 0x10000, scoped, tag = 'input window, operand 0']
    #allocation3 [shape = 's32[2]{0}', space=sflag, size = 0x8, scoped, tag = 'scoped memory for tpu_custom_call.1']
    #allocation4 [shape = 's32[2]{0}', space=sflag, size = 0x8, scoped, tag = 'scoped memory for tpu_custom_call.1']
    #allocation5 [shape = 'u8[131072]{0}', space=vmem, size = 0x20000, scoped, tag = 'input window, operand 1, single buffered']
    #allocation6 [shape = 's32[1]{0}', space=sflag, size = 0x4, scoped, tag = 'scoped memory for tpu_custom_call.1']
    #allocation7 [shape = 'u8[131072]{0}', space=vmem, size = 0x20000, scoped, tag = 'input window, operand 3, single buffered']
    #allocation8 [shape = 'u8[131072]{0}', space=vmem, size = 0x20000, scoped, tag = 'output window, operand 0']
    %10 = vsyncpa [#allocation3], 0
    %s11 = scalar_lea.sflag [#allocation3], 1
    %12 = vsyncpa %s11, 0
    %13 = vsyncpa [#allocation6], 0
    %14 = vsyncpa [#allocation4], 0
    %s15 = scalar_lea.sflag [#allocation4], 1
    %16 = vsyncpa %s15, 0
    loop: start=0, step=1, limit=4
    $region2: #{tpu_custom_call.1} parent=1 // loop_pre_header
      _
    $region3: #{tpu_custom_call.1} parent=1 // loop_header
      %s18 = sphi 0, %s22
      %p19 = scmp.ge.s32.totalorder %s18, 4
      %s28 = sphi 0, %s30
      %s31 = sphi 0, %s28
      %s32 = sphi 0, %s31
      %s48 = sphi 0, %s32
      %s52 = sphi 0, %s52
      %s54 = sphi 0, %s52
      %s55 = sphi 0, %s54
      %s69 = sphi 0, %s55
      %s73 = sphi 0, %s73
      %s75 = sphi 0, %s73
      %s76 = sphi 0, %s75
      %s90 = sphi 0, %s76
      %s94 = sphi 0, %s94
      %s96 = sphi 0, %s94
      %s97 = sphi 0, %s96
      %s111 = sphi 0, %s97
      %s115 = sphi 0, %s115
      %s117 = sphi 0, %s115
      %s118 = sphi 0, %s117
      %s132 = sphi 0, %s118
      %s138 = sphi 0, %s140
      %s141 = sphi 0, %s138
      %s142 = sphi 0, %s141
      %s158 = sphi 0, %s142
    $region4: #{tpu_custom_call.1} parent=1 // loop_header_branch
      %21 = sbr.rel (%p19) target = $region8
    $region5: #{tpu_custom_call.1} parent=1 // loop_body
      %s23 = ssub.s32 %s18, 1
      %s24 = ssub.s32 %s18, 2
      %s25 = sadd.s32 %s18, 1
      %s26 = ssub.s32 %s18, %s25
      %p27 = scmp.eq.s32.totalorder %s26, 0
      %s29 = sadd.s32 %s28, 1
      %s30 = scalar_select %p27, %s28, %s29
      %p33 = pneg %p27
      %p34 = scmp.eq.s32.totalorder %s18, 1
      %p35 = por %p33, %p34
      %p36 = scmp.ne.s32.totalorder %s28, %s31
      %p37 = scmp.eq.s32.totalorder %s18, 0
      %p38 = por %p36, %p37
      %p39 = scmp.ne.s32.totalorder %s28, %s31
      %p40 = scmp.eq.s32.totalorder %s23, 1
      %p41 = por %p39, %p40
      %p42 = scmp.ne.s32.totalorder %s31, %s32
      %p43 = scmp.eq.s32.totalorder %s23, 0
      %p44 = por %p42, %p43
      %p45 = scmp.ne.s32.totalorder %s31, %s32
      %p46 = scmp.eq.s32.totalorder %s24, 1
      %p47 = por %p45, %p46
      %p49 = scmp.ne.s32.totalorder %s32, %s48
      %p50 = scmp.eq.s32.totalorder %s24, 0
      %p51 = por %p49, %p50
      %s53 = sadd.s32 %s52, 1
      %p56 = scmp.eq.s32.totalorder %s18, 1
      %p57 = scmp.ne.s32.totalorder %s52, %s54
      %p58 = scmp.eq.s32.totalorder %s18, 0
      %p59 = por %p57, %p58
      %p60 = scmp.ne.s32.totalorder %s52, %s54
      %p61 = scmp.eq.s32.totalorder %s23, 1
      %p62 = por %p60, %p61
      %p63 = scmp.ne.s32.totalorder %s54, %s55
      %p64 = scmp.eq.s32.totalorder %s23, 0
      %p65 = por %p63, %p64
      %p66 = scmp.ne.s32.totalorder %s54, %s55
      %p67 = scmp.eq.s32.totalorder %s24, 1
      %p68 = por %p66, %p67
      %p70 = scmp.ne.s32.totalorder %s55, %s69
      %p71 = scmp.eq.s32.totalorder %s24, 0
      %p72 = por %p70, %p71
      %s74 = sadd.s32 %s73, 1
      %p77 = scmp.eq.s32.totalorder %s18, 1
      %p78 = scmp.ne.s32.totalorder %s73, %s75
      %p79 = scmp.eq.s32.totalorder %s18, 0
      %p80 = por %p78, %p79
      %p81 = scmp.ne.s32.totalorder %s73, %s75
      %p82 = scmp.eq.s32.totalorder %s23, 1
      %p83 = por %p81, %p82
      %p84 = scmp.ne.s32.totalorder %s75, %s76
      %p85 = scmp.eq.s32.totalorder %s23, 0
      %p86 = por %p84, %p85
      %p87 = scmp.ne.s32.totalorder %s75, %s76
      %p88 = scmp.eq.s32.totalorder %s24, 1
      %p89 = por %p87, %p88
      %p91 = scmp.ne.s32.totalorder %s76, %s90
      %p92 = scmp.eq.s32.totalorder %s24, 0
      %p93 = por %p91, %p92
      %s95 = sadd.s32 %s94, 1
      %p98 = scmp.eq.s32.totalorder %s18, 1
      %p99 = scmp.ne.s32.totalorder %s94, %s96
      %p100 = scmp.eq.s32.totalorder %s18, 0
      %p101 = por %p99, %p100
      %p102 = scmp.ne.s32.totalorder %s94, %s96
      %p103 = scmp.eq.s32.totalorder %s23, 1
      %p104 = por %p102, %p103
      %p105 = scmp.ne.s32.totalorder %s96, %s97
      %p106 = scmp.eq.s32.totalorder %s23, 0
      %p107 = por %p105, %p106
      %p108 = scmp.ne.s32.totalorder %s96, %s97
      %p109 = scmp.eq.s32.totalorder %s24, 1
      %p110 = por %p108, %p109
      %p112 = scmp.ne.s32.totalorder %s97, %s111
      %p113 = scmp.eq.s32.totalorder %s24, 0
      %p114 = por %p112, %p113
      %s116 = sadd.s32 %s115, 1
      %p119 = scmp.eq.s32.totalorder %s18, 1
      %p120 = scmp.ne.s32.totalorder %s115, %s117
      %p121 = scmp.eq.s32.totalorder %s18, 0
      %p122 = por %p120, %p121
      %p123 = scmp.ne.s32.totalorder %s115, %s117
      %p124 = scmp.eq.s32.totalorder %s23, 1
      %p125 = por %p123, %p124
      %p126 = scmp.ne.s32.totalorder %s117, %s118
      %p127 = scmp.eq.s32.totalorder %s23, 0
      %p128 = por %p126, %p127
      %p129 = scmp.ne.s32.totalorder %s117, %s118
      %p130 = scmp.eq.s32.totalorder %s24, 1
      %p131 = por %p129, %p130
      %p133 = scmp.ne.s32.totalorder %s118, %s132
      %p134 = scmp.eq.s32.totalorder %s24, 0
      %p135 = por %p133, %p134
      %s136 = ssub.s32 %s18, %s25
      %p137 = scmp.eq.s32.totalorder %s136, 0
      %s139 = sadd.s32 %s138, 1
      %s140 = scalar_select %p137, %s138, %s139
      %p143 = pneg %p137
      %p144 = scmp.eq.s32.totalorder %s18, 1
      %p145 = por %p143, %p144
      %p146 = scmp.ne.s32.totalorder %s138, %s141
      %p147 = scmp.eq.s32.totalorder %s18, 0
      %p148 = por %p146, %p147
      %p149 = scmp.ne.s32.totalorder %s138, %s141
      %p150 = scmp.eq.s32.totalorder %s23, 1
      %p151 = por %p149, %p150
      %p152 = scmp.ne.s32.totalorder %s141, %s142
      %p153 = scmp.eq.s32.totalorder %s23, 0
      %p154 = por %p152, %p153
      %p155 = scmp.ne.s32.totalorder %s141, %s142
      %p156 = scmp.eq.s32.totalorder %s24, 1
      %p157 = por %p155, %p156
      %p159 = scmp.ne.s32.totalorder %s142, %s158
      %p160 = scmp.eq.s32.totalorder %s24, 0
      %p161 = por %p159, %p160
      %p162 = scmp.le.s32.totalorder 1, %s18
      %p163 = scmp.lt.s32.totalorder %s18, 3
      %p164 = pnand %p162, %p163
      %p165 = pneg %p164
      // Predicated region
      $region9: #{tpu_custom_call.1} parent=5 // pred_check
        _
      $region10: #{tpu_custom_call.1} parent=5 // pred_check_branch
        %167 = sbr.rel (%p164) target = $region12
      $region11: #{tpu_custom_call.1} parent=5 // pred_region
        %s168 = ssub.s32 %s18, 1
        // Predicated region
        $region13: #{tpu_custom_call.1} parent=11 // pred_check
          %p169 = pneg %p65
        $region14: #{tpu_custom_call.1} parent=11 // pred_check_branch
          %171 = sbr.rel (%p169) target = $region16
        $region15: #{tpu_custom_call.1} parent=11 // pred_region
          %s173 = ssub.s32 4096, 4096
          %174 = vsyncadd [#allocation6], %s173
          %s175 = sshll.u32 [#allocation5], 4
          %s176 = int_to_ptr.vmem [resolvable:$true] %s175
          %181 = dma.hbm_to_vmem [thread:$0]  %s1, 4096, %s176, [#allocation6], 256, 256, 16
        $region16: #{tpu_custom_call.1} parent=11 // pred_fallthru
          _
        // Predicated region
        $region17: #{tpu_custom_call.1} parent=11 // pred_check
          %p182 = pneg %p86
        $region18: #{tpu_custom_call.1} parent=11 // pred_check_branch
          %184 = sbr.rel (%p182) target = $region20
        $region19: #{tpu_custom_call.1} parent=11 // pred_region
          _
        $region20: #{tpu_custom_call.1} parent=11 // pred_fallthru
          _
        // Predicated region
        $region21: #{tpu_custom_call.1} parent=11 // pred_check
          %p185 = pneg %p107
        $region22: #{tpu_custom_call.1} parent=11 // pred_check_branch
          %187 = sbr.rel (%p185) target = $region24
        $region23: #{tpu_custom_call.1} parent=11 // pred_region
          %s189 = ssub.s32 4096, 4096
          %190 = vsyncadd [#allocation6], %s189
          %s191 = sshll.u32 [#allocation7], 4
          %s192 = int_to_ptr.vmem [resolvable:$true] %s191
          %197 = dma.hbm_to_vmem [thread:$0]  %s3, 4096, %s192, [#allocation6], 64, 64, 4
        $region24: #{tpu_custom_call.1} parent=11 // pred_fallthru
          _
        // Predicated region
        $region25: #{tpu_custom_call.1} parent=11 // pred_check
          %p198 = pneg %p128
        $region26: #{tpu_custom_call.1} parent=11 // pred_check_branch
          %200 = sbr.rel (%p198) target = $region28
        $region27: #{tpu_custom_call.1} parent=11 // pred_region
          _
        $region28: #{tpu_custom_call.1} parent=11 // pred_fallthru
          _
      $region12: #{tpu_custom_call.1} parent=5 // pred_fallthru
        _
      %p201 = scmp.lt.s32.totalorder %s18, 2
      // Predicated region
      $region29: #{tpu_custom_call.1} parent=5 // pred_check
        %p202 = pneg %p201
      $region30: #{tpu_custom_call.1} parent=5 // pred_check_branch
        %204 = sbr.rel (%p202) target = $region32
      $region31: #{tpu_custom_call.1} parent=5 // pred_region
        // Predicated region
        $region33: #{tpu_custom_call.1} parent=31 // pred_check
          %p205 = pneg %p38
        $region34: #{tpu_custom_call.1} parent=31 // pred_check_branch
          %207 = sbr.rel (%p205) target = $region36
        $region35: #{tpu_custom_call.1} parent=31 // pred_region
          %s208 = sand.u32 %s28, 1
          %s209 = scalar_lea.sflag [#allocation3], %s208
          %s210 = sand.u32 %s28, 1
          %s211 = smul.addr %s210, 64
          %s212 = scalar_lea.vmem [#allocation2], %s211
          %s213 = smul.u32 16, %s18
          %s215 = ssub.s32 1024, 1024
          %216 = vsyncadd %s209, %s215
          %s217 = smul.addr %s213, 64
          %s218 = scalar_lea.hbm %s0, %s217
          %s219 = sshll.u32 %s212, 4
          %s220 = int_to_ptr.vmem [resolvable:$true] %s219
          %225 = dma.hbm_to_vmem [thread:$0]  %s218, 1024, %s220, %s209, 64, 64, 4
        $region36: #{tpu_custom_call.1} parent=31 // pred_fallthru
          _
      $region32: #{tpu_custom_call.1} parent=5 // pred_fallthru
        _
      %p226 = scmp.le.s32.totalorder 1, %s18
      %p227 = scmp.lt.s32.totalorder %s18, 3
      %p228 = pnand %p226, %p227
      %p229 = pneg %p228
      // Predicated region
      $region37: #{tpu_custom_call.1} parent=5 // pred_check
        _
      $region38: #{tpu_custom_call.1} parent=5 // pred_check_branch
        %231 = sbr.rel (%p228) target = $region40
      $region39: #{tpu_custom_call.1} parent=5 // pred_region
        %s232 = ssub.s32 %s18, 1
        %s233 = sand.u32 %s31, 1
        %s234 = scalar_lea.sflag [#allocation3], %s233
        %s235 = sand.u32 %s31, 1
        %s236 = smul.addr %s235, 64
        %s237 = scalar_lea.vmem [#allocation2], %s236
        // Predicated region
        $region41: #{tpu_custom_call.1} parent=39 // pred_check
          %p238 = pneg %p44
        $region42: #{tpu_custom_call.1} parent=39 // pred_check_branch
          %240 = sbr.rel (%p238) target = $region44
        $region43: #{tpu_custom_call.1} parent=39 // pred_region
          %241 = dma.done %s234, 1024
        $region44: #{tpu_custom_call.1} parent=39 // pred_fallthru
          _
        // Predicated region
        $region45: #{tpu_custom_call.1} parent=39 // pred_check
          %p242 = pneg %p65
        $region46: #{tpu_custom_call.1} parent=39 // pred_check_branch
          %244 = sbr.rel (%p242) target = $region48
        $region47: #{tpu_custom_call.1} parent=39 // pred_region
          %245 = dma.done [#allocation6], 4096
        $region48: #{tpu_custom_call.1} parent=39 // pred_fallthru
          _
        // Predicated region
        $region49: #{tpu_custom_call.1} parent=39 // pred_check
          %p246 = pneg %p107
        $region50: #{tpu_custom_call.1} parent=39 // pred_check_branch
          %248 = sbr.rel (%p246) target = $region52
        $region51: #{tpu_custom_call.1} parent=39 // pred_region
          %249 = dma.done [#allocation6], 4096
        $region52: #{tpu_custom_call.1} parent=39 // pred_fallthru
          _
        %s250 = sand.u32 %s31, 1
        %s251 = scalar_lea.sflag [#allocation3], %s250
        %s252 = sand.u32 %s31, 1
        %s253 = smul.addr %s252, 64
        %s254 = scalar_lea.vmem [#allocation2], %s253
        %p255 = pneg %p44
        %p256 = pneg %p41
        %p257 = pneg %p65
        %p258 = pneg %p62
        %p259 = pneg %p86
        %p260 = pneg %p83
        %p261 = pneg %p107
        %p262 = pneg %p104
        %p263 = pneg %p128
        %p264 = pneg %p125
        %p265 = pneg %p154
        %p266 = pneg %p151
        %s267 = sand.u32 %s141, 1
        %s268 = scalar_lea.sflag [#allocation4], %s267
        %s269 = sand.u32 %s141, 1
        %s270 = smul.addr %s269, 128
        %s271 = scalar_lea.vmem [#allocation8], %s270
        %s272 = smul.u32 16, %s23
        %s273 = smul.u32 16, %s23
        %v275 = vld [vmem:[%s237] sm:$0xf]
        %v276 = vld [vmem:[%s237 + $0x4] sm:$0xf]
        %v277 = vld [vmem:[%s237 + $0x8] sm:$0xf]
        %v278 = vld [vmem:[%s237 + $0xc] sm:$0xf]
        %v279 = vld [vmem:[%s237 + $0x10] sm:$0xf]
        %v280 = vld [vmem:[%s237 + $0x14] sm:$0xf]
        %v281 = vld [vmem:[%s237 + $0x18] sm:$0xf]
        %v282 = vld [vmem:[%s237 + $0x1c] sm:$0xf]
        %v283 = vld [vmem:[%s237 + $0x20] sm:$0xf]
        %v284 = vld [vmem:[%s237 + $0x24] sm:$0xf]
        %v285 = vld [vmem:[%s237 + $0x28] sm:$0xf]
        %v286 = vld [vmem:[%s237 + $0x2c] sm:$0xf]
        %v287 = vld [vmem:[%s237 + $0x30] sm:$0xf]
        %v288 = vld [vmem:[%s237 + $0x34] sm:$0xf]
        %v289 = vld [vmem:[%s237 + $0x38] sm:$0xf]
        %v290 = vld [vmem:[%s237 + $0x3c] sm:$0xf]
        %v291 = vld [vmem:[#allocation5] sm:$0xff]
        %v292 = vld [vmem:[#allocation5 + $0x8] sm:$0xff]
        %v293 = vld [vmem:[#allocation5 + $0x10] sm:$0xff]
        %v294 = vld [vmem:[#allocation5 + $0x18] sm:$0xff]
        %v295 = vld [vmem:[#allocation5 + $0x20] sm:$0xff]
        %v296 = vld [vmem:[#allocation5 + $0x28] sm:$0xff]
        %v297 = vld [vmem:[#allocation5 + $0x30] sm:$0xff]
        %v298 = vld [vmem:[#allocation5 + $0x38] sm:$0xff]
        %v299 = vld [vmem:[#allocation5 + $0x40] sm:$0xff]
        %v300 = vld [vmem:[#allocation5 + $0x48] sm:$0xff]
        %v301 = vld [vmem:[#allocation5 + $0x50] sm:$0xff]
        %v302 = vld [vmem:[#allocation5 + $0x58] sm:$0xff]
        %v303 = vld [vmem:[#allocation5 + $0x60] sm:$0xff]
        %v304 = vld [vmem:[#allocation5 + $0x68] sm:$0xff]
        %v305 = vld [vmem:[#allocation5 + $0x70] sm:$0xff]
        %v306 = vld [vmem:[#allocation5 + $0x78] sm:$0xff]
        %v307 = vld [vmem:[#allocation5 + $0x80] sm:$0xff]
        %v308 = vld [vmem:[#allocation5 + $0x88] sm:$0xff]
        %v309 = vld [vmem:[#allocation5 + $0x90] sm:$0xff]
        %v310 = vld [vmem:[#allocation5 + $0x98] sm:$0xff]
        %v311 = vld [vmem:[#allocation5 + $0xa0] sm:$0xff]
        %v312 = vld [vmem:[#allocation5 + $0xa8] sm:$0xff]
        %v313 = vld [vmem:[#allocation5 + $0xb0] sm:$0xff]
        %v314 = vld [vmem:[#allocation5 + $0xb8] sm:$0xff]
        %v315 = vld [vmem:[#allocation5 + $0xc0] sm:$0xff]
        %v316 = vld [vmem:[#allocation5 + $0xc8] sm:$0xff]
        %v317 = vld [vmem:[#allocation5 + $0xd0] sm:$0xff]
        %v318 = vld [vmem:[#allocation5 + $0xd8] sm:$0xff]
        %v319 = vld [vmem:[#allocation5 + $0xe0] sm:$0xff]
        %v320 = vld [vmem:[#allocation5 + $0xe8] sm:$0xff]
        %v321 = vld [vmem:[#allocation5 + $0xf0] sm:$0xff]
        %v322 = vld [vmem:[#allocation5 + $0xf8] sm:$0xff]
        %v323 = vld [vmem:[%s2] sm:$0xf]
        %v325 = vlaneseq
        %v326 = vshrl.u32 %v325, 7
        %v327 = vsub.s32 0, %v326
        %v328 = vrot.slane %v323, %v327
        %v329 = vlaneseq
        %v330 = vshrl.u32 %v329, 7
        %v331 = vsub.s32 1, %v330
        %v332 = vrot.slane %v323, %v331
        %v333 = vlaneseq
        %v334 = vshrl.u32 %v333, 7
        %v335 = vsub.s32 2, %v334
        %v336 = vrot.slane %v323, %v335
        %v337 = vlaneseq
        %v338 = vshrl.u32 %v337, 7
        %v339 = vsub.s32 3, %v338
        %v340 = vrot.slane %v323, %v339
        %v361 = vunpack.c.l.b16 %v275
        %v362 = vunpack.c.l.b16 %v276
        %v363 = vunpack.c.l.b16 %v277
        %v364 = vunpack.c.l.b16 %v278
        %v365 = vunpack.c.l.b16 %v279
        %v366 = vunpack.c.l.b16 %v280
        %v367 = vunpack.c.l.b16 %v281
        %v368 = vunpack.c.l.b16 %v282
        %v369 = vunpack.c.l.b16 %v283
        %v370 = vunpack.c.l.b16 %v284
        %v371 = vunpack.c.l.b16 %v285
        %v372 = vunpack.c.l.b16 %v286
        %v373 = vunpack.c.l.b16 %v287
        %v374 = vunpack.c.l.b16 %v288
        %v375 = vunpack.c.l.b16 %v289
        %v376 = vunpack.c.l.b16 %v290
        %v377 = vpack.c.b16 %v362, %v361
        %v378 = vpack.c.b16 %v364, %v363
        %v379 = vpack.c.b16 %v366, %v365
        %v380 = vpack.c.b16 %v368, %v367
        %v381 = vpack.c.b16 %v370, %v369
        %v382 = vpack.c.b16 %v372, %v371
        %v383 = vpack.c.b16 %v374, %v373
        %v384 = vpack.c.b16 %v376, %v375
        %v425 = vunpack.c.l.b16 %v291
        %v426 = vunpack.c.h.b16 %v291
        %v427 = vunpack.c.l.b16 %v292
        %v428 = vunpack.c.h.b16 %v292
        %v429 = vunpack.c.l.b16 %v293
        %v430 = vunpack.c.h.b16 %v293
        %v431 = vunpack.c.l.b16 %v294
        %v432 = vunpack.c.h.b16 %v294
        %v433 = vunpack.c.l.b16 %v295
        %v434 = vunpack.c.h.b16 %v295
        %v435 = vunpack.c.l.b16 %v296
        %v436 = vunpack.c.h.b16 %v296
        %v437 = vunpack.c.l.b16 %v297
        %v438 = vunpack.c.h.b16 %v297
        %v439 = vunpack.c.l.b16 %v298
        %v440 = vunpack.c.h.b16 %v298
        %v441 = vunpack.c.l.b16 %v299
        %v442 = vunpack.c.h.b16 %v299
        %v443 = vunpack.c.l.b16 %v300
        %v444 = vunpack.c.h.b16 %v300
        %v445 = vunpack.c.l.b16 %v301
        %v446 = vunpack.c.h.b16 %v301
        %v447 = vunpack.c.l.b16 %v302
        %v448 = vunpack.c.h.b16 %v302
        %v449 = vunpack.c.l.b16 %v303
        %v450 = vunpack.c.h.b16 %v303
        %v451 = vunpack.c.l.b16 %v304
        %v452 = vunpack.c.h.b16 %v304
        %v453 = vunpack.c.l.b16 %v305
        %v454 = vunpack.c.h.b16 %v305
        %v455 = vunpack.c.l.b16 %v306
        %v456 = vunpack.c.h.b16 %v306
        %v457 = vunpack.c.l.b16 %v307
        %v458 = vunpack.c.h.b16 %v307
        %v459 = vunpack.c.l.b16 %v308
        %v460 = vunpack.c.h.b16 %v308
        %v461 = vunpack.c.l.b16 %v309
        %v462 = vunpack.c.h.b16 %v309
        %v463 = vunpack.c.l.b16 %v310
        %v464 = vunpack.c.h.b16 %v310
        %v465 = vunpack.c.l.b16 %v311
        %v466 = vunpack.c.h.b16 %v311
        %v467 = vunpack.c.l.b16 %v312
        %v468 = vunpack.c.h.b16 %v312
        %v469 = vunpack.c.l.b16 %v313
        %v470 = vunpack.c.h.b16 %v313
        %v471 = vunpack.c.l.b16 %v314
        %v472 = vunpack.c.h.b16 %v314
        %v473 = vunpack.c.l.b16 %v315
        %v474 = vunpack.c.h.b16 %v315
        %v475 = vunpack.c.l.b16 %v316
        %v476 = vunpack.c.h.b16 %v316
        %v477 = vunpack.c.l.b16 %v317
        %v478 = vunpack.c.h.b16 %v317
        %v479 = vunpack.c.l.b16 %v318
        %v480 = vunpack.c.h.b16 %v318
        %v481 = vunpack.c.l.b16 %v319
        %v482 = vunpack.c.h.b16 %v319
        %v483 = vunpack.c.l.b16 %v320
        %v484 = vunpack.c.h.b16 %v320
        %v485 = vunpack.c.l.b16 %v321
        %v486 = vunpack.c.h.b16 %v321
        %v487 = vunpack.c.l.b16 %v322
        %v488 = vunpack.c.h.b16 %v322
        %v489 = vpack.c.b16 %v429, %v425
        %v490 = vpack.c.b16 %v430, %v426
        %v491 = vpack.c.b16 %v431, %v427
        %v492 = vpack.c.b16 %v432, %v428
        %v493 = vpack.c.b16 %v437, %v433
        %v494 = vpack.c.b16 %v438, %v434
        %v495 = vpack.c.b16 %v439, %v435
        %v496 = vpack.c.b16 %v440, %v436
        %v497 = vpack.c.b16 %v445, %v441
        %v498 = vpack.c.b16 %v446, %v442
        %v499 = vpack.c.b16 %v447, %v443
        %v500 = vpack.c.b16 %v448, %v444
        %v501 = vpack.c.b16 %v453, %v449
        %v502 = vpack.c.b16 %v454, %v450
        %v503 = vpack.c.b16 %v455, %v451
        %v504 = vpack.c.b16 %v456, %v452
        %v505 = vpack.c.b16 %v461, %v457
        %v506 = vpack.c.b16 %v462, %v458
        %v507 = vpack.c.b16 %v463, %v459
        %v508 = vpack.c.b16 %v464, %v460
        %v509 = vpack.c.b16 %v469, %v465
        %v510 = vpack.c.b16 %v470, %v466
        %v511 = vpack.c.b16 %v471, %v467
        %v512 = vpack.c.b16 %v472, %v468
        %v513 = vpack.c.b16 %v477, %v473
        %v514 = vpack.c.b16 %v478, %v474
        %v515 = vpack.c.b16 %v479, %v475
        %v516 = vpack.c.b16 %v480, %v476
        %v517 = vpack.c.b16 %v485, %v481
        %v518 = vpack.c.b16 %v486, %v482
        %v519 = vpack.c.b16 %v487, %v483
        %v520 = vpack.c.b16 %v488, %v484
        %553 = vmatprep.subr.bf16.mxu0 %v490
        %554 = vmatpush1.bf16.msra.mxu0 %v489
        %555 = vmatprep.subr.bf16.mxu0 %v494
        %556 = vmatpush1.bf16.msra.mxu0 %v493
        %557 = vmatprep.subr.bf16.mxu0 %v498
        %558 = vmatpush1.bf16.msra.mxu0 %v497
        %559 = vmatprep.subr.bf16.mxu0 %v502
        %560 = vmatpush1.bf16.msra.mxu0 %v501
        %561 = vmatprep.subr.bf16.mxu0 %v506
        %562 = vmatpush1.bf16.msra.mxu0 %v505
        %563 = vmatprep.subr.bf16.mxu0 %v510
        %564 = vmatpush1.bf16.msra.mxu0 %v509
        %565 = vmatprep.subr.bf16.mxu0 %v514
        %566 = vmatpush1.bf16.msra.mxu0 %v513
        %567 = vmatprep.subr.bf16.mxu0 %v518
        %568 = vmatpush1.bf16.msra.mxu0 %v517
        %569 = vmatprep.subr.bf16.mxu0 0
        %570 = vmatpush1.bf16.msra.mxu0 0
        %571 = vmatprep.subr.bf16.mxu0 0
        %572 = vmatpush1.bf16.msra.mxu0 0
        %573 = vmatprep.subr.bf16.mxu0 0
        %574 = vmatpush1.bf16.msra.mxu0 0
        %575 = vmatprep.subr.bf16.mxu0 0
        %576 = vmatpush1.bf16.msra.mxu0 0
        %577 = vmatprep.subr.bf16.mxu0 0
        %578 = vmatpush1.bf16.msra.mxu0 0
        %579 = vmatprep.subr.bf16.mxu0 0
        %580 = vmatpush1.bf16.msra.mxu0 0
        %581 = vmatprep.subr.bf16.mxu0 0
        %582 = vmatpush1.bf16.msra.mxu0 0
        %583 = vmatprep.subr.bf16.mxu0 0
        %584 = vmatpush1.bf16.msra.mxu0 0
        %585 = vmatprep.mubr.bf16.mxu0 0
        %586 = vmatmul.mubr.bf16.gmra.mrb[0].mxu0 %v377
        %v587 = vpop.f32.mrb[0].mxu0
        %v588 = vadd.f32 %v328, %v587
        %v589 = vpop.f32.mrb[0].mxu0
        %v590 = vadd.f32 %v332, %v589
        %v591 = vpop.f32.mrb[0].mxu0
        %v592 = vadd.f32 %v328, %v591
        %v593 = vpop.f32.mrb[0].mxu0
        %v594 = vadd.f32 %v332, %v593
        %595 = vmatprep.mubr.bf16.mxu0 0
        %596 = vmatmul.mubr.bf16.gmra.mrb[0].mxu0 %v378
        %v597 = vpop.f32.mrb[0].mxu0
        %v598 = vadd.f32 %v328, %v597
        %v599 = vpop.f32.mrb[0].mxu0
        %v600 = vadd.f32 %v332, %v599
        %v601 = vpop.f32.mrb[0].mxu0
        %v602 = vadd.f32 %v328, %v601
        %v603 = vpop.f32.mrb[0].mxu0
        %v604 = vadd.f32 %v332, %v603
        %605 = vmatprep.mubr.bf16.mxu0 0
        %606 = vmatmul.mubr.bf16.gmra.mrb[0].mxu0 %v379
        %v607 = vpop.f32.mrb[0].mxu0
        %v608 = vadd.f32 %v328, %v607
        %v609 = vpop.f32.mrb[0].mxu0
        %v610 = vadd.f32 %v332, %v609
        %v611 = vpop.f32.mrb[0].mxu0
        %v612 = vadd.f32 %v328, %v611
        %v613 = vpop.f32.mrb[0].mxu0
        %v614 = vadd.f32 %v332, %v613
        %615 = vmatprep.mubr.bf16.mxu0 0
        %616 = vmatmul.mubr.bf16.gmra.mrb[0].mxu0 %v380
        %v617 = vpop.f32.mrb[0].mxu0
        %v618 = vadd.f32 %v328, %v617
        %v619 = vpop.f32.mrb[0].mxu0
        %v620 = vadd.f32 %v332, %v619
        %v621 = vpop.f32.mrb[0].mxu0
        %v622 = vadd.f32 %v328, %v621
        %v623 = vpop.f32.mrb[0].mxu0
        %v624 = vadd.f32 %v332, %v623
        %625 = vmatprep.mubr.bf16.mxu0 0
        %626 = vmatmul.mubr.bf16.gmra.mrb[0].mxu0 %v381
        %v627 = vpop.f32.mrb[0].mxu0
        %v628 = vadd.f32 %v328, %v627
        %v629 = vpop.f32.mrb[0].mxu0
        %v630 = vadd.f32 %v332, %v629
        %v631 = vpop.f32.mrb[0].mxu0
        %v632 = vadd.f32 %v328, %v631
        %v633 = vpop.f32.mrb[0].mxu0
        %v634 = vadd.f32 %v332, %v633
        %635 = vmatprep.mubr.bf16.mxu0 0
        %636 = vmatmul.mubr.bf16.gmra.mrb[0].mxu0 %v382
        %v637 = vpop.f32.mrb[0].mxu0
        %v638 = vadd.f32 %v328, %v637
        %v639 = vpop.f32.mrb[0].mxu0
        %v640 = vadd.f32 %v332, %v639
        %v641 = vpop.f32.mrb[0].mxu0
        %v642 = vadd.f32 %v328, %v641
        %v643 = vpop.f32.mrb[0].mxu0
        %v644 = vadd.f32 %v332, %v643
        %645 = vmatprep.mubr.bf16.mxu0 0
        %646 = vmatmul.mubr.bf16.gmra.mrb[0].mxu0 %v383
        %v647 = vpop.f32.mrb[0].mxu0
        %v648 = vadd.f32 %v328, %v647
        %v649 = vpop.f32.mrb[0].mxu0
        %v650 = vadd.f32 %v332, %v649
        %v651 = vpop.f32.mrb[0].mxu0
        %v652 = vadd.f32 %v328, %v651
        %v653 = vpop.f32.mrb[0].mxu0
        %v654 = vadd.f32 %v332, %v653
        %655 = vmatprep.mubr.bf16.mxu0 0
        %656 = vmatmul.mubr.bf16.gmra.mrb[0].mxu0 %v384
        %v657 = vpop.f32.mrb[0].mxu0
        %v658 = vadd.f32 %v328, %v657
        %v659 = vpop.f32.mrb[0].mxu0
        %v660 = vadd.f32 %v332, %v659
        %v661 = vpop.f32.mrb[0].mxu0
        %v662 = vadd.f32 %v328, %v661
        %v663 = vpop.f32.mrb[0].mxu0
        %v664 = vadd.f32 %v332, %v663
        %665 = vdwg.mxu0
        %666 = vmatprep.subr.bf16.mxu0 %v492
        %667 = vmatpush1.bf16.msra.mxu0 %v491
        %668 = vmatprep.subr.bf16.mxu0 %v496
        %669 = vmatpush1.bf16.msra.mxu0 %v495
        %670 = vmatprep.subr.bf16.mxu0 %v500
        %671 = vmatpush1.bf16.msra.mxu0 %v499
        %672 = vmatprep.subr.bf16.mxu0 %v504
        %673 = vmatpush1.bf16.msra.mxu0 %v503
        %674 = vmatprep.subr.bf16.mxu0 %v508
        %675 = vmatpush1.bf16.msra.mxu0 %v507
        %676 = vmatprep.subr.bf16.mxu0 %v512
        %677 = vmatpush1.bf16.msra.mxu0 %v511
        %678 = vmatprep.subr.bf16.mxu0 %v516
        %679 = vmatpush1.bf16.msra.mxu0 %v515
        %680 = vmatprep.subr.bf16.mxu0 %v520
        %681 = vmatpush1.bf16.msra.mxu0 %v519
        %682 = vmatprep.subr.bf16.mxu0 0
        %683 = vmatpush1.bf16.msra.mxu0 0
        %684 = vmatprep.subr.bf16.mxu0 0
        %685 = vmatpush1.bf16.msra.mxu0 0
        %686 = vmatprep.subr.bf16.mxu0 0
        %687 = vmatpush1.bf16.msra.mxu0 0
        %688 = vmatprep.subr.bf16.mxu0 0
        %689 = vmatpush1.bf16.msra.mxu0 0
        %690 = vmatprep.subr.bf16.mxu0 0
        %691 = vmatpush1.bf16.msra.mxu0 0
        %692 = vmatprep.subr.bf16.mxu0 0
        %693 = vmatpush1.bf16.msra.mxu0 0
        %694 = vmatprep.subr.bf16.mxu0 0
        %695 = vmatpush1.bf16.msra.mxu0 0
        %696 = vmatprep.subr.bf16.mxu0 0
        %697 = vmatpush1.bf16.msra.mxu0 0
        %698 = vmatprep.mubr.bf16.mxu0 0
        %699 = vmatmul.mubr.bf16.gmra.mrb[0].mxu0 %v377
        %v700 = vpop.f32.mrb[0].mxu0
        %v701 = vadd.f32 %v336, %v700
        %v702 = vpop.f32.mrb[0].mxu0
        %v703 = vadd.f32 %v340, %v702
        %v704 = vpop.f32.mrb[0].mxu0
        %v705 = vadd.f32 %v336, %v704
        %v706 = vpop.f32.mrb[0].mxu0
        %v707 = vadd.f32 %v340, %v706
        %708 = vmatprep.mubr.bf16.mxu0 0
        %709 = vmatmul.mubr.bf16.gmra.mrb[0].mxu0 %v378
        %v710 = vpop.f32.mrb[0].mxu0
        %v711 = vadd.f32 %v336, %v710
        %v712 = vpop.f32.mrb[0].mxu0
        %v713 = vadd.f32 %v340, %v712
        %v714 = vpop.f32.mrb[0].mxu0
        %v715 = vadd.f32 %v336, %v714
        %v716 = vpop.f32.mrb[0].mxu0
        %v717 = vadd.f32 %v340, %v716
        %718 = vmatprep.mubr.bf16.mxu0 0
        %719 = vmatmul.mubr.bf16.gmra.mrb[0].mxu0 %v379
        %v720 = vpop.f32.mrb[0].mxu0
        %v721 = vadd.f32 %v336, %v720
        %v722 = vpop.f32.mrb[0].mxu0
        %v723 = vadd.f32 %v340, %v722
        %v724 = vpop.f32.mrb[0].mxu0
        %v725 = vadd.f32 %v336, %v724
        %v726 = vpop.f32.mrb[0].mxu0
        %v727 = vadd.f32 %v340, %v726
        %728 = vmatprep.mubr.bf16.mxu0 0
        %729 = vmatmul.mubr.bf16.gmra.mrb[0].mxu0 %v380
        %v730 = vpop.f32.mrb[0].mxu0
        %v731 = vadd.f32 %v336, %v730
        %v732 = vpop.f32.mrb[0].mxu0
        %v733 = vadd.f32 %v340, %v732
        %v734 = vpop.f32.mrb[0].mxu0
        %v735 = vadd.f32 %v336, %v734
        %v736 = vpop.f32.mrb[0].mxu0
        %v737 = vadd.f32 %v340, %v736
        %738 = vmatprep.mubr.bf16.mxu0 0
        %739 = vmatmul.mubr.bf16.gmra.mrb[0].mxu0 %v381
        %v740 = vpop.f32.mrb[0].mxu0
        %v741 = vadd.f32 %v336, %v740
        %v742 = vpop.f32.mrb[0].mxu0
        %v743 = vadd.f32 %v340, %v742
        %v744 = vpop.f32.mrb[0].mxu0
        %v745 = vadd.f32 %v336, %v744
        %v746 = vpop.f32.mrb[0].mxu0
        %v747 = vadd.f32 %v340, %v746
        %748 = vmatprep.mubr.bf16.mxu0 0
        %749 = vmatmul.mubr.bf16.gmra.mrb[0].mxu0 %v382
        %v750 = vpop.f32.mrb[0].mxu0
        %v751 = vadd.f32 %v336, %v750
        %v752 = vpop.f32.mrb[0].mxu0
        %v753 = vadd.f32 %v340, %v752
        %v754 = vpop.f32.mrb[0].mxu0
        %v755 = vadd.f32 %v336, %v754
        %v756 = vpop.f32.mrb[0].mxu0
        %v757 = vadd.f32 %v340, %v756
        %758 = vmatprep.mubr.bf16.mxu0 0
        %759 = vmatmul.mubr.bf16.gmra.mrb[0].mxu0 %v383
        %v760 = vpop.f32.mrb[0].mxu0
        %v761 = vadd.f32 %v336, %v760
        %v762 = vpop.f32.mrb[0].mxu0
        %v763 = vadd.f32 %v340, %v762
        %v764 = vpop.f32.mrb[0].mxu0
        %v765 = vadd.f32 %v336, %v764
        %v766 = vpop.f32.mrb[0].mxu0
        %v767 = vadd.f32 %v340, %v766
        %768 = vmatprep.mubr.bf16.mxu0 0
        %769 = vmatmul.mubr.bf16.gmra.mrb[0].mxu0 %v384
        %v770 = vpop.f32.mrb[0].mxu0
        %v771 = vadd.f32 %v336, %v770
        %v772 = vpop.f32.mrb[0].mxu0
        %v773 = vadd.f32 %v340, %v772
        %v774 = vpop.f32.mrb[0].mxu0
        %v775 = vadd.f32 %v336, %v774
        %v776 = vpop.f32.mrb[0].mxu0
        %v777 = vadd.f32 %v340, %v776
        %778 = vdwg.mxu0
        %v779 = vmul.f32 %v588, 0.5
        %v780 = vmul.f32 %v590, 0.5
        %v781 = vmul.f32 %v701, 0.5
        %v782 = vmul.f32 %v703, 0.5
        %v783 = vmul.f32 %v592, 0.5
        %v784 = vmul.f32 %v594, 0.5
        %v785 = vmul.f32 %v705, 0.5
        %v786 = vmul.f32 %v707, 0.5
        %v787 = vmul.f32 %v598, 0.5
        %v788 = vmul.f32 %v600, 0.5
        %v789 = vmul.f32 %v711, 0.5
        %v790 = vmul.f32 %v713, 0.5
        %v791 = vmul.f32 %v602, 0.5
        %v792 = vmul.f32 %v604, 0.5
        %v793 = vmul.f32 %v715, 0.5
        %v794 = vmul.f32 %v717, 0.5
        %v795 = vmul.f32 %v608, 0.5
        %v796 = vmul.f32 %v610, 0.5
        %v797 = vmul.f32 %v721, 0.5
        %v798 = vmul.f32 %v723, 0.5
        %v799 = vmul.f32 %v612, 0.5
        %v800 = vmul.f32 %v614, 0.5
        %v801 = vmul.f32 %v725, 0.5
        %v802 = vmul.f32 %v727, 0.5
        %v803 = vmul.f32 %v618, 0.5
        %v804 = vmul.f32 %v620, 0.5
        %v805 = vmul.f32 %v731, 0.5
        %v806 = vmul.f32 %v733, 0.5
        %v807 = vmul.f32 %v622, 0.5
        %v808 = vmul.f32 %v624, 0.5
        %v809 = vmul.f32 %v735, 0.5
        %v810 = vmul.f32 %v737, 0.5
        %v811 = vmul.f32 %v628, 0.5
        %v812 = vmul.f32 %v630, 0.5
        %v813 = vmul.f32 %v741, 0.5
        %v814 = vmul.f32 %v743, 0.5
        %v815 = vmul.f32 %v632, 0.5
        %v816 = vmul.f32 %v634, 0.5
        %v817 = vmul.f32 %v745, 0.5
        %v818 = vmul.f32 %v747, 0.5
        %v819 = vmul.f32 %v638, 0.5
        %v820 = vmul.f32 %v640, 0.5
        %v821 = vmul.f32 %v751, 0.5
        %v822 = vmul.f32 %v753, 0.5
        %v823 = vmul.f32 %v642, 0.5
        %v824 = vmul.f32 %v644, 0.5
        %v825 = vmul.f32 %v755, 0.5
        %v826 = vmul.f32 %v757, 0.5
        %v827 = vmul.f32 %v648, 0.5
        %v828 = vmul.f32 %v650, 0.5
        %v829 = vmul.f32 %v761, 0.5
        %v830 = vmul.f32 %v763, 0.5
        %v831 = vmul.f32 %v652, 0.5
        %v832 = vmul.f32 %v654, 0.5
        %v833 = vmul.f32 %v765, 0.5
        %v834 = vmul.f32 %v767, 0.5
        %v835 = vmul.f32 %v658, 0.5
        %v836 = vmul.f32 %v660, 0.5
        %v837 = vmul.f32 %v771, 0.5
        %v838 = vmul.f32 %v773, 0.5
        %v839 = vmul.f32 %v662, 0.5
        %v840 = vmul.f32 %v664, 0.5
        %v841 = vmul.f32 %v775, 0.5
        %v842 = vmul.f32 %v777, 0.5
        %v843 = vmul.f32 %v588, 0.70710677
        %v844 = vmul.f32 %v590, 0.70710677
        %v845 = vmul.f32 %v701, 0.70710677
        %v846 = vmul.f32 %v703, 0.70710677
        %v847 = vmul.f32 %v592, 0.70710677
        %v848 = vmul.f32 %v594, 0.70710677
        %v849 = vmul.f32 %v705, 0.70710677
        %v850 = vmul.f32 %v707, 0.70710677
        %v851 = vmul.f32 %v598, 0.70710677
        %v852 = vmul.f32 %v600, 0.70710677
        %v853 = vmul.f32 %v711, 0.70710677
        %v854 = vmul.f32 %v713, 0.70710677
        %v855 = vmul.f32 %v602, 0.70710677
        %v856 = vmul.f32 %v604, 0.70710677
        %v857 = vmul.f32 %v715, 0.70710677
        %v858 = vmul.f32 %v717, 0.70710677
        %v859 = vmul.f32 %v608, 0.70710677
        %v860 = vmul.f32 %v610, 0.70710677
        %v861 = vmul.f32 %v721, 0.70710677
        %v862 = vmul.f32 %v723, 0.70710677
        %v863 = vmul.f32 %v612, 0.70710677
        %v864 = vmul.f32 %v614, 0.70710677
        %v865 = vmul.f32 %v725, 0.70710677
        %v866 = vmul.f32 %v727, 0.70710677
        %v867 = vmul.f32 %v618, 0.70710677
        %v868 = vmul.f32 %v620, 0.70710677
        %v869 = vmul.f32 %v731, 0.70710677
        %v870 = vmul.f32 %v733, 0.70710677
        %v871 = vmul.f32 %v622, 0.70710677
        %v872 = vmul.f32 %v624, 0.70710677
        %v873 = vmul.f32 %v735, 0.70710677
        %v874 = vmul.f32 %v737, 0.70710677
        %v875 = vmul.f32 %v628, 0.70710677
        %v876 = vmul.f32 %v630, 0.70710677
        %v877 = vmul.f32 %v741, 0.70710677
        %v878 = vmul.f32 %v743, 0.70710677
        %v879 = vmul.f32 %v632, 0.70710677
        %v880 = vmul.f32 %v634, 0.70710677
        %v881 = vmul.f32 %v745, 0.70710677
        %v882 = vmul.f32 %v747, 0.70710677
        %v883 = vmul.f32 %v638, 0.70710677
        %v884 = vmul.f32 %v640, 0.70710677
        %v885 = vmul.f32 %v751, 0.70710677
        %v886 = vmul.f32 %v753, 0.70710677
        %v887 = vmul.f32 %v642, 0.70710677
        %v888 = vmul.f32 %v644, 0.70710677
        %v889 = vmul.f32 %v755, 0.70710677
        %v890 = vmul.f32 %v757, 0.70710677
        %v891 = vmul.f32 %v648, 0.70710677
        %v892 = vmul.f32 %v650, 0.70710677
        %v893 = vmul.f32 %v761, 0.70710677
        %v894 = vmul.f32 %v763, 0.70710677
        %v895 = vmul.f32 %v652, 0.70710677
        %v896 = vmul.f32 %v654, 0.70710677
        %v897 = vmul.f32 %v765, 0.70710677
        %v898 = vmul.f32 %v767, 0.70710677
        %v899 = vmul.f32 %v658, 0.70710677
        %v900 = vmul.f32 %v660, 0.70710677
        %v901 = vmul.f32 %v771, 0.70710677
        %v902 = vmul.f32 %v773, 0.70710677
        %v903 = vmul.f32 %v662, 0.70710677
        %v904 = vmul.f32 %v664, 0.70710677
        %v905 = vmul.f32 %v775, 0.70710677
        %v906 = vmul.f32 %v777, 0.70710677
        %v907 = vand.u32 2147483647, %v843
        %v908 = vand.u32 2147483647, %v844
        %v909 = vand.u32 2147483647, %v845
        %v910 = vand.u32 2147483647, %v846
        %v911 = vand.u32 2147483647, %v847
        %v912 = vand.u32 2147483647, %v848
        %v913 = vand.u32 2147483647, %v849
        %v914 = vand.u32 2147483647, %v850
        %v915 = vand.u32 2147483647, %v851
        %v916 = vand.u32 2147483647, %v852
        %v917 = vand.u32 2147483647, %v853
        %v918 = vand.u32 2147483647, %v854
        %v919 = vand.u32 2147483647, %v855
        %v920 = vand.u32 2147483647, %v856
        %v921 = vand.u32 2147483647, %v857
        %v922 = vand.u32 2147483647, %v858
        %v923 = vand.u32 2147483647, %v859
        %v924 = vand.u32 2147483647, %v860
        %v925 = vand.u32 2147483647, %v861
        %v926 = vand.u32 2147483647, %v862
        %v927 = vand.u32 2147483647, %v863
        %v928 = vand.u32 2147483647, %v864
        %v929 = vand.u32 2147483647, %v865
        %v930 = vand.u32 2147483647, %v866
        %v931 = vand.u32 2147483647, %v867
        %v932 = vand.u32 2147483647, %v868
        %v933 = vand.u32 2147483647, %v869
        %v934 = vand.u32 2147483647, %v870
        %v935 = vand.u32 2147483647, %v871
        %v936 = vand.u32 2147483647, %v872
        %v937 = vand.u32 2147483647, %v873
        %v938 = vand.u32 2147483647, %v874
        %v939 = vand.u32 2147483647, %v875
        %v940 = vand.u32 2147483647, %v876
        %v941 = vand.u32 2147483647, %v877
        %v942 = vand.u32 2147483647, %v878
        %v943 = vand.u32 2147483647, %v879
        %v944 = vand.u32 2147483647, %v880
        %v945 = vand.u32 2147483647, %v881
        %v946 = vand.u32 2147483647, %v882
        %v947 = vand.u32 2147483647, %v883
        %v948 = vand.u32 2147483647, %v884
        %v949 = vand.u32 2147483647, %v885
        %v950 = vand.u32 2147483647, %v886
        %v951 = vand.u32 2147483647, %v887
        %v952 = vand.u32 2147483647, %v888
        %v953 = vand.u32 2147483647, %v889
        %v954 = vand.u32 2147483647, %v890
        %v955 = vand.u32 2147483647, %v891
        %v956 = vand.u32 2147483647, %v892
        %v957 = vand.u32 2147483647, %v893
        %v958 = vand.u32 2147483647, %v894
        %v959 = vand.u32 2147483647, %v895
        %v960 = vand.u32 2147483647, %v896
        %v961 = vand.u32 2147483647, %v897
        %v962 = vand.u32 2147483647, %v898
        %v963 = vand.u32 2147483647, %v899
        %v964 = vand.u32 2147483647, %v900
        %v965 = vand.u32 2147483647, %v901
        %v966 = vand.u32 2147483647, %v902
        %v967 = vand.u32 2147483647, %v903
        %v968 = vand.u32 2147483647, %v904
        %v969 = vand.u32 2147483647, %v905
        %v970 = vand.u32 2147483647, %v906
        %v971 = vmul.f32 %v907, 0.3275911
        %v972 = vmul.f32 %v908, 0.3275911
        %v973 = vmul.f32 %v909, 0.3275911
        %v974 = vmul.f32 %v910, 0.3275911
        %v975 = vmul.f32 %v911, 0.3275911
        %v976 = vmul.f32 %v912, 0.3275911
        %v977 = vmul.f32 %v913, 0.3275911
        %v978 = vmul.f32 %v914, 0.3275911
        %v979 = vmul.f32 %v915, 0.3275911
        %v980 = vmul.f32 %v916, 0.3275911
        %v981 = vmul.f32 %v917, 0.3275911
        %v982 = vmul.f32 %v918, 0.3275911
        %v983 = vmul.f32 %v919, 0.3275911
        %v984 = vmul.f32 %v920, 0.3275911
        %v985 = vmul.f32 %v921, 0.3275911
        %v986 = vmul.f32 %v922, 0.3275911
        %v987 = vmul.f32 %v923, 0.3275911
        %v988 = vmul.f32 %v924, 0.3275911
        %v989 = vmul.f32 %v925, 0.3275911
        %v990 = vmul.f32 %v926, 0.3275911
        %v991 = vmul.f32 %v927, 0.3275911
        %v992 = vmul.f32 %v928, 0.3275911
        %v993 = vmul.f32 %v929, 0.3275911
        %v994 = vmul.f32 %v930, 0.3275911
        %v995 = vmul.f32 %v931, 0.3275911
        %v996 = vmul.f32 %v932, 0.3275911
        %v997 = vmul.f32 %v933, 0.3275911
        %v998 = vmul.f32 %v934, 0.3275911
        %v999 = vmul.f32 %v935, 0.3275911
        %v1000 = vmul.f32 %v936, 0.3275911
        %v1001 = vmul.f32 %v937, 0.3275911
        %v1002 = vmul.f32 %v938, 0.3275911
        %v1003 = vmul.f32 %v939, 0.3275911
        %v1004 = vmul.f32 %v940, 0.3275911
        %v1005 = vmul.f32 %v941, 0.3275911
        %v1006 = vmul.f32 %v942, 0.3275911
        %v1007 = vmul.f32 %v943, 0.3275911
        %v1008 = vmul.f32 %v944, 0.3275911
        %v1009 = vmul.f32 %v945, 0.3275911
        %v1010 = vmul.f32 %v946, 0.3275911
        %v1011 = vmul.f32 %v947, 0.3275911
        %v1012 = vmul.f32 %v948, 0.3275911
        %v1013 = vmul.f32 %v949, 0.3275911
        %v1014 = vmul.f32 %v950, 0.3275911
        %v1015 = vmul.f32 %v951, 0.3275911
        %v1016 = vmul.f32 %v952, 0.3275911
        %v1017 = vmul.f32 %v953, 0.3275911
        %v1018 = vmul.f32 %v954, 0.3275911
        %v1019 = vmul.f32 %v955, 0.3275911
        %v1020 = vmul.f32 %v956, 0.3275911
        %v1021 = vmul.f32 %v957, 0.3275911
        %v1022 = vmul.f32 %v958, 0.3275911
        %v1023 = vmul.f32 %v959, 0.3275911
        %v1024 = vmul.f32 %v960, 0.3275911
        %v1025 = vmul.f32 %v961, 0.3275911
        %v1026 = vmul.f32 %v962, 0.3275911
        %v1027 = vmul.f32 %v963, 0.3275911
        %v1028 = vmul.f32 %v964, 0.3275911
        %v1029 = vmul.f32 %v965, 0.3275911
        %v1030 = vmul.f32 %v966, 0.3275911
        %v1031 = vmul.f32 %v967, 0.3275911
        %v1032 = vmul.f32 %v968, 0.3275911
        %v1033 = vmul.f32 %v969, 0.3275911
        %v1034 = vmul.f32 %v970, 0.3275911
        %v1035 = vadd.f32 %v971, 1.0
        %v1036 = vadd.f32 %v972, 1.0
        %v1037 = vadd.f32 %v973, 1.0
        %v1038 = vadd.f32 %v974, 1.0
        %v1039 = vadd.f32 %v975, 1.0
        %v1040 = vadd.f32 %v976, 1.0
        %v1041 = vadd.f32 %v977, 1.0
        %v1042 = vadd.f32 %v978, 1.0
        %v1043 = vadd.f32 %v979, 1.0
        %v1044 = vadd.f32 %v980, 1.0
        %v1045 = vadd.f32 %v981, 1.0
        %v1046 = vadd.f32 %v982, 1.0
        %v1047 = vadd.f32 %v983, 1.0
        %v1048 = vadd.f32 %v984, 1.0
        %v1049 = vadd.f32 %v985, 1.0
        %v1050 = vadd.f32 %v986, 1.0
        %v1051 = vadd.f32 %v987, 1.0
        %v1052 = vadd.f32 %v988, 1.0
        %v1053 = vadd.f32 %v989, 1.0
        %v1054 = vadd.f32 %v990, 1.0
        %v1055 = vadd.f32 %v991, 1.0
        %v1056 = vadd.f32 %v992, 1.0
        %v1057 = vadd.f32 %v993, 1.0
        %v1058 = vadd.f32 %v994, 1.0
        %v1059 = vadd.f32 %v995, 1.0
        %v1060 = vadd.f32 %v996, 1.0
        %v1061 = vadd.f32 %v997, 1.0
        %v1062 = vadd.f32 %v998, 1.0
        %v1063 = vadd.f32 %v999, 1.0
        %v1064 = vadd.f32 %v1000, 1.0
        %v1065 = vadd.f32 %v1001, 1.0
        %v1066 = vadd.f32 %v1002, 1.0
        %v1067 = vadd.f32 %v1003, 1.0
        %v1068 = vadd.f32 %v1004, 1.0
        %v1069 = vadd.f32 %v1005, 1.0
        %v1070 = vadd.f32 %v1006, 1.0
        %v1071 = vadd.f32 %v1007, 1.0
        %v1072 = vadd.f32 %v1008, 1.0
        %v1073 = vadd.f32 %v1009, 1.0
        %v1074 = vadd.f32 %v1010, 1.0
        %v1075 = vadd.f32 %v1011, 1.0
        %v1076 = vadd.f32 %v1012, 1.0
        %v1077 = vadd.f32 %v1013, 1.0
        %v1078 = vadd.f32 %v1014, 1.0
        %v1079 = vadd.f32 %v1015, 1.0
        %v1080 = vadd.f32 %v1016, 1.0
        %v1081 = vadd.f32 %v1017, 1.0
        %v1082 = vadd.f32 %v1018, 1.0
        %v1083 = vadd.f32 %v1019, 1.0
        %v1084 = vadd.f32 %v1020, 1.0
        %v1085 = vadd.f32 %v1021, 1.0
        %v1086 = vadd.f32 %v1022, 1.0
        %v1087 = vadd.f32 %v1023, 1.0
        %v1088 = vadd.f32 %v1024, 1.0
        %v1089 = vadd.f32 %v1025, 1.0
        %v1090 = vadd.f32 %v1026, 1.0
        %v1091 = vadd.f32 %v1027, 1.0
        %v1092 = vadd.f32 %v1028, 1.0
        %v1093 = vadd.f32 %v1029, 1.0
        %v1094 = vadd.f32 %v1030, 1.0
        %v1095 = vadd.f32 %v1031, 1.0
        %v1096 = vadd.f32 %v1032, 1.0
        %v1097 = vadd.f32 %v1033, 1.0
        %v1098 = vadd.f32 %v1034, 1.0
        %v1099 = vrcp.pop %v1035
        %v1100 = vrcp.pop %v1036
        %v1101 = vrcp.pop %v1037
        %v1102 = vrcp.pop %v1038
        %v1103 = vrcp.pop %v1039
        %v1104 = vrcp.pop %v1040
        %v1105 = vrcp.pop %v1041
        %v1106 = vrcp.pop %v1042
        %v1107 = vrcp.pop %v1043
        %v1108 = vrcp.pop %v1044
        %v1109 = vrcp.pop %v1045
        %v1110 = vrcp.pop %v1046
        %v1111 = vrcp.pop %v1047
        %v1112 = vrcp.pop %v1048
        %v1113 = vrcp.pop %v1049
        %v1114 = vrcp.pop %v1050
        %v1115 = vrcp.pop %v1051
        %v1116 = vrcp.pop %v1052
        %v1117 = vrcp.pop %v1053
        %v1118 = vrcp.pop %v1054
        %v1119 = vrcp.pop %v1055
        %v1120 = vrcp.pop %v1056
        %v1121 = vrcp.pop %v1057
        %v1122 = vrcp.pop %v1058
        %v1123 = vrcp.pop %v1059
        %v1124 = vrcp.pop %v1060
        %v1125 = vrcp.pop %v1061
        %v1126 = vrcp.pop %v1062
        %v1127 = vrcp.pop %v1063
        %v1128 = vrcp.pop %v1064
        %v1129 = vrcp.pop %v1065
        %v1130 = vrcp.pop %v1066
        %v1131 = vrcp.pop %v1067
        %v1132 = vrcp.pop %v1068
        %v1133 = vrcp.pop %v1069
        %v1134 = vrcp.pop %v1070
        %v1135 = vrcp.pop %v1071
        %v1136 = vrcp.pop %v1072
        %v1137 = vrcp.pop %v1073
        %v1138 = vrcp.pop %v1074
        %v1139 = vrcp.pop %v1075
        %v1140 = vrcp.pop %v1076
        %v1141 = vrcp.pop %v1077
        %v1142 = vrcp.pop %v1078
        %v1143 = vrcp.pop %v1079
        %v1144 = vrcp.pop %v1080
        %v1145 = vrcp.pop %v1081
        %v1146 = vrcp.pop %v1082
        %v1147 = vrcp.pop %v1083
        %v1148 = vrcp.pop %v1084
        %v1149 = vrcp.pop %v1085
        %v1150 = vrcp.pop %v1086
        %v1151 = vrcp.pop %v1087
        %v1152 = vrcp.pop %v1088
        %v1153 = vrcp.pop %v1089
        %v1154 = vrcp.pop %v1090
        %v1155 = vrcp.pop %v1091
        %v1156 = vrcp.pop %v1092
        %v1157 = vrcp.pop %v1093
        %v1158 = vrcp.pop %v1094
        %v1159 = vrcp.pop %v1095
        %v1160 = vrcp.pop %v1096
        %v1161 = vrcp.pop %v1097
        %v1162 = vrcp.pop %v1098
        %v1163 = vmul.f32 %v1099, 1.0614054
        %v1164 = vmul.f32 %v1100, 1.0614054
        %v1165 = vmul.f32 %v1101, 1.0614054
        %v1166 = vmul.f32 %v1102, 1.0614054
        %v1167 = vmul.f32 %v1103, 1.0614054
        %v1168 = vmul.f32 %v1104, 1.0614054
        %v1169 = vmul.f32 %v1105, 1.0614054
        %v1170 = vmul.f32 %v1106, 1.0614054
        %v1171 = vmul.f32 %v1107, 1.0614054
        %v1172 = vmul.f32 %v1108, 1.0614054
        %v1173 = vmul.f32 %v1109, 1.0614054
        %v1174 = vmul.f32 %v1110, 1.0614054
        %v1175 = vmul.f32 %v1111, 1.0614054
        %v1176 = vmul.f32 %v1112, 1.0614054
        %v1177 = vmul.f32 %v1113, 1.0614054
        %v1178 = vmul.f32 %v1114, 1.0614054
        %v1179 = vmul.f32 %v1115, 1.0614054
        %v1180 = vmul.f32 %v1116, 1.0614054
        %v1181 = vmul.f32 %v1117, 1.0614054
        %v1182 = vmul.f32 %v1118, 1.0614054
        %v1183 = vmul.f32 %v1119, 1.0614054
        %v1184 = vmul.f32 %v1120, 1.0614054
        %v1185 = vmul.f32 %v1121, 1.0614054
        %v1186 = vmul.f32 %v1122, 1.0614054
        %v1187 = vmul.f32 %v1123, 1.0614054
        %v1188 = vmul.f32 %v1124, 1.0614054
        %v1189 = vmul.f32 %v1125, 1.0614054
        %v1190 = vmul.f32 %v1126, 1.0614054
        %v1191 = vmul.f32 %v1127, 1.0614054
        %v1192 = vmul.f32 %v1128, 1.0614054
        %v1193 = vmul.f32 %v1129, 1.0614054
        %v1194 = vmul.f32 %v1130, 1.0614054
        %v1195 = vmul.f32 %v1131, 1.0614054
        %v1196 = vmul.f32 %v1132, 1.0614054
        %v1197 = vmul.f32 %v1133, 1.0614054
        %v1198 = vmul.f32 %v1134, 1.0614054
        %v1199 = vmul.f32 %v1135, 1.0614054
        %v1200 = vmul.f32 %v1136, 1.0614054
        %v1201 = vmul.f32 %v1137, 1.0614054
        %v1202 = vmul.f32 %v1138, 1.0614054
        %v1203 = vmul.f32 %v1139, 1.0614054
        %v1204 = vmul.f32 %v1140, 1.0614054
        %v1205 = vmul.f32 %v1141, 1.0614054
        %v1206 = vmul.f32 %v1142, 1.0614054
        %v1207 = vmul.f32 %v1143, 1.0614054
        %v1208 = vmul.f32 %v1144, 1.0614054
        %v1209 = vmul.f32 %v1145, 1.0614054
        %v1210 = vmul.f32 %v1146, 1.0614054
        %v1211 = vmul.f32 %v1147, 1.0614054
        %v1212 = vmul.f32 %v1148, 1.0614054
        %v1213 = vmul.f32 %v1149, 1.0614054
        %v1214 = vmul.f32 %v1150, 1.0614054
        %v1215 = vmul.f32 %v1151, 1.0614054
        %v1216 = vmul.f32 %v1152, 1.0614054
        %v1217 = vmul.f32 %v1153, 1.0614054
        %v1218 = vmul.f32 %v1154, 1.0614054
        %v1219 = vmul.f32 %v1155, 1.0614054
        %v1220 = vmul.f32 %v1156, 1.0614054
        %v1221 = vmul.f32 %v1157, 1.0614054
        %v1222 = vmul.f32 %v1158, 1.0614054
        %v1223 = vmul.f32 %v1159, 1.0614054
        %v1224 = vmul.f32 %v1160, 1.0614054
        %v1225 = vmul.f32 %v1161, 1.0614054
        %v1226 = vmul.f32 %v1162, 1.0614054
        %v1227 = vadd.f32 %v1163, -1.4531521
        %v1228 = vadd.f32 %v1164, -1.4531521
        %v1229 = vadd.f32 %v1165, -1.4531521
        %v1230 = vadd.f32 %v1166, -1.4531521
        %v1231 = vadd.f32 %v1167, -1.4531521
        %v1232 = vadd.f32 %v1168, -1.4531521
        %v1233 = vadd.f32 %v1169, -1.4531521
        %v1234 = vadd.f32 %v1170, -1.4531521
        %v1235 = vadd.f32 %v1171, -1.4531521
        %v1236 = vadd.f32 %v1172, -1.4531521
        %v1237 = vadd.f32 %v1173, -1.4531521
        %v1238 = vadd.f32 %v1174, -1.4531521
        %v1239 = vadd.f32 %v1175, -1.4531521
        %v1240 = vadd.f32 %v1176, -1.4531521
        %v1241 = vadd.f32 %v1177, -1.4531521
        %v1242 = vadd.f32 %v1178, -1.4531521
        %v1243 = vadd.f32 %v1179, -1.4531521
        %v1244 = vadd.f32 %v1180, -1.4531521
        %v1245 = vadd.f32 %v1181, -1.4531521
        %v1246 = vadd.f32 %v1182, -1.4531521
        %v1247 = vadd.f32 %v1183, -1.4531521
        %v1248 = vadd.f32 %v1184, -1.4531521
        %v1249 = vadd.f32 %v1185, -1.4531521
        %v1250 = vadd.f32 %v1186, -1.4531521
        %v1251 = vadd.f32 %v1187, -1.4531521
        %v1252 = vadd.f32 %v1188, -1.4531521
        %v1253 = vadd.f32 %v1189, -1.4531521
        %v1254 = vadd.f32 %v1190, -1.4531521
        %v1255 = vadd.f32 %v1191, -1.4531521
        %v1256 = vadd.f32 %v1192, -1.4531521
        %v1257 = vadd.f32 %v1193, -1.4531521
        %v1258 = vadd.f32 %v1194, -1.4531521
        %v1259 = vadd.f32 %v1195, -1.4531521
        %v1260 = vadd.f32 %v1196, -1.4531521
        %v1261 = vadd.f32 %v1197, -1.4531521
        %v1262 = vadd.f32 %v1198, -1.4531521
        %v1263 = vadd.f32 %v1199, -1.4531521
        %v1264 = vadd.f32 %v1200, -1.4531521
        %v1265 = vadd.f32 %v1201, -1.4531521
        %v1266 = vadd.f32 %v1202, -1.4531521
        %v1267 = vadd.f32 %v1203, -1.4531521
        %v1268 = vadd.f32 %v1204, -1.4531521
        %v1269 = vadd.f32 %v1205, -1.4531521
        %v1270 = vadd.f32 %v1206, -1.4531521
        %v1271 = vadd.f32 %v1207, -1.4531521
        %v1272 = vadd.f32 %v1208, -1.4531521
        %v1273 = vadd.f32 %v1209, -1.4531521
        %v1274 = vadd.f32 %v1210, -1.4531521
        %v1275 = vadd.f32 %v1211, -1.4531521
        %v1276 = vadd.f32 %v1212, -1.4531521
        %v1277 = vadd.f32 %v1213, -1.4531521
        %v1278 = vadd.f32 %v1214, -1.4531521
        %v1279 = vadd.f32 %v1215, -1.4531521
        %v1280 = vadd.f32 %v1216, -1.4531521
        %v1281 = vadd.f32 %v1217, -1.4531521
        %v1282 = vadd.f32 %v1218, -1.4531521
        %v1283 = vadd.f32 %v1219, -1.4531521
        %v1284 = vadd.f32 %v1220, -1.4531521
        %v1285 = vadd.f32 %v1221, -1.4531521
        %v1286 = vadd.f32 %v1222, -1.4531521
        %v1287 = vadd.f32 %v1223, -1.4531521
        %v1288 = vadd.f32 %v1224, -1.4531521
        %v1289 = vadd.f32 %v1225, -1.4531521
        %v1290 = vadd.f32 %v1226, -1.4531521
        %v1291 = vmul.f32 %v1227, %v1099
        %v1292 = vmul.f32 %v1228, %v1100
        %v1293 = vmul.f32 %v1229, %v1101
        %v1294 = vmul.f32 %v1230, %v1102
        %v1295 = vmul.f32 %v1231, %v1103
        %v1296 = vmul.f32 %v1232, %v1104
        %v1297 = vmul.f32 %v1233, %v1105
        %v1298 = vmul.f32 %v1234, %v1106
        %v1299 = vmul.f32 %v1235, %v1107
        %v1300 = vmul.f32 %v1236, %v1108
        %v1301 = vmul.f32 %v1237, %v1109
        %v1302 = vmul.f32 %v1238, %v1110
        %v1303 = vmul.f32 %v1239, %v1111
        %v1304 = vmul.f32 %v1240, %v1112
        %v1305 = vmul.f32 %v1241, %v1113
        %v1306 = vmul.f32 %v1242, %v1114
        %v1307 = vmul.f32 %v1243, %v1115
        %v1308 = vmul.f32 %v1244, %v1116
        %v1309 = vmul.f32 %v1245, %v1117
        %v1310 = vmul.f32 %v1246, %v1118
        %v1311 = vmul.f32 %v1247, %v1119
        %v1312 = vmul.f32 %v1248, %v1120
        %v1313 = vmul.f32 %v1249, %v1121
        %v1314 = vmul.f32 %v1250, %v1122
        %v1315 = vmul.f32 %v1251, %v1123
        %v1316 = vmul.f32 %v1252, %v1124
        %v1317 = vmul.f32 %v1253, %v1125
        %v1318 = vmul.f32 %v1254, %v1126
        %v1319 = vmul.f32 %v1255, %v1127
        %v1320 = vmul.f32 %v1256, %v1128
        %v1321 = vmul.f32 %v1257, %v1129
        %v1322 = vmul.f32 %v1258, %v1130
        %v1323 = vmul.f32 %v1259, %v1131
        %v1324 = vmul.f32 %v1260, %v1132
        %v1325 = vmul.f32 %v1261, %v1133
        %v1326 = vmul.f32 %v1262, %v1134
        %v1327 = vmul.f32 %v1263, %v1135
        %v1328 = vmul.f32 %v1264, %v1136
        %v1329 = vmul.f32 %v1265, %v1137
        %v1330 = vmul.f32 %v1266, %v1138
        %v1331 = vmul.f32 %v1267, %v1139
        %v1332 = vmul.f32 %v1268, %v1140
        %v1333 = vmul.f32 %v1269, %v1141
        %v1334 = vmul.f32 %v1270, %v1142
        %v1335 = vmul.f32 %v1271, %v1143
        %v1336 = vmul.f32 %v1272, %v1144
        %v1337 = vmul.f32 %v1273, %v1145
        %v1338 = vmul.f32 %v1274, %v1146
        %v1339 = vmul.f32 %v1275, %v1147
        %v1340 = vmul.f32 %v1276, %v1148
        %v1341 = vmul.f32 %v1277, %v1149
        %v1342 = vmul.f32 %v1278, %v1150
        %v1343 = vmul.f32 %v1279, %v1151
        %v1344 = vmul.f32 %v1280, %v1152
        %v1345 = vmul.f32 %v1281, %v1153
        %v1346 = vmul.f32 %v1282, %v1154
        %v1347 = vmul.f32 %v1283, %v1155
        %v1348 = vmul.f32 %v1284, %v1156
        %v1349 = vmul.f32 %v1285, %v1157
        %v1350 = vmul.f32 %v1286, %v1158
        %v1351 = vmul.f32 %v1287, %v1159
        %v1352 = vmul.f32 %v1288, %v1160
        %v1353 = vmul.f32 %v1289, %v1161
        %v1354 = vmul.f32 %v1290, %v1162
        %v1355 = vadd.f32 %v1291, 1.4214138
        %v1356 = vadd.f32 %v1292, 1.4214138
        %v1357 = vadd.f32 %v1293, 1.4214138
        %v1358 = vadd.f32 %v1294, 1.4214138
        %v1359 = vadd.f32 %v1295, 1.4214138
        %v1360 = vadd.f32 %v1296, 1.4214138
        %v1361 = vadd.f32 %v1297, 1.4214138
        %v1362 = vadd.f32 %v1298, 1.4214138
        %v1363 = vadd.f32 %v1299, 1.4214138
        %v1364 = vadd.f32 %v1300, 1.4214138
        %v1365 = vadd.f32 %v1301, 1.4214138
        %v1366 = vadd.f32 %v1302, 1.4214138
        %v1367 = vadd.f32 %v1303, 1.4214138
        %v1368 = vadd.f32 %v1304, 1.4214138
        %v1369 = vadd.f32 %v1305, 1.4214138
        %v1370 = vadd.f32 %v1306, 1.4214138
        %v1371 = vadd.f32 %v1307, 1.4214138
        %v1372 = vadd.f32 %v1308, 1.4214138
        %v1373 = vadd.f32 %v1309, 1.4214138
        %v1374 = vadd.f32 %v1310, 1.4214138
        %v1375 = vadd.f32 %v1311, 1.4214138
        %v1376 = vadd.f32 %v1312, 1.4214138
        %v1377 = vadd.f32 %v1313, 1.4214138
        %v1378 = vadd.f32 %v1314, 1.4214138
        %v1379 = vadd.f32 %v1315, 1.4214138
        %v1380 = vadd.f32 %v1316, 1.4214138
        %v1381 = vadd.f32 %v1317, 1.4214138
        %v1382 = vadd.f32 %v1318, 1.4214138
        %v1383 = vadd.f32 %v1319, 1.4214138
        %v1384 = vadd.f32 %v1320, 1.4214138
        %v1385 = vadd.f32 %v1321, 1.4214138
        %v1386 = vadd.f32 %v1322, 1.4214138
        %v1387 = vadd.f32 %v1323, 1.4214138
        %v1388 = vadd.f32 %v1324, 1.4214138
        %v1389 = vadd.f32 %v1325, 1.4214138
        %v1390 = vadd.f32 %v1326, 1.4214138
        %v1391 = vadd.f32 %v1327, 1.4214138
        %v1392 = vadd.f32 %v1328, 1.4214138
        %v1393 = vadd.f32 %v1329, 1.4214138
        %v1394 = vadd.f32 %v1330, 1.4214138
        %v1395 = vadd.f32 %v1331, 1.4214138
        %v1396 = vadd.f32 %v1332, 1.4214138
        %v1397 = vadd.f32 %v1333, 1.4214138
        %v1398 = vadd.f32 %v1334, 1.4214138
        %v1399 = vadd.f32 %v1335, 1.4214138
        %v1400 = vadd.f32 %v1336, 1.4214138
        %v1401 = vadd.f32 %v1337, 1.4214138
        %v1402 = vadd.f32 %v1338, 1.4214138
        %v1403 = vadd.f32 %v1339, 1.4214138
        %v1404 = vadd.f32 %v1340, 1.4214138
        %v1405 = vadd.f32 %v1341, 1.4214138
        %v1406 = vadd.f32 %v1342, 1.4214138
        %v1407 = vadd.f32 %v1343, 1.4214138
        %v1408 = vadd.f32 %v1344, 1.4214138
        %v1409 = vadd.f32 %v1345, 1.4214138
        %v1410 = vadd.f32 %v1346, 1.4214138
        %v1411 = vadd.f32 %v1347, 1.4214138
        %v1412 = vadd.f32 %v1348, 1.4214138
        %v1413 = vadd.f32 %v1349, 1.4214138
        %v1414 = vadd.f32 %v1350, 1.4214138
        %v1415 = vadd.f32 %v1351, 1.4214138
        %v1416 = vadd.f32 %v1352, 1.4214138
        %v1417 = vadd.f32 %v1353, 1.4214138
        %v1418 = vadd.f32 %v1354, 1.4214138
        %v1419 = vmul.f32 %v1355, %v1099
        %v1420 = vmul.f32 %v1356, %v1100
        %v1421 = vmul.f32 %v1357, %v1101
        %v1422 = vmul.f32 %v1358, %v1102
        %v1423 = vmul.f32 %v1359, %v1103
        %v1424 = vmul.f32 %v1360, %v1104
        %v1425 = vmul.f32 %v1361, %v1105
        %v1426 = vmul.f32 %v1362, %v1106
        %v1427 = vmul.f32 %v1363, %v1107
        %v1428 = vmul.f32 %v1364, %v1108
        %v1429 = vmul.f32 %v1365, %v1109
        %v1430 = vmul.f32 %v1366, %v1110
        %v1431 = vmul.f32 %v1367, %v1111
        %v1432 = vmul.f32 %v1368, %v1112
        %v1433 = vmul.f32 %v1369, %v1113
        %v1434 = vmul.f32 %v1370, %v1114
        %v1435 = vmul.f32 %v1371, %v1115
        %v1436 = vmul.f32 %v1372, %v1116
        %v1437 = vmul.f32 %v1373, %v1117
        %v1438 = vmul.f32 %v1374, %v1118
        %v1439 = vmul.f32 %v1375, %v1119
        %v1440 = vmul.f32 %v1376, %v1120
        %v1441 = vmul.f32 %v1377, %v1121
        %v1442 = vmul.f32 %v1378, %v1122
        %v1443 = vmul.f32 %v1379, %v1123
        %v1444 = vmul.f32 %v1380, %v1124
        %v1445 = vmul.f32 %v1381, %v1125
        %v1446 = vmul.f32 %v1382, %v1126
        %v1447 = vmul.f32 %v1383, %v1127
        %v1448 = vmul.f32 %v1384, %v1128
        %v1449 = vmul.f32 %v1385, %v1129
        %v1450 = vmul.f32 %v1386, %v1130
        %v1451 = vmul.f32 %v1387, %v1131
        %v1452 = vmul.f32 %v1388, %v1132
        %v1453 = vmul.f32 %v1389, %v1133
        %v1454 = vmul.f32 %v1390, %v1134
        %v1455 = vmul.f32 %v1391, %v1135
        %v1456 = vmul.f32 %v1392, %v1136
        %v1457 = vmul.f32 %v1393, %v1137
        %v1458 = vmul.f32 %v1394, %v1138
        %v1459 = vmul.f32 %v1395, %v1139
        %v1460 = vmul.f32 %v1396, %v1140
        %v1461 = vmul.f32 %v1397, %v1141
        %v1462 = vmul.f32 %v1398, %v1142
        %v1463 = vmul.f32 %v1399, %v1143
        %v1464 = vmul.f32 %v1400, %v1144
        %v1465 = vmul.f32 %v1401, %v1145
        %v1466 = vmul.f32 %v1402, %v1146
        %v1467 = vmul.f32 %v1403, %v1147
        %v1468 = vmul.f32 %v1404, %v1148
        %v1469 = vmul.f32 %v1405, %v1149
        %v1470 = vmul.f32 %v1406, %v1150
        %v1471 = vmul.f32 %v1407, %v1151
        %v1472 = vmul.f32 %v1408, %v1152
        %v1473 = vmul.f32 %v1409, %v1153
        %v1474 = vmul.f32 %v1410, %v1154
        %v1475 = vmul.f32 %v1411, %v1155
        %v1476 = vmul.f32 %v1412, %v1156
        %v1477 = vmul.f32 %v1413, %v1157
        %v1478 = vmul.f32 %v1414, %v1158
        %v1479 = vmul.f32 %v1415, %v1159
        %v1480 = vmul.f32 %v1416, %v1160
        %v1481 = vmul.f32 %v1417, %v1161
        %v1482 = vmul.f32 %v1418, %v1162
        %v1483 = vadd.f32 %v1419, -0.28449672
        %v1484 = vadd.f32 %v1420, -0.28449672
        %v1485 = vadd.f32 %v1421, -0.28449672
        %v1486 = vadd.f32 %v1422, -0.28449672
        %v1487 = vadd.f32 %v1423, -0.28449672
        %v1488 = vadd.f32 %v1424, -0.28449672
        %v1489 = vadd.f32 %v1425, -0.28449672
        %v1490 = vadd.f32 %v1426, -0.28449672
        %v1491 = vadd.f32 %v1427, -0.28449672
        %v1492 = vadd.f32 %v1428, -0.28449672
        %v1493 = vadd.f32 %v1429, -0.28449672
        %v1494 = vadd.f32 %v1430, -0.28449672
        %v1495 = vadd.f32 %v1431, -0.28449672
        %v1496 = vadd.f32 %v1432, -0.28449672
        %v1497 = vadd.f32 %v1433, -0.28449672
        %v1498 = vadd.f32 %v1434, -0.28449672
        %v1499 = vadd.f32 %v1435, -0.28449672
        %v1500 = vadd.f32 %v1436, -0.28449672
        %v1501 = vadd.f32 %v1437, -0.28449672
        %v1502 = vadd.f32 %v1438, -0.28449672
        %v1503 = vadd.f32 %v1439, -0.28449672
        %v1504 = vadd.f32 %v1440, -0.28449672
        %v1505 = vadd.f32 %v1441, -0.28449672
        %v1506 = vadd.f32 %v1442, -0.28449672
        %v1507 = vadd.f32 %v1443, -0.28449672
        %v1508 = vadd.f32 %v1444, -0.28449672
        %v1509 = vadd.f32 %v1445, -0.28449672
        %v1510 = vadd.f32 %v1446, -0.28449672
        %v1511 = vadd.f32 %v1447, -0.28449672
        %v1512 = vadd.f32 %v1448, -0.28449672
        %v1513 = vadd.f32 %v1449, -0.28449672
        %v1514 = vadd.f32 %v1450, -0.28449672
        %v1515 = vadd.f32 %v1451, -0.28449672
        %v1516 = vadd.f32 %v1452, -0.28449672
        %v1517 = vadd.f32 %v1453, -0.28449672
        %v1518 = vadd.f32 %v1454, -0.28449672
        %v1519 = vadd.f32 %v1455, -0.28449672
        %v1520 = vadd.f32 %v1456, -0.28449672
        %v1521 = vadd.f32 %v1457, -0.28449672
        %v1522 = vadd.f32 %v1458, -0.28449672
        %v1523 = vadd.f32 %v1459, -0.28449672
        %v1524 = vadd.f32 %v1460, -0.28449672
        %v1525 = vadd.f32 %v1461, -0.28449672
        %v1526 = vadd.f32 %v1462, -0.28449672
        %v1527 = vadd.f32 %v1463, -0.28449672
        %v1528 = vadd.f32 %v1464, -0.28449672
        %v1529 = vadd.f32 %v1465, -0.28449672
        %v1530 = vadd.f32 %v1466, -0.28449672
        %v1531 = vadd.f32 %v1467, -0.28449672
        %v1532 = vadd.f32 %v1468, -0.28449672
        %v1533 = vadd.f32 %v1469, -0.28449672
        %v1534 = vadd.f32 %v1470, -0.28449672
        %v1535 = vadd.f32 %v1471, -0.28449672
        %v1536 = vadd.f32 %v1472, -0.28449672
        %v1537 = vadd.f32 %v1473, -0.28449672
        %v1538 = vadd.f32 %v1474, -0.28449672
        %v1539 = vadd.f32 %v1475, -0.28449672
        %v1540 = vadd.f32 %v1476, -0.28449672
        %v1541 = vadd.f32 %v1477, -0.28449672
        %v1542 = vadd.f32 %v1478, -0.28449672
        %v1543 = vadd.f32 %v1479, -0.28449672
        %v1544 = vadd.f32 %v1480, -0.28449672
        %v1545 = vadd.f32 %v1481, -0.28449672
        %v1546 = vadd.f32 %v1482, -0.28449672
        %v1547 = vmul.f32 %v1483, %v1099
        %v1548 = vmul.f32 %v1484, %v1100
        %v1549 = vmul.f32 %v1485, %v1101
        %v1550 = vmul.f32 %v1486, %v1102
        %v1551 = vmul.f32 %v1487, %v1103
        %v1552 = vmul.f32 %v1488, %v1104
        %v1553 = vmul.f32 %v1489, %v1105
        %v1554 = vmul.f32 %v1490, %v1106
        %v1555 = vmul.f32 %v1491, %v1107
        %v1556 = vmul.f32 %v1492, %v1108
        %v1557 = vmul.f32 %v1493, %v1109
        %v1558 = vmul.f32 %v1494, %v1110
        %v1559 = vmul.f32 %v1495, %v1111
        %v1560 = vmul.f32 %v1496, %v1112
        %v1561 = vmul.f32 %v1497, %v1113
        %v1562 = vmul.f32 %v1498, %v1114
        %v1563 = vmul.f32 %v1499, %v1115
        %v1564 = vmul.f32 %v1500, %v1116
        %v1565 = vmul.f32 %v1501, %v1117
        %v1566 = vmul.f32 %v1502, %v1118
        %v1567 = vmul.f32 %v1503, %v1119
        %v1568 = vmul.f32 %v1504, %v1120
        %v1569 = vmul.f32 %v1505, %v1121
        %v1570 = vmul.f32 %v1506, %v1122
        %v1571 = vmul.f32 %v1507, %v1123
        %v1572 = vmul.f32 %v1508, %v1124
        %v1573 = vmul.f32 %v1509, %v1125
        %v1574 = vmul.f32 %v1510, %v1126
        %v1575 = vmul.f32 %v1511, %v1127
        %v1576 = vmul.f32 %v1512, %v1128
        %v1577 = vmul.f32 %v1513, %v1129
        %v1578 = vmul.f32 %v1514, %v1130
        %v1579 = vmul.f32 %v1515, %v1131
        %v1580 = vmul.f32 %v1516, %v1132
        %v1581 = vmul.f32 %v1517, %v1133
        %v1582 = vmul.f32 %v1518, %v1134
        %v1583 = vmul.f32 %v1519, %v1135
        %v1584 = vmul.f32 %v1520, %v1136
        %v1585 = vmul.f32 %v1521, %v1137
        %v1586 = vmul.f32 %v1522, %v1138
        %v1587 = vmul.f32 %v1523, %v1139
        %v1588 = vmul.f32 %v1524, %v1140
        %v1589 = vmul.f32 %v1525, %v1141
        %v1590 = vmul.f32 %v1526, %v1142
        %v1591 = vmul.f32 %v1527, %v1143
        %v1592 = vmul.f32 %v1528, %v1144
        %v1593 = vmul.f32 %v1529, %v1145
        %v1594 = vmul.f32 %v1530, %v1146
        %v1595 = vmul.f32 %v1531, %v1147
        %v1596 = vmul.f32 %v1532, %v1148
        %v1597 = vmul.f32 %v1533, %v1149
        %v1598 = vmul.f32 %v1534, %v1150
        %v1599 = vmul.f32 %v1535, %v1151
        %v1600 = vmul.f32 %v1536, %v1152
        %v1601 = vmul.f32 %v1537, %v1153
        %v1602 = vmul.f32 %v1538, %v1154
        %v1603 = vmul.f32 %v1539, %v1155
        %v1604 = vmul.f32 %v1540, %v1156
        %v1605 = vmul.f32 %v1541, %v1157
        %v1606 = vmul.f32 %v1542, %v1158
        %v1607 = vmul.f32 %v1543, %v1159
        %v1608 = vmul.f32 %v1544, %v1160
        %v1609 = vmul.f32 %v1545, %v1161
        %v1610 = vmul.f32 %v1546, %v1162
        %v1611 = vadd.f32 %v1547, 0.2548296
        %v1612 = vadd.f32 %v1548, 0.2548296
        %v1613 = vadd.f32 %v1549, 0.2548296
        %v1614 = vadd.f32 %v1550, 0.2548296
        %v1615 = vadd.f32 %v1551, 0.2548296
        %v1616 = vadd.f32 %v1552, 0.2548296
        %v1617 = vadd.f32 %v1553, 0.2548296
        %v1618 = vadd.f32 %v1554, 0.2548296
        %v1619 = vadd.f32 %v1555, 0.2548296
        %v1620 = vadd.f32 %v1556, 0.2548296
        %v1621 = vadd.f32 %v1557, 0.2548296
        %v1622 = vadd.f32 %v1558, 0.2548296
        %v1623 = vadd.f32 %v1559, 0.2548296
        %v1624 = vadd.f32 %v1560, 0.2548296
        %v1625 = vadd.f32 %v1561, 0.2548296
        %v1626 = vadd.f32 %v1562, 0.2548296
        %v1627 = vadd.f32 %v1563, 0.2548296
        %v1628 = vadd.f32 %v1564, 0.2548296
        %v1629 = vadd.f32 %v1565, 0.2548296
        %v1630 = vadd.f32 %v1566, 0.2548296
        %v1631 = vadd.f32 %v1567, 0.2548296
        %v1632 = vadd.f32 %v1568, 0.2548296
        %v1633 = vadd.f32 %v1569, 0.2548296
        %v1634 = vadd.f32 %v1570, 0.2548296
        %v1635 = vadd.f32 %v1571, 0.2548296
        %v1636 = vadd.f32 %v1572, 0.2548296
        %v1637 = vadd.f32 %v1573, 0.2548296
        %v1638 = vadd.f32 %v1574, 0.2548296
        %v1639 = vadd.f32 %v1575, 0.2548296
        %v1640 = vadd.f32 %v1576, 0.2548296
        %v1641 = vadd.f32 %v1577, 0.2548296
        %v1642 = vadd.f32 %v1578, 0.2548296
        %v1643 = vadd.f32 %v1579, 0.2548296
        %v1644 = vadd.f32 %v1580, 0.2548296
        %v1645 = vadd.f32 %v1581, 0.2548296
        %v1646 = vadd.f32 %v1582, 0.2548296
        %v1647 = vadd.f32 %v1583, 0.2548296
        %v1648 = vadd.f32 %v1584, 0.2548296
        %v1649 = vadd.f32 %v1585, 0.2548296
        %v1650 = vadd.f32 %v1586, 0.2548296
        %v1651 = vadd.f32 %v1587, 0.2548296
        %v1652 = vadd.f32 %v1588, 0.2548296
        %v1653 = vadd.f32 %v1589, 0.2548296
        %v1654 = vadd.f32 %v1590, 0.2548296
        %v1655 = vadd.f32 %v1591, 0.2548296
        %v1656 = vadd.f32 %v1592, 0.2548296
        %v1657 = vadd.f32 %v1593, 0.2548296
        %v1658 = vadd.f32 %v1594, 0.2548296
        %v1659 = vadd.f32 %v1595, 0.2548296
        %v1660 = vadd.f32 %v1596, 0.2548296
        %v1661 = vadd.f32 %v1597, 0.2548296
        %v1662 = vadd.f32 %v1598, 0.2548296
        %v1663 = vadd.f32 %v1599, 0.2548296
        %v1664 = vadd.f32 %v1600, 0.2548296
        %v1665 = vadd.f32 %v1601, 0.2548296
        %v1666 = vadd.f32 %v1602, 0.2548296
        %v1667 = vadd.f32 %v1603, 0.2548296
        %v1668 = vadd.f32 %v1604, 0.2548296
        %v1669 = vadd.f32 %v1605, 0.2548296
        %v1670 = vadd.f32 %v1606, 0.2548296
        %v1671 = vadd.f32 %v1607, 0.2548296
        %v1672 = vadd.f32 %v1608, 0.2548296
        %v1673 = vadd.f32 %v1609, 0.2548296
        %v1674 = vadd.f32 %v1610, 0.2548296
        %v1675 = vmul.f32 %v1611, %v1099
        %v1676 = vmul.f32 %v1612, %v1100
        %v1677 = vmul.f32 %v1613, %v1101
        %v1678 = vmul.f32 %v1614, %v1102
        %v1679 = vmul.f32 %v1615, %v1103
        %v1680 = vmul.f32 %v1616, %v1104
        %v1681 = vmul.f32 %v1617, %v1105
        %v1682 = vmul.f32 %v1618, %v1106
        %v1683 = vmul.f32 %v1619, %v1107
        %v1684 = vmul.f32 %v1620, %v1108
        %v1685 = vmul.f32 %v1621, %v1109
        %v1686 = vmul.f32 %v1622, %v1110
        %v1687 = vmul.f32 %v1623, %v1111
        %v1688 = vmul.f32 %v1624, %v1112
        %v1689 = vmul.f32 %v1625, %v1113
        %v1690 = vmul.f32 %v1626, %v1114
        %v1691 = vmul.f32 %v1627, %v1115
        %v1692 = vmul.f32 %v1628, %v1116
        %v1693 = vmul.f32 %v1629, %v1117
        %v1694 = vmul.f32 %v1630, %v1118
        %v1695 = vmul.f32 %v1631, %v1119
        %v1696 = vmul.f32 %v1632, %v1120
        %v1697 = vmul.f32 %v1633, %v1121
        %v1698 = vmul.f32 %v1634, %v1122
        %v1699 = vmul.f32 %v1635, %v1123
        %v1700 = vmul.f32 %v1636, %v1124
        %v1701 = vmul.f32 %v1637, %v1125
        %v1702 = vmul.f32 %v1638, %v1126
        %v1703 = vmul.f32 %v1639, %v1127
        %v1704 = vmul.f32 %v1640, %v1128
        %v1705 = vmul.f32 %v1641, %v1129
        %v1706 = vmul.f32 %v1642, %v1130
        %v1707 = vmul.f32 %v1643, %v1131
        %v1708 = vmul.f32 %v1644, %v1132
        %v1709 = vmul.f32 %v1645, %v1133
        %v1710 = vmul.f32 %v1646, %v1134
        %v1711 = vmul.f32 %v1647, %v1135
        %v1712 = vmul.f32 %v1648, %v1136
        %v1713 = vmul.f32 %v1649, %v1137
        %v1714 = vmul.f32 %v1650, %v1138
        %v1715 = vmul.f32 %v1651, %v1139
        %v1716 = vmul.f32 %v1652, %v1140
        %v1717 = vmul.f32 %v1653, %v1141
        %v1718 = vmul.f32 %v1654, %v1142
        %v1719 = vmul.f32 %v1655, %v1143
        %v1720 = vmul.f32 %v1656, %v1144
        %v1721 = vmul.f32 %v1657, %v1145
        %v1722 = vmul.f32 %v1658, %v1146
        %v1723 = vmul.f32 %v1659, %v1147
        %v1724 = vmul.f32 %v1660, %v1148
        %v1725 = vmul.f32 %v1661, %v1149
        %v1726 = vmul.f32 %v1662, %v1150
        %v1727 = vmul.f32 %v1663, %v1151
        %v1728 = vmul.f32 %v1664, %v1152
        %v1729 = vmul.f32 %v1665, %v1153
        %v1730 = vmul.f32 %v1666, %v1154
        %v1731 = vmul.f32 %v1667, %v1155
        %v1732 = vmul.f32 %v1668, %v1156
        %v1733 = vmul.f32 %v1669, %v1157
        %v1734 = vmul.f32 %v1670, %v1158
        %v1735 = vmul.f32 %v1671, %v1159
        %v1736 = vmul.f32 %v1672, %v1160
        %v1737 = vmul.f32 %v1673, %v1161
        %v1738 = vmul.f32 %v1674, %v1162
        %v1739 = vsub.f32 0.0, %v907
        %v1740 = vsub.f32 0.0, %v908
        %v1741 = vsub.f32 0.0, %v909
        %v1742 = vsub.f32 0.0, %v910
        %v1743 = vsub.f32 0.0, %v911
        %v1744 = vsub.f32 0.0, %v912
        %v1745 = vsub.f32 0.0, %v913
        %v1746 = vsub.f32 0.0, %v914
        %v1747 = vsub.f32 0.0, %v915
        %v1748 = vsub.f32 0.0, %v916
        %v1749 = vsub.f32 0.0, %v917
        %v1750 = vsub.f32 0.0, %v918
        %v1751 = vsub.f32 0.0, %v919
        %v1752 = vsub.f32 0.0, %v920
        %v1753 = vsub.f32 0.0, %v921
        %v1754 = vsub.f32 0.0, %v922
        %v1755 = vsub.f32 0.0, %v923
        %v1756 = vsub.f32 0.0, %v924
        %v1757 = vsub.f32 0.0, %v925
        %v1758 = vsub.f32 0.0, %v926
        %v1759 = vsub.f32 0.0, %v927
        %v1760 = vsub.f32 0.0, %v928
        %v1761 = vsub.f32 0.0, %v929
        %v1762 = vsub.f32 0.0, %v930
        %v1763 = vsub.f32 0.0, %v931
        %v1764 = vsub.f32 0.0, %v932
        %v1765 = vsub.f32 0.0, %v933
        %v1766 = vsub.f32 0.0, %v934
        %v1767 = vsub.f32 0.0, %v935
        %v1768 = vsub.f32 0.0, %v936
        %v1769 = vsub.f32 0.0, %v937
        %v1770 = vsub.f32 0.0, %v938
        %v1771 = vsub.f32 0.0, %v939
        %v1772 = vsub.f32 0.0, %v940
        %v1773 = vsub.f32 0.0, %v941
        %v1774 = vsub.f32 0.0, %v942
        %v1775 = vsub.f32 0.0, %v943
        %v1776 = vsub.f32 0.0, %v944
        %v1777 = vsub.f32 0.0, %v945
        %v1778 = vsub.f32 0.0, %v946
        %v1779 = vsub.f32 0.0, %v947
        %v1780 = vsub.f32 0.0, %v948
        %v1781 = vsub.f32 0.0, %v949
        %v1782 = vsub.f32 0.0, %v950
        %v1783 = vsub.f32 0.0, %v951
        %v1784 = vsub.f32 0.0, %v952
        %v1785 = vsub.f32 0.0, %v953
        %v1786 = vsub.f32 0.0, %v954
        %v1787 = vsub.f32 0.0, %v955
        %v1788 = vsub.f32 0.0, %v956
        %v1789 = vsub.f32 0.0, %v957
        %v1790 = vsub.f32 0.0, %v958
        %v1791 = vsub.f32 0.0, %v959
        %v1792 = vsub.f32 0.0, %v960
        %v1793 = vsub.f32 0.0, %v961
        %v1794 = vsub.f32 0.0, %v962
        %v1795 = vsub.f32 0.0, %v963
        %v1796 = vsub.f32 0.0, %v964
        %v1797 = vsub.f32 0.0, %v965
        %v1798 = vsub.f32 0.0, %v966
        %v1799 = vsub.f32 0.0, %v967
        %v1800 = vsub.f32 0.0, %v968
        %v1801 = vsub.f32 0.0, %v969
        %v1802 = vsub.f32 0.0, %v970
        %v1803 = vmul.f32 %v1739, %v907
        %v1804 = vmul.f32 %v1740, %v908
        %v1805 = vmul.f32 %v1741, %v909
        %v1806 = vmul.f32 %v1742, %v910
        %v1807 = vmul.f32 %v1743, %v911
        %v1808 = vmul.f32 %v1744, %v912
        %v1809 = vmul.f32 %v1745, %v913
        %v1810 = vmul.f32 %v1746, %v914
        %v1811 = vmul.f32 %v1747, %v915
        %v1812 = vmul.f32 %v1748, %v916
        %v1813 = vmul.f32 %v1749, %v917
        %v1814 = vmul.f32 %v1750, %v918
        %v1815 = vmul.f32 %v1751, %v919
        %v1816 = vmul.f32 %v1752, %v920
        %v1817 = vmul.f32 %v1753, %v921
        %v1818 = vmul.f32 %v1754, %v922
        %v1819 = vmul.f32 %v1755, %v923
        %v1820 = vmul.f32 %v1756, %v924
        %v1821 = vmul.f32 %v1757, %v925
        %v1822 = vmul.f32 %v1758, %v926
        %v1823 = vmul.f32 %v1759, %v927
        %v1824 = vmul.f32 %v1760, %v928
        %v1825 = vmul.f32 %v1761, %v929
        %v1826 = vmul.f32 %v1762, %v930
        %v1827 = vmul.f32 %v1763, %v931
        %v1828 = vmul.f32 %v1764, %v932
        %v1829 = vmul.f32 %v1765, %v933
        %v1830 = vmul.f32 %v1766, %v934
        %v1831 = vmul.f32 %v1767, %v935
        %v1832 = vmul.f32 %v1768, %v936
        %v1833 = vmul.f32 %v1769, %v937
        %v1834 = vmul.f32 %v1770, %v938
        %v1835 = vmul.f32 %v1771, %v939
        %v1836 = vmul.f32 %v1772, %v940
        %v1837 = vmul.f32 %v1773, %v941
        %v1838 = vmul.f32 %v1774, %v942
        %v1839 = vmul.f32 %v1775, %v943
        %v1840 = vmul.f32 %v1776, %v944
        %v1841 = vmul.f32 %v1777, %v945
        %v1842 = vmul.f32 %v1778, %v946
        %v1843 = vmul.f32 %v1779, %v947
        %v1844 = vmul.f32 %v1780, %v948
        %v1845 = vmul.f32 %v1781, %v949
        %v1846 = vmul.f32 %v1782, %v950
        %v1847 = vmul.f32 %v1783, %v951
        %v1848 = vmul.f32 %v1784, %v952
        %v1849 = vmul.f32 %v1785, %v953
        %v1850 = vmul.f32 %v1786, %v954
        %v1851 = vmul.f32 %v1787, %v955
        %v1852 = vmul.f32 %v1788, %v956
        %v1853 = vmul.f32 %v1789, %v957
        %v1854 = vmul.f32 %v1790, %v958
        %v1855 = vmul.f32 %v1791, %v959
        %v1856 = vmul.f32 %v1792, %v960
        %v1857 = vmul.f32 %v1793, %v961
        %v1858 = vmul.f32 %v1794, %v962
        %v1859 = vmul.f32 %v1795, %v963
        %v1860 = vmul.f32 %v1796, %v964
        %v1861 = vmul.f32 %v1797, %v965
        %v1862 = vmul.f32 %v1798, %v966
        %v1863 = vmul.f32 %v1799, %v967
        %v1864 = vmul.f32 %v1800, %v968
        %v1865 = vmul.f32 %v1801, %v969
        %v1866 = vmul.f32 %v1802, %v970
        %v1867 = vmul.f32 %v1803, 1.442695
        %v1868 = vpow.pop %v1867
        %v1869 = vmul.f32 %v1804, 1.442695
        %v1870 = vpow.pop %v1869
        %v1871 = vmul.f32 %v1805, 1.442695
        %v1872 = vpow.pop %v1871
        %v1873 = vmul.f32 %v1806, 1.442695
        %v1874 = vpow.pop %v1873
        %v1875 = vmul.f32 %v1807, 1.442695
        %v1876 = vpow.pop %v1875
        %v1877 = vmul.f32 %v1808, 1.442695
        %v1878 = vpow.pop %v1877
        %v1879 = vmul.f32 %v1809, 1.442695
        %v1880 = vpow.pop %v1879
        %v1881 = vmul.f32 %v1810, 1.442695
        %v1882 = vpow.pop %v1881
        %v1883 = vmul.f32 %v1811, 1.442695
        %v1884 = vpow.pop %v1883
        %v1885 = vmul.f32 %v1812, 1.442695
        %v1886 = vpow.pop %v1885
        %v1887 = vmul.f32 %v1813, 1.442695
        %v1888 = vpow.pop %v1887
        %v1889 = vmul.f32 %v1814, 1.442695
        %v1890 = vpow.pop %v1889
        %v1891 = vmul.f32 %v1815, 1.442695
        %v1892 = vpow.pop %v1891
        %v1893 = vmul.f32 %v1816, 1.442695
        %v1894 = vpow.pop %v1893
        %v1895 = vmul.f32 %v1817, 1.442695
        %v1896 = vpow.pop %v1895
        %v1897 = vmul.f32 %v1818, 1.442695
        %v1898 = vpow.pop %v1897
        %v1899 = vmul.f32 %v1819, 1.442695
        %v1900 = vpow.pop %v1899
        %v1901 = vmul.f32 %v1820, 1.442695
        %v1902 = vpow.pop %v1901
        %v1903 = vmul.f32 %v1821, 1.442695
        %v1904 = vpow.pop %v1903
        %v1905 = vmul.f32 %v1822, 1.442695
        %v1906 = vpow.pop %v1905
        %v1907 = vmul.f32 %v1823, 1.442695
        %v1908 = vpow.pop %v1907
        %v1909 = vmul.f32 %v1824, 1.442695
        %v1910 = vpow.pop %v1909
        %v1911 = vmul.f32 %v1825, 1.442695
        %v1912 = vpow.pop %v1911
        %v1913 = vmul.f32 %v1826, 1.442695
        %v1914 = vpow.pop %v1913
        %v1915 = vmul.f32 %v1827, 1.442695
        %v1916 = vpow.pop %v1915
        %v1917 = vmul.f32 %v1828, 1.442695
        %v1918 = vpow.pop %v1917
        %v1919 = vmul.f32 %v1829, 1.442695
        %v1920 = vpow.pop %v1919
        %v1921 = vmul.f32 %v1830, 1.442695
        %v1922 = vpow.pop %v1921
        %v1923 = vmul.f32 %v1831, 1.442695
        %v1924 = vpow.pop %v1923
        %v1925 = vmul.f32 %v1832, 1.442695
        %v1926 = vpow.pop %v1925
        %v1927 = vmul.f32 %v1833, 1.442695
        %v1928 = vpow.pop %v1927
        %v1929 = vmul.f32 %v1834, 1.442695
        %v1930 = vpow.pop %v1929
        %v1931 = vmul.f32 %v1835, 1.442695
        %v1932 = vpow.pop %v1931
        %v1933 = vmul.f32 %v1836, 1.442695
        %v1934 = vpow.pop %v1933
        %v1935 = vmul.f32 %v1837, 1.442695
        %v1936 = vpow.pop %v1935
        %v1937 = vmul.f32 %v1838, 1.442695
        %v1938 = vpow.pop %v1937
        %v1939 = vmul.f32 %v1839, 1.442695
        %v1940 = vpow.pop %v1939
        %v1941 = vmul.f32 %v1840, 1.442695
        %v1942 = vpow.pop %v1941
        %v1943 = vmul.f32 %v1841, 1.442695
        %v1944 = vpow.pop %v1943
        %v1945 = vmul.f32 %v1842, 1.442695
        %v1946 = vpow.pop %v1945
        %v1947 = vmul.f32 %v1843, 1.442695
        %v1948 = vpow.pop %v1947
        %v1949 = vmul.f32 %v1844, 1.442695
        %v1950 = vpow.pop %v1949
        %v1951 = vmul.f32 %v1845, 1.442695
        %v1952 = vpow.pop %v1951
        %v1953 = vmul.f32 %v1846, 1.442695
        %v1954 = vpow.pop %v1953
        %v1955 = vmul.f32 %v1847, 1.442695
        %v1956 = vpow.pop %v1955
        %v1957 = vmul.f32 %v1848, 1.442695
        %v1958 = vpow.pop %v1957
        %v1959 = vmul.f32 %v1849, 1.442695
        %v1960 = vpow.pop %v1959
        %v1961 = vmul.f32 %v1850, 1.442695
        %v1962 = vpow.pop %v1961
        %v1963 = vmul.f32 %v1851, 1.442695
        %v1964 = vpow.pop %v1963
        %v1965 = vmul.f32 %v1852, 1.442695
        %v1966 = vpow.pop %v1965
        %v1967 = vmul.f32 %v1853, 1.442695
        %v1968 = vpow.pop %v1967
        %v1969 = vmul.f32 %v1854, 1.442695
        %v1970 = vpow.pop %v1969
        %v1971 = vmul.f32 %v1855, 1.442695
        %v1972 = vpow.pop %v1971
        %v1973 = vmul.f32 %v1856, 1.442695
        %v1974 = vpow.pop %v1973
        %v1975 = vmul.f32 %v1857, 1.442695
        %v1976 = vpow.pop %v1975
        %v1977 = vmul.f32 %v1858, 1.442695
        %v1978 = vpow.pop %v1977
        %v1979 = vmul.f32 %v1859, 1.442695
        %v1980 = vpow.pop %v1979
        %v1981 = vmul.f32 %v1860, 1.442695
        %v1982 = vpow.pop %v1981
        %v1983 = vmul.f32 %v1861, 1.442695
        %v1984 = vpow.pop %v1983
        %v1985 = vmul.f32 %v1862, 1.442695
        %v1986 = vpow.pop %v1985
        %v1987 = vmul.f32 %v1863, 1.442695
        %v1988 = vpow.pop %v1987
        %v1989 = vmul.f32 %v1864, 1.442695
        %v1990 = vpow.pop %v1989
        %v1991 = vmul.f32 %v1865, 1.442695
        %v1992 = vpow.pop %v1991
        %v1993 = vmul.f32 %v1866, 1.442695
        %v1994 = vpow.pop %v1993
        %v1995 = vmul.f32 %v1675, %v1868
        %v1996 = vmul.f32 %v1676, %v1870
        %v1997 = vmul.f32 %v1677, %v1872
        %v1998 = vmul.f32 %v1678, %v1874
        %v1999 = vmul.f32 %v1679, %v1876
        %v2000 = vmul.f32 %v1680, %v1878
        %v2001 = vmul.f32 %v1681, %v1880
        %v2002 = vmul.f32 %v1682, %v1882
        %v2003 = vmul.f32 %v1683, %v1884
        %v2004 = vmul.f32 %v1684, %v1886
        %v2005 = vmul.f32 %v1685, %v1888
        %v2006 = vmul.f32 %v1686, %v1890
        %v2007 = vmul.f32 %v1687, %v1892
        %v2008 = vmul.f32 %v1688, %v1894
        %v2009 = vmul.f32 %v1689, %v1896
        %v2010 = vmul.f32 %v1690, %v1898
        %v2011 = vmul.f32 %v1691, %v1900
        %v2012 = vmul.f32 %v1692, %v1902
        %v2013 = vmul.f32 %v1693, %v1904
        %v2014 = vmul.f32 %v1694, %v1906
        %v2015 = vmul.f32 %v1695, %v1908
        %v2016 = vmul.f32 %v1696, %v1910
        %v2017 = vmul.f32 %v1697, %v1912
        %v2018 = vmul.f32 %v1698, %v1914
        %v2019 = vmul.f32 %v1699, %v1916
        %v2020 = vmul.f32 %v1700, %v1918
        %v2021 = vmul.f32 %v1701, %v1920
        %v2022 = vmul.f32 %v1702, %v1922
        %v2023 = vmul.f32 %v1703, %v1924
        %v2024 = vmul.f32 %v1704, %v1926
        %v2025 = vmul.f32 %v1705, %v1928
        %v2026 = vmul.f32 %v1706, %v1930
        %v2027 = vmul.f32 %v1707, %v1932
        %v2028 = vmul.f32 %v1708, %v1934
        %v2029 = vmul.f32 %v1709, %v1936
        %v2030 = vmul.f32 %v1710, %v1938
        %v2031 = vmul.f32 %v1711, %v1940
        %v2032 = vmul.f32 %v1712, %v1942
        %v2033 = vmul.f32 %v1713, %v1944
        %v2034 = vmul.f32 %v1714, %v1946
        %v2035 = vmul.f32 %v1715, %v1948
        %v2036 = vmul.f32 %v1716, %v1950
        %v2037 = vmul.f32 %v1717, %v1952
        %v2038 = vmul.f32 %v1718, %v1954
        %v2039 = vmul.f32 %v1719, %v1956
        %v2040 = vmul.f32 %v1720, %v1958
        %v2041 = vmul.f32 %v1721, %v1960
        %v2042 = vmul.f32 %v1722, %v1962
        %v2043 = vmul.f32 %v1723, %v1964
        %v2044 = vmul.f32 %v1724, %v1966
        %v2045 = vmul.f32 %v1725, %v1968
        %v2046 = vmul.f32 %v1726, %v1970
        %v2047 = vmul.f32 %v1727, %v1972
        %v2048 = vmul.f32 %v1728, %v1974
        %v2049 = vmul.f32 %v1729, %v1976
        %v2050 = vmul.f32 %v1730, %v1978
        %v2051 = vmul.f32 %v1731, %v1980
        %v2052 = vmul.f32 %v1732, %v1982
        %v2053 = vmul.f32 %v1733, %v1984
        %v2054 = vmul.f32 %v1734, %v1986
        %v2055 = vmul.f32 %v1735, %v1988
        %v2056 = vmul.f32 %v1736, %v1990
        %v2057 = vmul.f32 %v1737, %v1992
        %v2058 = vmul.f32 %v1738, %v1994
        %v2059 = vsub.f32 1.0, %v1995
        %v2060 = vsub.f32 1.0, %v1996
        %v2061 = vsub.f32 1.0, %v1997
        %v2062 = vsub.f32 1.0, %v1998
        %v2063 = vsub.f32 1.0, %v1999
        %v2064 = vsub.f32 1.0, %v2000
        %v2065 = vsub.f32 1.0, %v2001
        %v2066 = vsub.f32 1.0, %v2002
        %v2067 = vsub.f32 1.0, %v2003
        %v2068 = vsub.f32 1.0, %v2004
        %v2069 = vsub.f32 1.0, %v2005
        %v2070 = vsub.f32 1.0, %v2006
        %v2071 = vsub.f32 1.0, %v2007
        %v2072 = vsub.f32 1.0, %v2008
        %v2073 = vsub.f32 1.0, %v2009
        %v2074 = vsub.f32 1.0, %v2010
        %v2075 = vsub.f32 1.0, %v2011
        %v2076 = vsub.f32 1.0, %v2012
        %v2077 = vsub.f32 1.0, %v2013
        %v2078 = vsub.f32 1.0, %v2014
        %v2079 = vsub.f32 1.0, %v2015
        %v2080 = vsub.f32 1.0, %v2016
        %v2081 = vsub.f32 1.0, %v2017
        %v2082 = vsub.f32 1.0, %v2018
        %v2083 = vsub.f32 1.0, %v2019
        %v2084 = vsub.f32 1.0, %v2020
        %v2085 = vsub.f32 1.0, %v2021
        %v2086 = vsub.f32 1.0, %v2022
        %v2087 = vsub.f32 1.0, %v2023
        %v2088 = vsub.f32 1.0, %v2024
        %v2089 = vsub.f32 1.0, %v2025
        %v2090 = vsub.f32 1.0, %v2026
        %v2091 = vsub.f32 1.0, %v2027
        %v2092 = vsub.f32 1.0, %v2028
        %v2093 = vsub.f32 1.0, %v2029
        %v2094 = vsub.f32 1.0, %v2030
        %v2095 = vsub.f32 1.0, %v2031
        %v2096 = vsub.f32 1.0, %v2032
        %v2097 = vsub.f32 1.0, %v2033
        %v2098 = vsub.f32 1.0, %v2034
        %v2099 = vsub.f32 1.0, %v2035
        %v2100 = vsub.f32 1.0, %v2036
        %v2101 = vsub.f32 1.0, %v2037
        %v2102 = vsub.f32 1.0, %v2038
        %v2103 = vsub.f32 1.0, %v2039
        %v2104 = vsub.f32 1.0, %v2040
        %v2105 = vsub.f32 1.0, %v2041
        %v2106 = vsub.f32 1.0, %v2042
        %v2107 = vsub.f32 1.0, %v2043
        %v2108 = vsub.f32 1.0, %v2044
        %v2109 = vsub.f32 1.0, %v2045
        %v2110 = vsub.f32 1.0, %v2046
        %v2111 = vsub.f32 1.0, %v2047
        %v2112 = vsub.f32 1.0, %v2048
        %v2113 = vsub.f32 1.0, %v2049
        %v2114 = vsub.f32 1.0, %v2050
        %v2115 = vsub.f32 1.0, %v2051
        %v2116 = vsub.f32 1.0, %v2052
        %v2117 = vsub.f32 1.0, %v2053
        %v2118 = vsub.f32 1.0, %v2054
        %v2119 = vsub.f32 1.0, %v2055
        %v2120 = vsub.f32 1.0, %v2056
        %v2121 = vsub.f32 1.0, %v2057
        %v2122 = vsub.f32 1.0, %v2058
        %vm2123 = vcmp.ge.f32.partialorder %v843, 0.0
        %vm2124 = vcmp.ge.f32.partialorder %v844, 0.0
        %vm2125 = vcmp.ge.f32.partialorder %v845, 0.0
        %vm2126 = vcmp.ge.f32.partialorder %v846, 0.0
        %vm2127 = vcmp.ge.f32.partialorder %v847, 0.0
        %vm2128 = vcmp.ge.f32.partialorder %v848, 0.0
        %vm2129 = vcmp.ge.f32.partialorder %v849, 0.0
        %vm2130 = vcmp.ge.f32.partialorder %v850, 0.0
        %vm2131 = vcmp.ge.f32.partialorder %v851, 0.0
        %vm2132 = vcmp.ge.f32.partialorder %v852, 0.0
        %vm2133 = vcmp.ge.f32.partialorder %v853, 0.0
        %vm2134 = vcmp.ge.f32.partialorder %v854, 0.0
        %vm2135 = vcmp.ge.f32.partialorder %v855, 0.0
        %vm2136 = vcmp.ge.f32.partialorder %v856, 0.0
        %vm2137 = vcmp.ge.f32.partialorder %v857, 0.0
        %vm2138 = vcmp.ge.f32.partialorder %v858, 0.0
        %vm2139 = vcmp.ge.f32.partialorder %v859, 0.0
        %vm2140 = vcmp.ge.f32.partialorder %v860, 0.0
        %vm2141 = vcmp.ge.f32.partialorder %v861, 0.0
        %vm2142 = vcmp.ge.f32.partialorder %v862, 0.0
        %vm2143 = vcmp.ge.f32.partialorder %v863, 0.0
        %vm2144 = vcmp.ge.f32.partialorder %v864, 0.0
        %vm2145 = vcmp.ge.f32.partialorder %v865, 0.0
        %vm2146 = vcmp.ge.f32.partialorder %v866, 0.0
        %vm2147 = vcmp.ge.f32.partialorder %v867, 0.0
        %vm2148 = vcmp.ge.f32.partialorder %v868, 0.0
        %vm2149 = vcmp.ge.f32.partialorder %v869, 0.0
        %vm2150 = vcmp.ge.f32.partialorder %v870, 0.0
        %vm2151 = vcmp.ge.f32.partialorder %v871, 0.0
        %vm2152 = vcmp.ge.f32.partialorder %v872, 0.0
        %vm2153 = vcmp.ge.f32.partialorder %v873, 0.0
        %vm2154 = vcmp.ge.f32.partialorder %v874, 0.0
        %vm2155 = vcmp.ge.f32.partialorder %v875, 0.0
        %vm2156 = vcmp.ge.f32.partialorder %v876, 0.0
        %vm2157 = vcmp.ge.f32.partialorder %v877, 0.0
        %vm2158 = vcmp.ge.f32.partialorder %v878, 0.0
        %vm2159 = vcmp.ge.f32.partialorder %v879, 0.0
        %vm2160 = vcmp.ge.f32.partialorder %v880, 0.0
        %vm2161 = vcmp.ge.f32.partialorder %v881, 0.0
        %vm2162 = vcmp.ge.f32.partialorder %v882, 0.0
        %vm2163 = vcmp.ge.f32.partialorder %v883, 0.0
        %vm2164 = vcmp.ge.f32.partialorder %v884, 0.0
        %vm2165 = vcmp.ge.f32.partialorder %v885, 0.0
        %vm2166 = vcmp.ge.f32.partialorder %v886, 0.0
        %vm2167 = vcmp.ge.f32.partialorder %v887, 0.0
        %vm2168 = vcmp.ge.f32.partialorder %v888, 0.0
        %vm2169 = vcmp.ge.f32.partialorder %v889, 0.0
        %vm2170 = vcmp.ge.f32.partialorder %v890, 0.0
        %vm2171 = vcmp.ge.f32.partialorder %v891, 0.0
        %vm2172 = vcmp.ge.f32.partialorder %v892, 0.0
        %vm2173 = vcmp.ge.f32.partialorder %v893, 0.0
        %vm2174 = vcmp.ge.f32.partialorder %v894, 0.0
        %vm2175 = vcmp.ge.f32.partialorder %v895, 0.0
        %vm2176 = vcmp.ge.f32.partialorder %v896, 0.0
        %vm2177 = vcmp.ge.f32.partialorder %v897, 0.0
        %vm2178 = vcmp.ge.f32.partialorder %v898, 0.0
        %vm2179 = vcmp.ge.f32.partialorder %v899, 0.0
        %vm2180 = vcmp.ge.f32.partialorder %v900, 0.0
        %vm2181 = vcmp.ge.f32.partialorder %v901, 0.0
        %vm2182 = vcmp.ge.f32.partialorder %v902, 0.0
        %vm2183 = vcmp.ge.f32.partialorder %v903, 0.0
        %vm2184 = vcmp.ge.f32.partialorder %v904, 0.0
        %vm2185 = vcmp.ge.f32.partialorder %v905, 0.0
        %vm2186 = vcmp.ge.f32.partialorder %v906, 0.0
        %v2187 = vsub.f32 0.0, %v2059
        %v2188 = vsub.f32 0.0, %v2060
        %v2189 = vsub.f32 0.0, %v2061
        %v2190 = vsub.f32 0.0, %v2062
        %v2191 = vsub.f32 0.0, %v2063
        %v2192 = vsub.f32 0.0, %v2064
        %v2193 = vsub.f32 0.0, %v2065
        %v2194 = vsub.f32 0.0, %v2066
        %v2195 = vsub.f32 0.0, %v2067
        %v2196 = vsub.f32 0.0, %v2068
        %v2197 = vsub.f32 0.0, %v2069
        %v2198 = vsub.f32 0.0, %v2070
        %v2199 = vsub.f32 0.0, %v2071
        %v2200 = vsub.f32 0.0, %v2072
        %v2201 = vsub.f32 0.0, %v2073
        %v2202 = vsub.f32 0.0, %v2074
        %v2203 = vsub.f32 0.0, %v2075
        %v2204 = vsub.f32 0.0, %v2076
        %v2205 = vsub.f32 0.0, %v2077
        %v2206 = vsub.f32 0.0, %v2078
        %v2207 = vsub.f32 0.0, %v2079
        %v2208 = vsub.f32 0.0, %v2080
        %v2209 = vsub.f32 0.0, %v2081
        %v2210 = vsub.f32 0.0, %v2082
        %v2211 = vsub.f32 0.0, %v2083
        %v2212 = vsub.f32 0.0, %v2084
        %v2213 = vsub.f32 0.0, %v2085
        %v2214 = vsub.f32 0.0, %v2086
        %v2215 = vsub.f32 0.0, %v2087
        %v2216 = vsub.f32 0.0, %v2088
        %v2217 = vsub.f32 0.0, %v2089
        %v2218 = vsub.f32 0.0, %v2090
        %v2219 = vsub.f32 0.0, %v2091
        %v2220 = vsub.f32 0.0, %v2092
        %v2221 = vsub.f32 0.0, %v2093
        %v2222 = vsub.f32 0.0, %v2094
        %v2223 = vsub.f32 0.0, %v2095
        %v2224 = vsub.f32 0.0, %v2096
        %v2225 = vsub.f32 0.0, %v2097
        %v2226 = vsub.f32 0.0, %v2098
        %v2227 = vsub.f32 0.0, %v2099
        %v2228 = vsub.f32 0.0, %v2100
        %v2229 = vsub.f32 0.0, %v2101
        %v2230 = vsub.f32 0.0, %v2102
        %v2231 = vsub.f32 0.0, %v2103
        %v2232 = vsub.f32 0.0, %v2104
        %v2233 = vsub.f32 0.0, %v2105
        %v2234 = vsub.f32 0.0, %v2106
        %v2235 = vsub.f32 0.0, %v2107
        %v2236 = vsub.f32 0.0, %v2108
        %v2237 = vsub.f32 0.0, %v2109
        %v2238 = vsub.f32 0.0, %v2110
        %v2239 = vsub.f32 0.0, %v2111
        %v2240 = vsub.f32 0.0, %v2112
        %v2241 = vsub.f32 0.0, %v2113
        %v2242 = vsub.f32 0.0, %v2114
        %v2243 = vsub.f32 0.0, %v2115
        %v2244 = vsub.f32 0.0, %v2116
        %v2245 = vsub.f32 0.0, %v2117
        %v2246 = vsub.f32 0.0, %v2118
        %v2247 = vsub.f32 0.0, %v2119
        %v2248 = vsub.f32 0.0, %v2120
        %v2249 = vsub.f32 0.0, %v2121
        %v2250 = vsub.f32 0.0, %v2122
        %v2251 = vsel %vm2123, %v2059, %v2187
        %v2252 = vsel %vm2124, %v2060, %v2188
        %v2253 = vsel %vm2125, %v2061, %v2189
        %v2254 = vsel %vm2126, %v2062, %v2190
        %v2255 = vsel %vm2127, %v2063, %v2191
        %v2256 = vsel %vm2128, %v2064, %v2192
        %v2257 = vsel %vm2129, %v2065, %v2193
        %v2258 = vsel %vm2130, %v2066, %v2194
        %v2259 = vsel %vm2131, %v2067, %v2195
        %v2260 = vsel %vm2132, %v2068, %v2196
        %v2261 = vsel %vm2133, %v2069, %v2197
        %v2262 = vsel %vm2134, %v2070, %v2198
        %v2263 = vsel %vm2135, %v2071, %v2199
        %v2264 = vsel %vm2136, %v2072, %v2200
        %v2265 = vsel %vm2137, %v2073, %v2201
        %v2266 = vsel %vm2138, %v2074, %v2202
        %v2267 = vsel %vm2139, %v2075, %v2203
        %v2268 = vsel %vm2140, %v2076, %v2204
        %v2269 = vsel %vm2141, %v2077, %v2205
        %v2270 = vsel %vm2142, %v2078, %v2206
        %v2271 = vsel %vm2143, %v2079, %v2207
        %v2272 = vsel %vm2144, %v2080, %v2208
        %v2273 = vsel %vm2145, %v2081, %v2209
        %v2274 = vsel %vm2146, %v2082, %v2210
        %v2275 = vsel %vm2147, %v2083, %v2211
        %v2276 = vsel %vm2148, %v2084, %v2212
        %v2277 = vsel %vm2149, %v2085, %v2213
        %v2278 = vsel %vm2150, %v2086, %v2214
        %v2279 = vsel %vm2151, %v2087, %v2215
        %v2280 = vsel %vm2152, %v2088, %v2216
        %v2281 = vsel %vm2153, %v2089, %v2217
        %v2282 = vsel %vm2154, %v2090, %v2218
        %v2283 = vsel %vm2155, %v2091, %v2219
        %v2284 = vsel %vm2156, %v2092, %v2220
        %v2285 = vsel %vm2157, %v2093, %v2221
        %v2286 = vsel %vm2158, %v2094, %v2222
        %v2287 = vsel %vm2159, %v2095, %v2223
        %v2288 = vsel %vm2160, %v2096, %v2224
        %v2289 = vsel %vm2161, %v2097, %v2225
        %v2290 = vsel %vm2162, %v2098, %v2226
        %v2291 = vsel %vm2163, %v2099, %v2227
        %v2292 = vsel %vm2164, %v2100, %v2228
        %v2293 = vsel %vm2165, %v2101, %v2229
        %v2294 = vsel %vm2166, %v2102, %v2230
        %v2295 = vsel %vm2167, %v2103, %v2231
        %v2296 = vsel %vm2168, %v2104, %v2232
        %v2297 = vsel %vm2169, %v2105, %v2233
        %v2298 = vsel %vm2170, %v2106, %v2234
        %v2299 = vsel %vm2171, %v2107, %v2235
        %v2300 = vsel %vm2172, %v2108, %v2236
        %v2301 = vsel %vm2173, %v2109, %v2237
        %v2302 = vsel %vm2174, %v2110, %v2238
        %v2303 = vsel %vm2175, %v2111, %v2239
        %v2304 = vsel %vm2176, %v2112, %v2240
        %v2305 = vsel %vm2177, %v2113, %v2241
        %v2306 = vsel %vm2178, %v2114, %v2242
        %v2307 = vsel %vm2179, %v2115, %v2243
        %v2308 = vsel %vm2180, %v2116, %v2244
        %v2309 = vsel %vm2181, %v2117, %v2245
        %v2310 = vsel %vm2182, %v2118, %v2246
        %v2311 = vsel %vm2183, %v2119, %v2247
        %v2312 = vsel %vm2184, %v2120, %v2248
        %v2313 = vsel %vm2185, %v2121, %v2249
        %v2314 = vsel %vm2186, %v2122, %v2250
        %v2315 = vadd.f32 %v2251, 1.0
        %v2316 = vadd.f32 %v2252, 1.0
        %v2317 = vadd.f32 %v2253, 1.0
        %v2318 = vadd.f32 %v2254, 1.0
        %v2319 = vadd.f32 %v2255, 1.0
        %v2320 = vadd.f32 %v2256, 1.0
        %v2321 = vadd.f32 %v2257, 1.0
        %v2322 = vadd.f32 %v2258, 1.0
        %v2323 = vadd.f32 %v2259, 1.0
        %v2324 = vadd.f32 %v2260, 1.0
        %v2325 = vadd.f32 %v2261, 1.0
        %v2326 = vadd.f32 %v2262, 1.0
        %v2327 = vadd.f32 %v2263, 1.0
        %v2328 = vadd.f32 %v2264, 1.0
        %v2329 = vadd.f32 %v2265, 1.0
        %v2330 = vadd.f32 %v2266, 1.0
        %v2331 = vadd.f32 %v2267, 1.0
        %v2332 = vadd.f32 %v2268, 1.0
        %v2333 = vadd.f32 %v2269, 1.0
        %v2334 = vadd.f32 %v2270, 1.0
        %v2335 = vadd.f32 %v2271, 1.0
        %v2336 = vadd.f32 %v2272, 1.0
        %v2337 = vadd.f32 %v2273, 1.0
        %v2338 = vadd.f32 %v2274, 1.0
        %v2339 = vadd.f32 %v2275, 1.0
        %v2340 = vadd.f32 %v2276, 1.0
        %v2341 = vadd.f32 %v2277, 1.0
        %v2342 = vadd.f32 %v2278, 1.0
        %v2343 = vadd.f32 %v2279, 1.0
        %v2344 = vadd.f32 %v2280, 1.0
        %v2345 = vadd.f32 %v2281, 1.0
        %v2346 = vadd.f32 %v2282, 1.0
        %v2347 = vadd.f32 %v2283, 1.0
        %v2348 = vadd.f32 %v2284, 1.0
        %v2349 = vadd.f32 %v2285, 1.0
        %v2350 = vadd.f32 %v2286, 1.0
        %v2351 = vadd.f32 %v2287, 1.0
        %v2352 = vadd.f32 %v2288, 1.0
        %v2353 = vadd.f32 %v2289, 1.0
        %v2354 = vadd.f32 %v2290, 1.0
        %v2355 = vadd.f32 %v2291, 1.0
        %v2356 = vadd.f32 %v2292, 1.0
        %v2357 = vadd.f32 %v2293, 1.0
        %v2358 = vadd.f32 %v2294, 1.0
        %v2359 = vadd.f32 %v2295, 1.0
        %v2360 = vadd.f32 %v2296, 1.0
        %v2361 = vadd.f32 %v2297, 1.0
        %v2362 = vadd.f32 %v2298, 1.0
        %v2363 = vadd.f32 %v2299, 1.0
        %v2364 = vadd.f32 %v2300, 1.0
        %v2365 = vadd.f32 %v2301, 1.0
        %v2366 = vadd.f32 %v2302, 1.0
        %v2367 = vadd.f32 %v2303, 1.0
        %v2368 = vadd.f32 %v2304, 1.0
        %v2369 = vadd.f32 %v2305, 1.0
        %v2370 = vadd.f32 %v2306, 1.0
        %v2371 = vadd.f32 %v2307, 1.0
        %v2372 = vadd.f32 %v2308, 1.0
        %v2373 = vadd.f32 %v2309, 1.0
        %v2374 = vadd.f32 %v2310, 1.0
        %v2375 = vadd.f32 %v2311, 1.0
        %v2376 = vadd.f32 %v2312, 1.0
        %v2377 = vadd.f32 %v2313, 1.0
        %v2378 = vadd.f32 %v2314, 1.0
        %v2379 = vmul.f32 %v779, %v2315
        %v2380 = vmul.f32 %v780, %v2316
        %v2381 = vmul.f32 %v781, %v2317
        %v2382 = vmul.f32 %v782, %v2318
        %v2383 = vmul.f32 %v783, %v2319
        %v2384 = vmul.f32 %v784, %v2320
        %v2385 = vmul.f32 %v785, %v2321
        %v2386 = vmul.f32 %v786, %v2322
        %v2387 = vmul.f32 %v787, %v2323
        %v2388 = vmul.f32 %v788, %v2324
        %v2389 = vmul.f32 %v789, %v2325
        %v2390 = vmul.f32 %v790, %v2326
        %v2391 = vmul.f32 %v791, %v2327
        %v2392 = vmul.f32 %v792, %v2328
        %v2393 = vmul.f32 %v793, %v2329
        %v2394 = vmul.f32 %v794, %v2330
        %v2395 = vmul.f32 %v795, %v2331
        %v2396 = vmul.f32 %v796, %v2332
        %v2397 = vmul.f32 %v797, %v2333
        %v2398 = vmul.f32 %v798, %v2334
        %v2399 = vmul.f32 %v799, %v2335
        %v2400 = vmul.f32 %v800, %v2336
        %v2401 = vmul.f32 %v801, %v2337
        %v2402 = vmul.f32 %v802, %v2338
        %v2403 = vmul.f32 %v803, %v2339
        %v2404 = vmul.f32 %v804, %v2340
        %v2405 = vmul.f32 %v805, %v2341
        %v2406 = vmul.f32 %v806, %v2342
        %v2407 = vmul.f32 %v807, %v2343
        %v2408 = vmul.f32 %v808, %v2344
        %v2409 = vmul.f32 %v809, %v2345
        %v2410 = vmul.f32 %v810, %v2346
        %v2411 = vmul.f32 %v811, %v2347
        %v2412 = vmul.f32 %v812, %v2348
        %v2413 = vmul.f32 %v813, %v2349
        %v2414 = vmul.f32 %v814, %v2350
        %v2415 = vmul.f32 %v815, %v2351
        %v2416 = vmul.f32 %v816, %v2352
        %v2417 = vmul.f32 %v817, %v2353
        %v2418 = vmul.f32 %v818, %v2354
        %v2419 = vmul.f32 %v819, %v2355
        %v2420 = vmul.f32 %v820, %v2356
        %v2421 = vmul.f32 %v821, %v2357
        %v2422 = vmul.f32 %v822, %v2358
        %v2423 = vmul.f32 %v823, %v2359
        %v2424 = vmul.f32 %v824, %v2360
        %v2425 = vmul.f32 %v825, %v2361
        %v2426 = vmul.f32 %v826, %v2362
        %v2427 = vmul.f32 %v827, %v2363
        %v2428 = vmul.f32 %v828, %v2364
        %v2429 = vmul.f32 %v829, %v2365
        %v2430 = vmul.f32 %v830, %v2366
        %v2431 = vmul.f32 %v831, %v2367
        %v2432 = vmul.f32 %v832, %v2368
        %v2433 = vmul.f32 %v833, %v2369
        %v2434 = vmul.f32 %v834, %v2370
        %v2435 = vmul.f32 %v835, %v2371
        %v2436 = vmul.f32 %v836, %v2372
        %v2437 = vmul.f32 %v837, %v2373
        %v2438 = vmul.f32 %v838, %v2374
        %v2439 = vmul.f32 %v839, %v2375
        %v2440 = vmul.f32 %v840, %v2376
        %v2441 = vmul.f32 %v841, %v2377
        %v2442 = vmul.f32 %v842, %v2378
        %v2443 = vpack.c.bf16 %v2383, %v2379
        %v2444 = vpack.c.bf16 %v2384, %v2380
        %v2445 = vpack.c.bf16 %v2385, %v2381
        %v2446 = vpack.c.bf16 %v2386, %v2382
        %v2447 = vpack.c.bf16 %v2391, %v2387
        %v2448 = vpack.c.bf16 %v2392, %v2388
        %v2449 = vpack.c.bf16 %v2393, %v2389
        %v2450 = vpack.c.bf16 %v2394, %v2390
        %v2451 = vpack.c.bf16 %v2399, %v2395
        %v2452 = vpack.c.bf16 %v2400, %v2396
        %v2453 = vpack.c.bf16 %v2401, %v2397
        %v2454 = vpack.c.bf16 %v2402, %v2398
        %v2455 = vpack.c.bf16 %v2407, %v2403
        %v2456 = vpack.c.bf16 %v2408, %v2404
        %v2457 = vpack.c.bf16 %v2409, %v2405
        %v2458 = vpack.c.bf16 %v2410, %v2406
        %v2459 = vpack.c.bf16 %v2415, %v2411
        %v2460 = vpack.c.bf16 %v2416, %v2412
        %v2461 = vpack.c.bf16 %v2417, %v2413
        %v2462 = vpack.c.bf16 %v2418, %v2414
        %v2463 = vpack.c.bf16 %v2423, %v2419
        %v2464 = vpack.c.bf16 %v2424, %v2420
        %v2465 = vpack.c.bf16 %v2425, %v2421
        %v2466 = vpack.c.bf16 %v2426, %v2422
        %v2467 = vpack.c.bf16 %v2431, %v2427
        %v2468 = vpack.c.bf16 %v2432, %v2428
        %v2469 = vpack.c.bf16 %v2433, %v2429
        %v2470 = vpack.c.bf16 %v2434, %v2430
        %v2471 = vpack.c.bf16 %v2439, %v2435
        %v2472 = vpack.c.bf16 %v2440, %v2436
        %v2473 = vpack.c.bf16 %v2441, %v2437
        %v2474 = vpack.c.bf16 %v2442, %v2438
        %v2475 = vld [vmem:[#allocation7] sm:$0xf]
        %v2476 = vld [vmem:[#allocation7 + $0x4] sm:$0xf]
        %v2477 = vld [vmem:[#allocation7 + $0x8] sm:$0xf]
        %v2478 = vld [vmem:[#allocation7 + $0xc] sm:$0xf]
        %v2479 = vld [vmem:[#allocation7 + $0x10] sm:$0xf]
        %v2480 = vld [vmem:[#allocation7 + $0x14] sm:$0xf]
        %v2481 = vld [vmem:[#allocation7 + $0x18] sm:$0xf]
        %v2482 = vld [vmem:[#allocation7 + $0x1c] sm:$0xf]
        %v2483 = vld [vmem:[#allocation7 + $0x20] sm:$0xf]
        %v2484 = vld [vmem:[#allocation7 + $0x24] sm:$0xf]
        %v2485 = vld [vmem:[#allocation7 + $0x28] sm:$0xf]
        %v2486 = vld [vmem:[#allocation7 + $0x2c] sm:$0xf]
        %v2487 = vld [vmem:[#allocation7 + $0x30] sm:$0xf]
        %v2488 = vld [vmem:[#allocation7 + $0x34] sm:$0xf]
        %v2489 = vld [vmem:[#allocation7 + $0x38] sm:$0xf]
        %v2490 = vld [vmem:[#allocation7 + $0x3c] sm:$0xf]
        %v2491 = vld [vmem:[#allocation7 + $0x40] sm:$0xf]
        %v2492 = vld [vmem:[#allocation7 + $0x44] sm:$0xf]
        %v2493 = vld [vmem:[#allocation7 + $0x48] sm:$0xf]
        %v2494 = vld [vmem:[#allocation7 + $0x4c] sm:$0xf]
        %v2495 = vld [vmem:[#allocation7 + $0x50] sm:$0xf]
        %v2496 = vld [vmem:[#allocation7 + $0x54] sm:$0xf]
        %v2497 = vld [vmem:[#allocation7 + $0x58] sm:$0xf]
        %v2498 = vld [vmem:[#allocation7 + $0x5c] sm:$0xf]
        %v2499 = vld [vmem:[#allocation7 + $0x60] sm:$0xf]
        %v2500 = vld [vmem:[#allocation7 + $0x64] sm:$0xf]
        %v2501 = vld [vmem:[#allocation7 + $0x68] sm:$0xf]
        %v2502 = vld [vmem:[#allocation7 + $0x6c] sm:$0xf]
        %v2503 = vld [vmem:[#allocation7 + $0x70] sm:$0xf]
        %v2504 = vld [vmem:[#allocation7 + $0x74] sm:$0xf]
        %v2505 = vld [vmem:[#allocation7 + $0x78] sm:$0xf]
        %v2506 = vld [vmem:[#allocation7 + $0x7c] sm:$0xf]
        %v2507 = vld [vmem:[#allocation7 + $0x80] sm:$0xf]
        %v2508 = vld [vmem:[#allocation7 + $0x84] sm:$0xf]
        %v2509 = vld [vmem:[#allocation7 + $0x88] sm:$0xf]
        %v2510 = vld [vmem:[#allocation7 + $0x8c] sm:$0xf]
        %v2511 = vld [vmem:[#allocation7 + $0x90] sm:$0xf]
        %v2512 = vld [vmem:[#allocation7 + $0x94] sm:$0xf]
        %v2513 = vld [vmem:[#allocation7 + $0x98] sm:$0xf]
        %v2514 = vld [vmem:[#allocation7 + $0x9c] sm:$0xf]
        %v2515 = vld [vmem:[#allocation7 + $0xa0] sm:$0xf]
        %v2516 = vld [vmem:[#allocation7 + $0xa4] sm:$0xf]
        %v2517 = vld [vmem:[#allocation7 + $0xa8] sm:$0xf]
        %v2518 = vld [vmem:[#allocation7 + $0xac] sm:$0xf]
        %v2519 = vld [vmem:[#allocation7 + $0xb0] sm:$0xf]
        %v2520 = vld [vmem:[#allocation7 + $0xb4] sm:$0xf]
        %v2521 = vld [vmem:[#allocation7 + $0xb8] sm:$0xf]
        %v2522 = vld [vmem:[#allocation7 + $0xbc] sm:$0xf]
        %v2523 = vld [vmem:[#allocation7 + $0xc0] sm:$0xf]
        %v2524 = vld [vmem:[#allocation7 + $0xc4] sm:$0xf]
        %v2525 = vld [vmem:[#allocation7 + $0xc8] sm:$0xf]
        %v2526 = vld [vmem:[#allocation7 + $0xcc] sm:$0xf]
        %v2527 = vld [vmem:[#allocation7 + $0xd0] sm:$0xf]
        %v2528 = vld [vmem:[#allocation7 + $0xd4] sm:$0xf]
        %v2529 = vld [vmem:[#allocation7 + $0xd8] sm:$0xf]
        %v2530 = vld [vmem:[#allocation7 + $0xdc] sm:$0xf]
        %v2531 = vld [vmem:[#allocation7 + $0xe0] sm:$0xf]
        %v2532 = vld [vmem:[#allocation7 + $0xe4] sm:$0xf]
        %v2533 = vld [vmem:[#allocation7 + $0xe8] sm:$0xf]
        %v2534 = vld [vmem:[#allocation7 + $0xec] sm:$0xf]
        %v2535 = vld [vmem:[#allocation7 + $0xf0] sm:$0xf]
        %v2536 = vld [vmem:[#allocation7 + $0xf4] sm:$0xf]
        %v2537 = vld [vmem:[#allocation7 + $0xf8] sm:$0xf]
        %v2538 = vld [vmem:[#allocation7 + $0xfc] sm:$0xf]
        %v2539 = vld [vmem:[%s4] sm:$0x1]
        %v2541 = vlaneseq
        %v2542 = vshrl.u32 %v2541, 7
        %v2543 = vsub.s32 0, %v2542
        %v2544 = vrot.slane %v2539, %v2543
        %v2610 = vunpack.c.l.b16 %v2475
        %v2611 = vunpack.c.l.b16 %v2476
        %v2612 = vunpack.c.l.b16 %v2477
        %v2613 = vunpack.c.l.b16 %v2478
        %v2614 = vunpack.c.l.b16 %v2479
        %v2615 = vunpack.c.l.b16 %v2480
        %v2616 = vunpack.c.l.b16 %v2481
        %v2617 = vunpack.c.l.b16 %v2482
        %v2618 = vunpack.c.l.b16 %v2483
        %v2619 = vunpack.c.l.b16 %v2484
        %v2620 = vunpack.c.l.b16 %v2485
        %v2621 = vunpack.c.l.b16 %v2486
        %v2622 = vunpack.c.l.b16 %v2487
        %v2623 = vunpack.c.l.b16 %v2488
        %v2624 = vunpack.c.l.b16 %v2489
        %v2625 = vunpack.c.l.b16 %v2490
        %v2626 = vunpack.c.l.b16 %v2491
        %v2627 = vunpack.c.l.b16 %v2492
        %v2628 = vunpack.c.l.b16 %v2493
        %v2629 = vunpack.c.l.b16 %v2494
        %v2630 = vunpack.c.l.b16 %v2495
        %v2631 = vunpack.c.l.b16 %v2496
        %v2632 = vunpack.c.l.b16 %v2497
        %v2633 = vunpack.c.l.b16 %v2498
        %v2634 = vunpack.c.l.b16 %v2499
        %v2635 = vunpack.c.l.b16 %v2500
        %v2636 = vunpack.c.l.b16 %v2501
        %v2637 = vunpack.c.l.b16 %v2502
        %v2638 = vunpack.c.l.b16 %v2503
        %v2639 = vunpack.c.l.b16 %v2504
        %v2640 = vunpack.c.l.b16 %v2505
        %v2641 = vunpack.c.l.b16 %v2506
        %v2642 = vunpack.c.l.b16 %v2507
        %v2643 = vunpack.c.l.b16 %v2508
        %v2644 = vunpack.c.l.b16 %v2509
        %v2645 = vunpack.c.l.b16 %v2510
        %v2646 = vunpack.c.l.b16 %v2511
        %v2647 = vunpack.c.l.b16 %v2512
        %v2648 = vunpack.c.l.b16 %v2513
        %v2649 = vunpack.c.l.b16 %v2514
        %v2650 = vunpack.c.l.b16 %v2515
        %v2651 = vunpack.c.l.b16 %v2516
        %v2652 = vunpack.c.l.b16 %v2517
        %v2653 = vunpack.c.l.b16 %v2518
        %v2654 = vunpack.c.l.b16 %v2519
        %v2655 = vunpack.c.l.b16 %v2520
        %v2656 = vunpack.c.l.b16 %v2521
        %v2657 = vunpack.c.l.b16 %v2522
        %v2658 = vunpack.c.l.b16 %v2523
        %v2659 = vunpack.c.l.b16 %v2524
        %v2660 = vunpack.c.l.b16 %v2525
        %v2661 = vunpack.c.l.b16 %v2526
        %v2662 = vunpack.c.l.b16 %v2527
        %v2663 = vunpack.c.l.b16 %v2528
        %v2664 = vunpack.c.l.b16 %v2529
        %v2665 = vunpack.c.l.b16 %v2530
        %v2666 = vunpack.c.l.b16 %v2531
        %v2667 = vunpack.c.l.b16 %v2532
        %v2668 = vunpack.c.l.b16 %v2533
        %v2669 = vunpack.c.l.b16 %v2534
        %v2670 = vunpack.c.l.b16 %v2535
        %v2671 = vunpack.c.l.b16 %v2536
        %v2672 = vunpack.c.l.b16 %v2537
        %v2673 = vunpack.c.l.b16 %v2538
        %v2674 = vpack.c.b16 %v2611, %v2610
        %v2675 = vpack.c.b16 %v2613, %v2612
        %v2676 = vpack.c.b16 %v2615, %v2614
        %v2677 = vpack.c.b16 %v2617, %v2616
        %v2678 = vpack.c.b16 %v2619, %v2618
        %v2679 = vpack.c.b16 %v2621, %v2620
        %v2680 = vpack.c.b16 %v2623, %v2622
        %v2681 = vpack.c.b16 %v2625, %v2624
        %v2682 = vpack.c.b16 %v2627, %v2626
        %v2683 = vpack.c.b16 %v2629, %v2628
        %v2684 = vpack.c.b16 %v2631, %v2630
        %v2685 = vpack.c.b16 %v2633, %v2632
        %v2686 = vpack.c.b16 %v2635, %v2634
        %v2687 = vpack.c.b16 %v2637, %v2636
        %v2688 = vpack.c.b16 %v2639, %v2638
        %v2689 = vpack.c.b16 %v2641, %v2640
        %v2690 = vpack.c.b16 %v2643, %v2642
        %v2691 = vpack.c.b16 %v2645, %v2644
        %v2692 = vpack.c.b16 %v2647, %v2646
        %v2693 = vpack.c.b16 %v2649, %v2648
        %v2694 = vpack.c.b16 %v2651, %v2650
        %v2695 = vpack.c.b16 %v2653, %v2652
        %v2696 = vpack.c.b16 %v2655, %v2654
        %v2697 = vpack.c.b16 %v2657, %v2656
        %v2698 = vpack.c.b16 %v2659, %v2658
        %v2699 = vpack.c.b16 %v2661, %v2660
        %v2700 = vpack.c.b16 %v2663, %v2662
        %v2701 = vpack.c.b16 %v2665, %v2664
        %v2702 = vpack.c.b16 %v2667, %v2666
        %v2703 = vpack.c.b16 %v2669, %v2668
        %v2704 = vpack.c.b16 %v2671, %v2670
        %v2705 = vpack.c.b16 %v2673, %v2672
        %2738 = vmatprep.subr.bf16.mxu0 0
        %2739 = vmatpush1.bf16.msra.mxu0 %v2674
        %2740 = vmatprep.subr.bf16.mxu0 0
        %2741 = vmatpush1.bf16.msra.mxu0 %v2675
        %2742 = vmatprep.subr.bf16.mxu0 0
        %2743 = vmatpush1.bf16.msra.mxu0 %v2676
        %2744 = vmatprep.subr.bf16.mxu0 0
        %2745 = vmatpush1.bf16.msra.mxu0 %v2677
        %2746 = vmatprep.subr.bf16.mxu0 0
        %2747 = vmatpush1.bf16.msra.mxu0 %v2678
        %2748 = vmatprep.subr.bf16.mxu0 0
        %2749 = vmatpush1.bf16.msra.mxu0 %v2679
        %2750 = vmatprep.subr.bf16.mxu0 0
        %2751 = vmatpush1.bf16.msra.mxu0 %v2680
        %2752 = vmatprep.subr.bf16.mxu0 0
        %2753 = vmatpush1.bf16.msra.mxu0 %v2681
        %2754 = vmatprep.subr.bf16.mxu0 0
        %2755 = vmatpush1.bf16.msra.mxu0 %v2682
        %2756 = vmatprep.subr.bf16.mxu0 0
        %2757 = vmatpush1.bf16.msra.mxu0 %v2683
        %2758 = vmatprep.subr.bf16.mxu0 0
        %2759 = vmatpush1.bf16.msra.mxu0 %v2684
        %2760 = vmatprep.subr.bf16.mxu0 0
        %2761 = vmatpush1.bf16.msra.mxu0 %v2685
        %2762 = vmatprep.subr.bf16.mxu0 0
        %2763 = vmatpush1.bf16.msra.mxu0 %v2686
        %2764 = vmatprep.subr.bf16.mxu0 0
        %2765 = vmatpush1.bf16.msra.mxu0 %v2687
        %2766 = vmatprep.subr.bf16.mxu0 0
        %2767 = vmatpush1.bf16.msra.mxu0 %v2688
        %2768 = vmatprep.subr.bf16.mxu0 0
        %2769 = vmatpush1.bf16.msra.mxu0 %v2689
        %2770 = vmatprep.mubr.bf16.mxu0 %v2444
        %2771 = vmatmul.mubr.bf16.gmra.mrb[0].mxu0 %v2443
        %v2772 = vpop.f32.mrb[0].mxu0
        %v2773 = vadd.f32 %v2544, %v2772
        %v2774 = vpop.f32.mrb[0].mxu0
        %v2775 = vpop.f32.mrb[0].mxu0
        %v2776 = vadd.f32 %v2544, %v2775
        %v2777 = vpop.f32.mrb[0].mxu0
        %2778 = vmatprep.mubr.bf16.mxu0 %v2448
        %2779 = vmatmul.mubr.bf16.gmra.mrb[0].mxu0 %v2447
        %v2780 = vpop.f32.mrb[0].mxu0
        %v2781 = vadd.f32 %v2544, %v2780
        %v2782 = vpop.f32.mrb[0].mxu0
        %v2783 = vpop.f32.mrb[0].mxu0
        %v2784 = vadd.f32 %v2544, %v2783
        %v2785 = vpop.f32.mrb[0].mxu0
        %2786 = vmatprep.mubr.bf16.mxu0 %v2452
        %2787 = vmatmul.mubr.bf16.gmra.mrb[0].mxu0 %v2451
        %v2788 = vpop.f32.mrb[0].mxu0
        %v2789 = vadd.f32 %v2544, %v2788
        %v2790 = vpop.f32.mrb[0].mxu0
        %v2791 = vpop.f32.mrb[0].mxu0
        %v2792 = vadd.f32 %v2544, %v2791
        %v2793 = vpop.f32.mrb[0].mxu0
        %2794 = vmatprep.mubr.bf16.mxu0 %v2456
        %2795 = vmatmul.mubr.bf16.gmra.mrb[0].mxu0 %v2455
        %v2796 = vpop.f32.mrb[0].mxu0
        %v2797 = vadd.f32 %v2544, %v2796
        %v2798 = vpop.f32.mrb[0].mxu0
        %v2799 = vpop.f32.mrb[0].mxu0
        %v2800 = vadd.f32 %v2544, %v2799
        %v2801 = vpop.f32.mrb[0].mxu0
        %2802 = vmatprep.mubr.bf16.mxu0 %v2460
        %2803 = vmatmul.mubr.bf16.gmra.mrb[0].mxu0 %v2459
        %v2804 = vpop.f32.mrb[0].mxu0
        %v2805 = vadd.f32 %v2544, %v2804
        %v2806 = vpop.f32.mrb[0].mxu0
        %v2807 = vpop.f32.mrb[0].mxu0
        %v2808 = vadd.f32 %v2544, %v2807
        %v2809 = vpop.f32.mrb[0].mxu0
        %2810 = vmatprep.mubr.bf16.mxu0 %v2464
        %2811 = vmatmul.mubr.bf16.gmra.mrb[0].mxu0 %v2463
        %v2812 = vpop.f32.mrb[0].mxu0
        %v2813 = vadd.f32 %v2544, %v2812
        %v2814 = vpop.f32.mrb[0].mxu0
        %v2815 = vpop.f32.mrb[0].mxu0
        %v2816 = vadd.f32 %v2544, %v2815
        %v2817 = vpop.f32.mrb[0].mxu0
        %2818 = vmatprep.mubr.bf16.mxu0 %v2468
        %2819 = vmatmul.mubr.bf16.gmra.mrb[0].mxu0 %v2467
        %v2820 = vpop.f32.mrb[0].mxu0
        %v2821 = vadd.f32 %v2544, %v2820
        %v2822 = vpop.f32.mrb[0].mxu0
        %v2823 = vpop.f32.mrb[0].mxu0
        %v2824 = vadd.f32 %v2544, %v2823
        %v2825 = vpop.f32.mrb[0].mxu0
        %2826 = vmatprep.mubr.bf16.mxu0 %v2472
        %2827 = vmatmul.mubr.bf16.gmra.mrb[0].mxu0 %v2471
        %v2828 = vpop.f32.mrb[0].mxu0
        %v2829 = vadd.f32 %v2544, %v2828
        %v2830 = vpop.f32.mrb[0].mxu0
        %v2831 = vpop.f32.mrb[0].mxu0
        %v2832 = vadd.f32 %v2544, %v2831
        %v2833 = vpop.f32.mrb[0].mxu0
        %2834 = vdwg.mxu0
        %2835 = vmatprep.subr.bf16.mxu0 0
        %2836 = vmatpush1.bf16.msra.mxu0 %v2690
        %2837 = vmatprep.subr.bf16.mxu0 0
        %2838 = vmatpush1.bf16.msra.mxu0 %v2691
        %2839 = vmatprep.subr.bf16.mxu0 0
        %2840 = vmatpush1.bf16.msra.mxu0 %v2692
        %2841 = vmatprep.subr.bf16.mxu0 0
        %2842 = vmatpush1.bf16.msra.mxu0 %v2693
        %2843 = vmatprep.subr.bf16.mxu0 0
        %2844 = vmatpush1.bf16.msra.mxu0 %v2694
        %2845 = vmatprep.subr.bf16.mxu0 0
        %2846 = vmatpush1.bf16.msra.mxu0 %v2695
        %2847 = vmatprep.subr.bf16.mxu0 0
        %2848 = vmatpush1.bf16.msra.mxu0 %v2696
        %2849 = vmatprep.subr.bf16.mxu0 0
        %2850 = vmatpush1.bf16.msra.mxu0 %v2697
        %2851 = vmatprep.subr.bf16.mxu0 0
        %2852 = vmatpush1.bf16.msra.mxu0 %v2698
        %2853 = vmatprep.subr.bf16.mxu0 0
        %2854 = vmatpush1.bf16.msra.mxu0 %v2699
        %2855 = vmatprep.subr.bf16.mxu0 0
        %2856 = vmatpush1.bf16.msra.mxu0 %v2700
        %2857 = vmatprep.subr.bf16.mxu0 0
        %2858 = vmatpush1.bf16.msra.mxu0 %v2701
        %2859 = vmatprep.subr.bf16.mxu0 0
        %2860 = vmatpush1.bf16.msra.mxu0 %v2702
        %2861 = vmatprep.subr.bf16.mxu0 0
        %2862 = vmatpush1.bf16.msra.mxu0 %v2703
        %2863 = vmatprep.subr.bf16.mxu0 0
        %2864 = vmatpush1.bf16.msra.mxu0 %v2704
        %2865 = vmatprep.subr.bf16.mxu0 0
        %2866 = vmatpush1.bf16.msra.mxu0 %v2705
        %2867 = vmatprep.mubr.bf16.mxu0 %v2446
        %2868 = vmatmul.mubr.bf16.gmra.mrb[0].mxu0 %v2445
        %v2869 = vpop.f32.mrb[0].mxu0
        %v2870 = vadd.f32 %v2773, %v2869
        %v2871 = vpop.f32.mrb[0].mxu0
        %v2872 = vpop.f32.mrb[0].mxu0
        %v2873 = vadd.f32 %v2776, %v2872
        %v2874 = vpop.f32.mrb[0].mxu0
        %2875 = vmatprep.mubr.bf16.mxu0 %v2450
        %2876 = vmatmul.mubr.bf16.gmra.mrb[0].mxu0 %v2449
        %v2877 = vpop.f32.mrb[0].mxu0
        %v2878 = vadd.f32 %v2781, %v2877
        %v2879 = vpop.f32.mrb[0].mxu0
        %v2880 = vpop.f32.mrb[0].mxu0
        %v2881 = vadd.f32 %v2784, %v2880
        %v2882 = vpop.f32.mrb[0].mxu0
        %2883 = vmatprep.mubr.bf16.mxu0 %v2454
        %2884 = vmatmul.mubr.bf16.gmra.mrb[0].mxu0 %v2453
        %v2885 = vpop.f32.mrb[0].mxu0
        %v2886 = vadd.f32 %v2789, %v2885
        %v2887 = vpop.f32.mrb[0].mxu0
        %v2888 = vpop.f32.mrb[0].mxu0
        %v2889 = vadd.f32 %v2792, %v2888
        %v2890 = vpop.f32.mrb[0].mxu0
        %2891 = vmatprep.mubr.bf16.mxu0 %v2458
        %2892 = vmatmul.mubr.bf16.gmra.mrb[0].mxu0 %v2457
        %v2893 = vpop.f32.mrb[0].mxu0
        %v2894 = vadd.f32 %v2797, %v2893
        %v2895 = vpop.f32.mrb[0].mxu0
        %v2896 = vpop.f32.mrb[0].mxu0
        %v2897 = vadd.f32 %v2800, %v2896
        %v2898 = vpop.f32.mrb[0].mxu0
        %2899 = vmatprep.mubr.bf16.mxu0 %v2462
        %2900 = vmatmul.mubr.bf16.gmra.mrb[0].mxu0 %v2461
        %v2901 = vpop.f32.mrb[0].mxu0
        %v2902 = vadd.f32 %v2805, %v2901
        %v2903 = vpop.f32.mrb[0].mxu0
        %v2904 = vpop.f32.mrb[0].mxu0
        %v2905 = vadd.f32 %v2808, %v2904
        %v2906 = vpop.f32.mrb[0].mxu0
        %2907 = vmatprep.mubr.bf16.mxu0 %v2466
        %2908 = vmatmul.mubr.bf16.gmra.mrb[0].mxu0 %v2465
        %v2909 = vpop.f32.mrb[0].mxu0
        %v2910 = vadd.f32 %v2813, %v2909
        %v2911 = vpop.f32.mrb[0].mxu0
        %v2912 = vpop.f32.mrb[0].mxu0
        %v2913 = vadd.f32 %v2816, %v2912
        %v2914 = vpop.f32.mrb[0].mxu0
        %2915 = vmatprep.mubr.bf16.mxu0 %v2470
        %2916 = vmatmul.mubr.bf16.gmra.mrb[0].mxu0 %v2469
        %v2917 = vpop.f32.mrb[0].mxu0
        %v2918 = vadd.f32 %v2821, %v2917
        %v2919 = vpop.f32.mrb[0].mxu0
        %v2920 = vpop.f32.mrb[0].mxu0
        %v2921 = vadd.f32 %v2824, %v2920
        %v2922 = vpop.f32.mrb[0].mxu0
        %2923 = vmatprep.mubr.bf16.mxu0 %v2474
        %2924 = vmatmul.mubr.bf16.gmra.mrb[0].mxu0 %v2473
        %v2925 = vpop.f32.mrb[0].mxu0
        %v2926 = vadd.f32 %v2829, %v2925
        %v2927 = vpop.f32.mrb[0].mxu0
        %v2928 = vpop.f32.mrb[0].mxu0
        %v2929 = vadd.f32 %v2832, %v2928
        %v2930 = vpop.f32.mrb[0].mxu0
        %2931 = vdwg.mxu0
        %2932 = vst [vmem:[%s271] sm:$0xff] %v2870
        %2933 = vst [vmem:[%s271 + $0x8] sm:$0xff] %v2873
        %2934 = vst [vmem:[%s271 + $0x10] sm:$0xff] %v2878
        %2935 = vst [vmem:[%s271 + $0x18] sm:$0xff] %v2881
        %2936 = vst [vmem:[%s271 + $0x20] sm:$0xff] %v2886
        %2937 = vst [vmem:[%s271 + $0x28] sm:$0xff] %v2889
        %2938 = vst [vmem:[%s271 + $0x30] sm:$0xff] %v2894
        %2939 = vst [vmem:[%s271 + $0x38] sm:$0xff] %v2897
        %2940 = vst [vmem:[%s271 + $0x40] sm:$0xff] %v2902
        %2941 = vst [vmem:[%s271 + $0x48] sm:$0xff] %v2905
        %2942 = vst [vmem:[%s271 + $0x50] sm:$0xff] %v2910
        %2943 = vst [vmem:[%s271 + $0x58] sm:$0xff] %v2913
        %2944 = vst [vmem:[%s271 + $0x60] sm:$0xff] %v2918
        %2945 = vst [vmem:[%s271 + $0x68] sm:$0xff] %v2921
        %2946 = vst [vmem:[%s271 + $0x70] sm:$0xff] %v2926
        %2947 = vst [vmem:[%s271 + $0x78] sm:$0xff] %v2929
        %s2948 = sand.u32 %s141, 1
        %s2949 = scalar_lea.sflag [#allocation4], %s2948
        %s2950 = sand.u32 %s141, 1
        %s2951 = smul.addr %s2950, 128
        %s2952 = scalar_lea.vmem [#allocation8], %s2951
        // Predicated region
        $region53: #{tpu_custom_call.1} parent=39 // pred_check
          %p2953 = pneg %p151
        $region54: #{tpu_custom_call.1} parent=39 // pred_check_branch
          %2955 = sbr.rel (%p2953) target = $region56
        $region55: #{tpu_custom_call.1} parent=39 // pred_region
          %s2956 = smul.u32 16, %s23
          %s2958 = ssub.s32 2048, 2048
          %2959 = vsyncadd %s2949, %s2958
          %s2960 = smul.addr %s2956, 128
          %s2961 = scalar_lea.hbm %s5, %s2960
          %s2962 = sshll.u32 %s2952, 4
          %s2963 = int_to_ptr.vmem [resolvable:$true] %s2962
          %2968 = dma.vmem_to_hbm [thread:$0]  %s2963, 2048, %s2961, %s2949, 128, 128, 8
        $region56: #{tpu_custom_call.1} parent=39 // pred_fallthru
          _
      $region40: #{tpu_custom_call.1} parent=5 // pred_fallthru
        _
      %p2969 = scmp.le.s32.totalorder 2, %s18
      // Predicated region
      $region57: #{tpu_custom_call.1} parent=5 // pred_check
        %p2970 = pneg %p2969
      $region58: #{tpu_custom_call.1} parent=5 // pred_check_branch
        %2972 = sbr.rel (%p2970) target = $region60
      $region59: #{tpu_custom_call.1} parent=5 // pred_region
        %s2973 = ssub.s32 %s18, 2
        // Predicated region
        $region61: #{tpu_custom_call.1} parent=59 // pred_check
          %p2974 = pneg %p157
        $region62: #{tpu_custom_call.1} parent=59 // pred_check_branch
          %2976 = sbr.rel (%p2974) target = $region64
        $region63: #{tpu_custom_call.1} parent=59 // pred_region
          %s2977 = sand.u32 %s142, 1
          %s2978 = scalar_lea.sflag [#allocation4], %s2977
          %s2979 = sand.u32 %s142, 1
          %s2980 = smul.addr %s2979, 128
          %s2981 = scalar_lea.vmem [#allocation8], %s2980
          %2982 = dma.done %s2978, 2048
        $region64: #{tpu_custom_call.1} parent=59 // pred_fallthru
          _
      $region60: #{tpu_custom_call.1} parent=5 // pred_fallthru
        _
    $region6: #{tpu_custom_call.1} parent=1 // loop_footer
      %s22 = sadd.s32 1, %s18
    $region7: #{tpu_custom_call.1} parent=1 // loop_footer_branch
      %17 = sbr.rel target = $region3
    $region8: #{tpu_custom_call.1} parent=1 // loop_exit
      _
    %2983 = vsyncpa [#allocation3], 1
    %s2984 = scalar_lea.sflag [#allocation3], 1
    %2985 = vsyncpa %s2984, 1
    %2986 = vsyncpa [#allocation6], 1
    %2987 = vsyncpa [#allocation4], 1
    %s2988 = scalar_lea.sflag [#allocation4], 1
    %2989 = vsyncpa %s2988, 1

// kernel: tpu_custom_call.1
$region0: #{tpu_custom_call.1}
  #allocation0 [shape = 'u32[]', space=smem, size = 0x4, offset = 0x4, fixed_abs, tag = 'smem constant byte address 0x4 - core index']
  #allocation1 [shape = 'u32[144,128]{1,0:T(1,128)}', space=vmem, size = 0x12000, scoped, tag = 'internal scratch']
  %s0 = inlined_call_operand.hbm [shape: bf16[256,128], index: 0, kind: input, shape index: {}]
  %s1 = inlined_call_operand.hbm [shape: bf16[128,512], index: 1, kind: input, shape index: {}]
  %s2 = inlined_call_operand.vmem [shape: f32[1,512], index: 2, kind: input, shape index: {}]
  %s3 = inlined_call_operand.hbm [shape: bf16[512,128], index: 3, kind: input, shape index: {}]
  %s4 = inlined_call_operand.vmem [shape: f32[1,128], index: 4, kind: input, shape index: {}]
  %s5 = inlined_call_operand.hbm [shape: f32[256,128], index: 5, kind: output, shape index: {}]
  %s6 = sld [smem:[#allocation0]]
  $region65: #{tpu_custom_call.1} parent=0
    _
  %s8 = ssub.s32 1, %s6
  %s9 = scalar_select 0, %s8, %s6
  $region1: #{tpu_custom_call.1} parent=0
    #allocation2 [shape = 'u8[65536]{0}', space=vmem, size = 0x10000, scoped, tag = 'input window, operand 0']
    #allocation3 [shape = 's32[2]{0}', space=sflag, size = 0x8, scoped, tag = 'scoped memory for tpu_custom_call.1']
    #allocation4 [shape = 's32[2]{0}', space=sflag, size = 0x8, scoped, tag = 'scoped memory for tpu_custom_call.1']
    #allocation5 [shape = 'u8[131072]{0}', space=vmem, size = 0x20000, scoped, tag = 'input window, operand 1, single buffered']
    #allocation6 [shape = 's32[1]{0}', space=sflag, size = 0x4, scoped, tag = 'scoped memory for tpu_custom_call.1']
    #allocation7 [shape = 'u8[131072]{0}', space=vmem, size = 0x20000, scoped, tag = 'input window, operand 3, single buffered']
    #allocation8 [shape = 'u8[131072]{0}', space=vmem, size = 0x20000, scoped, tag = 'output window, operand 0']
    %10 = vsyncpa [#allocation3], 0
    %s11 = scalar_lea.sflag [#allocation3], 1
    %12 = vsyncpa %s11, 0
    %13 = vsyncpa [#allocation6], 0
    %14 = vsyncpa [#allocation4], 0
    %s15 = scalar_lea.sflag [#allocation4], 1
    %16 = vsyncpa %s15, 0
    loop: start=0, step=1, limit=4
    $region2: #{tpu_custom_call.1} parent=1 // loop_pre_header
      _
    $region3: #{tpu_custom_call.1} parent=1 // loop_header
      %s18 = sphi 0, %s22
      %p19 = scmp.ge.s32.totalorder %s18, 4
      %s28 = sphi 0, %s30
      %s31 = sphi 0, %s28
      %s32 = sphi 0, %s31
      %s48 = sphi 0, %s32
      %s52 = sphi 0, %s52
      %s54 = sphi 0, %s52
      %s55 = sphi 0, %s54
      %s69 = sphi 0, %s55
      %s73 = sphi 0, %s73
      %s75 = sphi 0, %s73
      %s76 = sphi 0, %s75
      %s90 = sphi 0, %s76
      %s94 = sphi 0, %s94
      %s96 = sphi 0, %s94
      %s97 = sphi 0, %s96
      %s111 = sphi 0, %s97
      %s115 = sphi 0, %s115
      %s117 = sphi 0, %s115
      %s118 = sphi 0, %s117
      %s132 = sphi 0, %s118
      %s138 = sphi 0, %s140
      %s141 = sphi 0, %s138
      %s142 = sphi 0, %s141
      %s158 = sphi 0, %s142
    $region4: #{tpu_custom_call.1} parent=1 // loop_header_branch
      %21 = sbr.rel (%p19) target = $region8
    $region5: #{tpu_custom_call.1} parent=1 // loop_body
      %s23 = ssub.s32 %s18, 1
      %s24 = ssub.s32 %s18, 2
      %s25 = sadd.s32 %s18, 1
      %s26 = ssub.s32 %s18, %s25
      %p27 = scmp.eq.s32.totalorder %s26, 0
      %s29 = sadd.s32 %s28, 1
      %s30 = scalar_select %p27, %s28, %s29
      %p33 = pneg %p27
      %p34 = scmp.eq.s32.totalorder %s18, 1
      %p35 = por %p33, %p34
      %p36 = scmp.ne.s32.totalorder %s28, %s31
      %p37 = scmp.eq.s32.totalorder %s18, 0
      %p38 = por %p36, %p37
      %p39 = scmp.ne.s32.totalorder %s28, %s31
      %p40 = scmp.eq.s32.totalorder %s23, 1
      %p41 = por %p39, %p40
      %p42 = scmp.ne.s32.totalorder %s31, %s32
      %p43 = scmp.eq.s32.totalorder %s23, 0
      %p44 = por %p42, %p43
      %p45 = scmp.ne.s32.totalorder %s31, %s32
      %p46 = scmp.eq.s32.totalorder %s24, 1
      %p47 = por %p45, %p46
      %p49 = scmp.ne.s32.totalorder %s32, %s48
      %p50 = scmp.eq.s32.totalorder %s24, 0
      %p51 = por %p49, %p50
      %s53 = sadd.s32 %s52, 1
      %p56 = scmp.eq.s32.totalorder %s18, 1
      %p57 = scmp.ne.s32.totalorder %s52, %s54
      %p58 = scmp.eq.s32.totalorder %s18, 0
      %p59 = por %p57, %p58
      %p60 = scmp.ne.s32.totalorder %s52, %s54
      %p61 = scmp.eq.s32.totalorder %s23, 1
      %p62 = por %p60, %p61
      %p63 = scmp.ne.s32.totalorder %s54, %s55
      %p64 = scmp.eq.s32.totalorder %s23, 0
      %p65 = por %p63, %p64
      %p66 = scmp.ne.s32.totalorder %s54, %s55
      %p67 = scmp.eq.s32.totalorder %s24, 1
      %p68 = por %p66, %p67
      %p70 = scmp.ne.s32.totalorder %s55, %s69
      %p71 = scmp.eq.s32.totalorder %s24, 0
      %p72 = por %p70, %p71
      %s74 = sadd.s32 %s73, 1
      %p77 = scmp.eq.s32.totalorder %s18, 1
      %p78 = scmp.ne.s32.totalorder %s73, %s75
      %p79 = scmp.eq.s32.totalorder %s18, 0
      %p80 = por %p78, %p79
      %p81 = scmp.ne.s32.totalorder %s73, %s75
      %p82 = scmp.eq.s32.totalorder %s23, 1
      %p83 = por %p81, %p82
      %p84 = scmp.ne.s32.totalorder %s75, %s76
      %p85 = scmp.eq.s32.totalorder %s23, 0
      %p86 = por %p84, %p85
      %p87 = scmp.ne.s32.totalorder %s75, %s76
      %p88 = scmp.eq.s32.totalorder %s24, 1
      %p89 = por %p87, %p88
      %p91 = scmp.ne.s32.totalorder %s76, %s90
      %p92 = scmp.eq.s32.totalorder %s24, 0
      %p93 = por %p91, %p92
      %s95 = sadd.s32 %s94, 1
      %p98 = scmp.eq.s32.totalorder %s18, 1
      %p99 = scmp.ne.s32.totalorder %s94, %s96
      %p100 = scmp.eq.s32.totalorder %s18, 0
      %p101 = por %p99, %p100
      %p102 = scmp.ne.s32.totalorder %s94, %s96
      %p103 = scmp.eq.s32.totalorder %s23, 1
      %p104 = por %p102, %p103
      %p105 = scmp.ne.s32.totalorder %s96, %s97
      %p106 = scmp.eq.s32.totalorder %s23, 0
      %p107 = por %p105, %p106
      %p108 = scmp.ne.s32.totalorder %s96, %s97
      %p109 = scmp.eq.s32.totalorder %s24, 1
      %p110 = por %p108, %p109
      %p112 = scmp.ne.s32.totalorder %s97, %s111
      %p113 = scmp.eq.s32.totalorder %s24, 0
      %p114 = por %p112, %p113
      %s116 = sadd.s32 %s115, 1
      %p119 = scmp.eq.s32.totalorder %s18, 1
      %p120 = scmp.ne.s32.totalorder %s115, %s117
      %p121 = scmp.eq.s32.totalorder %s18, 0
      %p122 = por %p120, %p121
      %p123 = scmp.ne.s32.totalorder %s115, %s117
      %p124 = scmp.eq.s32.totalorder %s23, 1
      %p125 = por %p123, %p124
      %p126 = scmp.ne.s32.totalorder %s117, %s118
      %p127 = scmp.eq.s32.totalorder %s23, 0
      %p128 = por %p126, %p127
      %p129 = scmp.ne.s32.totalorder %s117, %s118
      %p130 = scmp.eq.s32.totalorder %s24, 1
      %p131 = por %p129, %p130
      %p133 = scmp.ne.s32.totalorder %s118, %s132
      %p134 = scmp.eq.s32.totalorder %s24, 0
      %p135 = por %p133, %p134
      %s136 = ssub.s32 %s18, %s25
      %p137 = scmp.eq.s32.totalorder %s136, 0
      %s139 = sadd.s32 %s138, 1
      %s140 = scalar_select %p137, %s138, %s139
      %p143 = pneg %p137
      %p144 = scmp.eq.s32.totalorder %s18, 1
      %p145 = por %p143, %p144
      %p146 = scmp.ne.s32.totalorder %s138, %s141
      %p147 = scmp.eq.s32.totalorder %s18, 0
      %p148 = por %p146, %p147
      %p149 = scmp.ne.s32.totalorder %s138, %s141
      %p150 = scmp.eq.s32.totalorder %s23, 1
      %p151 = por %p149, %p150
      %p152 = scmp.ne.s32.totalorder %s141, %s142
      %p153 = scmp.eq.s32.totalorder %s23, 0
      %p154 = por %p152, %p153
      %p155 = scmp.ne.s32.totalorder %s141, %s142
      %p156 = scmp.eq.s32.totalorder %s24, 1
      %p157 = por %p155, %p156
      %p159 = scmp.ne.s32.totalorder %s142, %s158
      %p160 = scmp.eq.s32.totalorder %s24, 0
      %p161 = por %p159, %p160
      %p162 = scmp.le.s32.totalorder 1, %s18
      %p163 = scmp.lt.s32.totalorder %s18, 3
      %p164 = pnand %p162, %p163
      %p165 = pneg %p164
      // Predicated region
      $region9: #{tpu_custom_call.1} parent=5 // pred_check
        _
      $region10: #{tpu_custom_call.1} parent=5 // pred_check_branch
        %167 = sbr.rel (%p164) target = $region12
      $region11: #{tpu_custom_call.1} parent=5 // pred_region
        %s168 = ssub.s32 %s18, 1
        // Predicated region
        $region13: #{tpu_custom_call.1} parent=11 // pred_check
          %p169 = pneg %p65
        $region14: #{tpu_custom_call.1} parent=11 // pred_check_branch
          %171 = sbr.rel (%p169) target = $region16
        $region15: #{tpu_custom_call.1} parent=11 // pred_region
          %s173 = ssub.s32 4096, 4096
          %174 = vsyncadd [#allocation6], %s173
          %s175 = sshll.u32 [#allocation5], 4
          %s176 = int_to_ptr.vmem [resolvable:$true] %s175
          %181 = dma.hbm_to_vmem [thread:$0]  %s1, 4096, %s176, [#allocation6], 256, 256, 16
        $region16: #{tpu_custom_call.1} parent=11 // pred_fallthru
          _
        // Predicated region
        $region17: #{tpu_custom_call.1} parent=11 // pred_check
          %p182 = pneg %p86
        $region18: #{tpu_custom_call.1} parent=11 // pred_check_branch
          %184 = sbr.rel (%p182) target = $region20
        $region19: #{tpu_custom_call.1} parent=11 // pred_region
          _
        $region20: #{tpu_custom_call.1} parent=11 // pred_fallthru
          _
        // Predicated region
        $region21: #{tpu_custom_call.1} parent=11 // pred_check
          %p185 = pneg %p107
        $region22: #{tpu_custom_call.1} parent=11 // pred_check_branch
          %187 = sbr.rel (%p185) target = $region24
        $region23: #{tpu_custom_call.1} parent=11 // pred_region
          %s189 = ssub.s32 4096, 4096
          %190 = vsyncadd [#allocation6], %s189
          %s191 = sshll.u32 [#allocation7], 4
          %s192 = int_to_ptr.vmem [resolvable:$true] %s191
          %197 = dma.hbm_to_vmem [thread:$0]  %s3, 4096, %s192, [#allocation6], 64, 64, 4
        $region24: #{tpu_custom_call.1} parent=11 // pred_fallthru
          _
        // Predicated region
        $region25: #{tpu_custom_call.1} parent=11 // pred_check
          %p198 = pneg %p128
        $region26: #{tpu_custom_call.1} parent=11 // pred_check_branch
          %200 = sbr.rel (%p198) target = $region28
        $region27: #{tpu_custom_call.1} parent=11 // pred_region
          _
        $region28: #{tpu_custom_call.1} parent=11 // pred_fallthru
          _
      $region12: #{tpu_custom_call.1} parent=5 // pred_fallthru
        _
      %p201 = scmp.lt.s32.totalorder %s18, 2
      // Predicated region
      $region29: #{tpu_custom_call.1} parent=5 // pred_check
        %p202 = pneg %p201
      $region30: #{tpu_custom_call.1} parent=5 // pred_check_branch
        %204 = sbr.rel (%p202) target = $region32
      $region31: #{tpu_custom_call.1} parent=5 // pred_region
        // Predicated region
        $region33: #{tpu_custom_call.1} parent=31 // pred_check
          %p205 = pneg %p38
        $region34: #{tpu_custom_call.1} parent=31 // pred_check_branch
          %207 = sbr.rel (%p205) target = $region36
        $region35: #{tpu_custom_call.1} parent=31 // pred_region
          %s208 = sand.u32 %s28, 1
          %s209 = scalar_lea.sflag [#allocation3], %s208
          %s210 = sand.u32 %s28, 1
          %s211 = smul.addr %s210, 64
          %s212 = scalar_lea.vmem [#allocation2], %s211
          %s213 = smul.u32 16, %s18
          %s215 = ssub.s32 1024, 1024
          %216 = vsyncadd %s209, %s215
          %s217 = smul.addr %s213, 64
          %s218 = scalar_lea.hbm %s0, %s217
          %s219 = sshll.u32 %s212, 4
          %s220 = int_to_ptr.vmem [resolvable:$true] %s219
          %225 = dma.hbm_to_vmem [thread:$0]  %s218, 1024, %s220, %s209, 64, 64, 4
        $region36: #{tpu_custom_call.1} parent=31 // pred_fallthru
          _
      $region32: #{tpu_custom_call.1} parent=5 // pred_fallthru
        _
      %p226 = scmp.le.s32.totalorder 1, %s18
      %p227 = scmp.lt.s32.totalorder %s18, 3
      %p228 = pnand %p226, %p227
      %p229 = pneg %p228
      // Predicated region
      $region37: #{tpu_custom_call.1} parent=5 // pred_check
        _
      $region38: #{tpu_custom_call.1} parent=5 // pred_check_branch
        %231 = sbr.rel (%p228) target = $region40
      $region39: #{tpu_custom_call.1} parent=5 // pred_region
        %s232 = ssub.s32 %s18, 1
        %s233 = sand.u32 %s31, 1
        %s234 = scalar_lea.sflag [#allocation3], %s233
        %s235 = sand.u32 %s31, 1
        %s236 = smul.addr %s235, 64
        %s237 = scalar_lea.vmem [#allocation2], %s236
        // Predicated region
        $region41: #{tpu_custom_call.1} parent=39 // pred_check
          %p238 = pneg %p44
        $region42: #{tpu_custom_call.1} parent=39 // pred_check_branch
          %240 = sbr.rel (%p238) target = $region44
        $region43: #{tpu_custom_call.1} parent=39 // pred_region
          %241 = dma.done %s234, 1024
        $region44: #{tpu_custom_call.1} parent=39 // pred_fallthru
          _
        // Predicated region
        $region45: #{tpu_custom_call.1} parent=39 // pred_check
          %p242 = pneg %p65
        $region46: #{tpu_custom_call.1} parent=39 // pred_check_branch
          %244 = sbr.rel (%p242) target = $region48
        $region47: #{tpu_custom_call.1} parent=39 // pred_region
          %245 = dma.done [#allocation6], 4096
        $region48: #{tpu_custom_call.1} parent=39 // pred_fallthru
          _
        // Predicated region
        $region49: #{tpu_custom_call.1} parent=39 // pred_check
          %p246 = pneg %p107
        $region50: #{tpu_custom_call.1} parent=39 // pred_check_branch
          %248 = sbr.rel (%p246) target = $region52
        $region51: #{tpu_custom_call.1} parent=39 // pred_region
          %249 = dma.done [#allocation6], 4096
        $region52: #{tpu_custom_call.1} parent=39 // pred_fallthru
          _
        %s250 = sand.u32 %s31, 1
        %s251 = scalar_lea.sflag [#allocation3], %s250
        %s252 = sand.u32 %s31, 1
        %s253 = smul.addr %s252, 64
        %s254 = scalar_lea.vmem [#allocation2], %s253
        %p255 = pneg %p44
        %p256 = pneg %p41
        %p257 = pneg %p65
        %p258 = pneg %p62
        %p259 = pneg %p86
        %p260 = pneg %p83
        %p261 = pneg %p107
        %p262 = pneg %p104
        %p263 = pneg %p128
        %p264 = pneg %p125
        %p265 = pneg %p154
        %p266 = pneg %p151
        %s267 = sand.u32 %s141, 1
        %s268 = scalar_lea.sflag [#allocation4], %s267
        %s269 = sand.u32 %s141, 1
        %s270 = smul.addr %s269, 128
        %s271 = scalar_lea.vmem [#allocation8], %s270
        %s272 = smul.u32 16, %s23
        %s273 = smul.u32 16, %s23
        %v275 = vld [vmem:[%s237] sm:$0xf]
        %v276 = vld [vmem:[%s237 + $0x4] sm:$0xf]
        %v277 = vld [vmem:[%s237 + $0x8] sm:$0xf]
        %v278 = vld [vmem:[%s237 + $0xc] sm:$0xf]
        %v279 = vld [vmem:[%s237 + $0x10] sm:$0xf]
        %v280 = vld [vmem:[%s237 + $0x14] sm:$0xf]
        %v281 = vld [vmem:[%s237 + $0x18] sm:$0xf]
        %v282 = vld [vmem:[%s237 + $0x1c] sm:$0xf]
        %v283 = vld [vmem:[%s237 + $0x20] sm:$0xf]
        %v284 = vld [vmem:[%s237 + $0x24] sm:$0xf]
        %v285 = vld [vmem:[%s237 + $0x28] sm:$0xf]
        %v286 = vld [vmem:[%s237 + $0x2c] sm:$0xf]
        %v287 = vld [vmem:[%s237 + $0x30] sm:$0xf]
        %v288 = vld [vmem:[%s237 + $0x34] sm:$0xf]
        %v289 = vld [vmem:[%s237 + $0x38] sm:$0xf]
        %v290 = vld [vmem:[%s237 + $0x3c] sm:$0xf]
        %v291 = vld [vmem:[#allocation5] sm:$0xff]
        %v292 = vld [vmem:[#allocation5 + $0x8] sm:$0xff]
        %v293 = vld [vmem:[#allocation5 + $0x10] sm:$0xff]
        %v294 = vld [vmem:[#allocation5 + $0x18] sm:$0xff]
        %v295 = vld [vmem:[#allocation5 + $0x20] sm:$0xff]
        %v296 = vld [vmem:[#allocation5 + $0x28] sm:$0xff]
        %v297 = vld [vmem:[#allocation5 + $0x30] sm:$0xff]
        %v298 = vld [vmem:[#allocation5 + $0x38] sm:$0xff]
        %v299 = vld [vmem:[#allocation5 + $0x40] sm:$0xff]
        %v300 = vld [vmem:[#allocation5 + $0x48] sm:$0xff]
        %v301 = vld [vmem:[#allocation5 + $0x50] sm:$0xff]
        %v302 = vld [vmem:[#allocation5 + $0x58] sm:$0xff]
        %v303 = vld [vmem:[#allocation5 + $0x60] sm:$0xff]
        %v304 = vld [vmem:[#allocation5 + $0x68] sm:$0xff]
        %v305 = vld [vmem:[#allocation5 + $0x70] sm:$0xff]
        %v306 = vld [vmem:[#allocation5 + $0x78] sm:$0xff]
        %v307 = vld [vmem:[#allocation5 + $0x80] sm:$0xff]
        %v308 = vld [vmem:[#allocation5 + $0x88] sm:$0xff]
        %v309 = vld [vmem:[#allocation5 + $0x90] sm:$0xff]
        %v310 = vld [vmem:[#allocation5 + $0x98] sm:$0xff]
        %v311 = vld [vmem:[#allocation5 + $0xa0] sm:$0xff]
        %v312 = vld [vmem:[#allocation5 + $0xa8] sm:$0xff]
        %v313 = vld [vmem:[#allocation5 + $0xb0] sm:$0xff]
        %v314 = vld [vmem:[#allocation5 + $0xb8] sm:$0xff]
        %v315 = vld [vmem:[#allocation5 + $0xc0] sm:$0xff]
        %v316 = vld [vmem:[#allocation5 + $0xc8] sm:$0xff]
        %v317 = vld [vmem:[#allocation5 + $0xd0] sm:$0xff]
        %v318 = vld [vmem:[#allocation5 + $0xd8] sm:$0xff]
        %v319 = vld [vmem:[#allocation5 + $0xe0] sm:$0xff]
        %v320 = vld [vmem:[#allocation5 + $0xe8] sm:$0xff]
        %v321 = vld [vmem:[#allocation5 + $0xf0] sm:$0xff]
        %v322 = vld [vmem:[#allocation5 + $0xf8] sm:$0xff]
        %v323 = vld [vmem:[%s2] sm:$0xf]
        %v325 = vlaneseq
        %v326 = vshrl.u32 %v325, 7
        %v327 = vsub.s32 0, %v326
        %v328 = vrot.slane %v323, %v327
        %v329 = vlaneseq
        %v330 = vshrl.u32 %v329, 7
        %v331 = vsub.s32 1, %v330
        %v332 = vrot.slane %v323, %v331
        %v333 = vlaneseq
        %v334 = vshrl.u32 %v333, 7
        %v335 = vsub.s32 2, %v334
        %v336 = vrot.slane %v323, %v335
        %v337 = vlaneseq
        %v338 = vshrl.u32 %v337, 7
        %v339 = vsub.s32 3, %v338
        %v340 = vrot.slane %v323, %v339
        %v361 = vunpack.c.l.b16 %v275
        %v362 = vunpack.c.l.b16 %v276
        %v363 = vunpack.c.l.b16 %v277
        %v364 = vunpack.c.l.b16 %v278
        %v365 = vunpack.c.l.b16 %v279
        %v366 = vunpack.c.l.b16 %v280
        %v367 = vunpack.c.l.b16 %v281
        %v368 = vunpack.c.l.b16 %v282
        %v369 = vunpack.c.l.b16 %v283
        %v370 = vunpack.c.l.b16 %v284
        %v371 = vunpack.c.l.b16 %v285
        %v372 = vunpack.c.l.b16 %v286
        %v373 = vunpack.c.l.b16 %v287
        %v374 = vunpack.c.l.b16 %v288
        %v375 = vunpack.c.l.b16 %v289
        %v376 = vunpack.c.l.b16 %v290
        %v377 = vpack.c.b16 %v362, %v361
        %v378 = vpack.c.b16 %v364, %v363
        %v379 = vpack.c.b16 %v366, %v365
        %v380 = vpack.c.b16 %v368, %v367
        %v381 = vpack.c.b16 %v370, %v369
        %v382 = vpack.c.b16 %v372, %v371
        %v383 = vpack.c.b16 %v374, %v373
        %v384 = vpack.c.b16 %v376, %v375
        %v425 = vunpack.c.l.b16 %v291
        %v426 = vunpack.c.h.b16 %v291
        %v427 = vunpack.c.l.b16 %v292
        %v428 = vunpack.c.h.b16 %v292
        %v429 = vunpack.c.l.b16 %v293
        %v430 = vunpack.c.h.b16 %v293
        %v431 = vunpack.c.l.b16 %v294
        %v432 = vunpack.c.h.b16 %v294
        %v433 = vunpack.c.l.b16 %v295
        %v434 = vunpack.c.h.b16 %v295
        %v435 = vunpack.c.l.b16 %v296
        %v436 = vunpack.c.h.b16 %v296
        %v437 = vunpack.c.l.b16 %v297
        %v438 = vunpack.c.h.b16 %v297
        %v439 = vunpack.c.l.b16 %v298
        %v440 = vunpack.c.h.b16 %v298
        %v441 = vunpack.c.l.b16 %v299
        %v442 = vunpack.c.h.b16 %v299
        %v443 = vunpack.c.l.b16 %v300
        %v444 = vunpack.c.h.b16 %v300
        %v445 = vunpack.c.l.b16 %v301
        %v446 = vunpack.c.h.b16 %v301
        %v447 = vunpack.c.l.b16 %v302
        %v448 = vunpack.c.h.b16 %v302
        %v449 = vunpack.c.l.b16 %v303
        %v450 = vunpack.c.h.b16 %v303
        %v451 = vunpack.c.l.b16 %v304
        %v452 = vunpack.c.h.b16 %v304
        %v453 = vunpack.c.l.b16 %v305
        %v454 = vunpack.c.h.b16 %v305
        %v455 = vunpack.c.l.b16 %v306
        %v456 = vunpack.c.h.b16 %v306
        %v457 = vunpack.c.l.b16 %v307
        %v458 = vunpack.c.h.b16 %v307
        %v459 = vunpack.c.l.b16 %v308
        %v460 = vunpack.c.h.b16 %v308
        %v461 = vunpack.c.l.b16 %v309
        %v462 = vunpack.c.h.b16 %v309
        %v463 = vunpack.c.l.b16 %v310
        %v464 = vunpack.c.h.b16 %v310
        %v465 = vunpack.c.l.b16 %v311
        %v466 = vunpack.c.h.b16 %v311
        %v467 = vunpack.c.l.b16 %v312
        %v468 = vunpack.c.h.b16 %v312
        %v469 = vunpack.c.l.b16 %v313
        %v470 = vunpack.c.h.b16 %v313
        %v471 = vunpack.c.l.b16 %v314
        %v472 = vunpack.c.h.b16 %v314
        %v473 = vunpack.c.l.b16 %v315
        %v474 = vunpack.c.h.b16 %v315
        %v475 = vunpack.c.l.b16 %v316
        %v476 = vunpack.c.h.b16 %v316
        %v477 = vunpack.c.l.b16 %v317
        %v478 = vunpack.c.h.b16 %v317
        %v479 = vunpack.c.l.b16 %v318
        %v480 = vunpack.c.h.b16 %v318
        %v481 = vunpack.c.l.b16 %v319
        %v482 = vunpack.c.h.b16 %v319
        %v483 = vunpack.c.l.b16 %v320
        %v484 = vunpack.c.h.b16 %v320
        %v485 = vunpack.c.l.b16 %v321
        %v486 = vunpack.c.h.b16 %v321
        %v487 = vunpack.c.l.b16 %v322
        %v488 = vunpack.c.h.b16 %v322
        %v489 = vpack.c.b16 %v429, %v425
        %v490 = vpack.c.b16 %v430, %v426
        %v491 = vpack.c.b16 %v431, %v427
        %v492 = vpack.c.b16 %v432, %v428
        %v493 = vpack.c.b16 %v437, %v433
        %v494 = vpack.c.b16 %v438, %v434
        %v495 = vpack.c.b16 %v439, %v435
        %v496 = vpack.c.b16 %v440, %v436
        %v497 = vpack.c.b16 %v445, %v441
        %v498 = vpack.c.b16 %v446, %v442
        %v499 = vpack.c.b16 %v447, %v443
        %v500 = vpack.c.b16 %v448, %v444
        %v501 = vpack.c.b16 %v453, %v449
        %v502 = vpack.c.b16 %v454, %v450
        %v503 = vpack.c.b16 %v455, %v451
        %v504 = vpack.c.b16 %v456, %v452
        %v505 = vpack.c.b16 %v461, %v457
        %v506 = vpack.c.b16 %v462, %v458
        %v507 = vpack.c.b16 %v463, %v459
        %v508 = vpack.c.b16 %v464, %v460
        %v509 = vpack.c.b16 %v469, %v465
        %v510 = vpack.c.b16 %v470, %v466
        %v511 = vpack.c.b16 %v471, %v467
        %v512 = vpack.c.b16 %v472, %v468
        %v513 = vpack.c.b16 %v477, %v473
        %v514 = vpack.c.b16 %v478, %v474
        %v515 = vpack.c.b16 %v479, %v475
        %v516 = vpack.c.b16 %v480, %v476
        %v517 = vpack.c.b16 %v485, %v481
        %v518 = vpack.c.b16 %v486, %v482
        %v519 = vpack.c.b16 %v487, %v483
        %v520 = vpack.c.b16 %v488, %v484
        %553 = vmatprep.subr.bf16.mxu0 %v490
        %554 = vmatpush1.bf16.msra.mxu0 %v489
        %555 = vmatprep.subr.bf16.mxu0 %v494
        %556 = vmatpush1.bf16.msra.mxu0 %v493
        %557 = vmatprep.subr.bf16.mxu0 %v498
        %558 = vmatpush1.bf16.msra.mxu0 %v497
        %559 = vmatprep.subr.bf16.mxu0 %v502
        %560 = vmatpush1.bf16.msra.mxu0 %v501
        %561 = vmatprep.subr.bf16.mxu0 %v506
        %562 = vmatpush1.bf16.msra.mxu0 %v505
        %563 = vmatprep.subr.bf16.mxu0 %v510
        %564 = vmatpush1.bf16.msra.mxu0 %v509
        %565 = vmatprep.subr.bf16.mxu0 %v514
        %566 = vmatpush1.bf16.msra.mxu0 %v513
        %567 = vmatprep.subr.bf16.mxu0 %v518
        %568 = vmatpush1.bf16.msra.mxu0 %v517
        %569 = vmatprep.subr.bf16.mxu0 0
        %570 = vmatpush1.bf16.msra.mxu0 0
        %571 = vmatprep.subr.bf16.mxu0 0
        %572 = vmatpush1.bf16.msra.mxu0 0
        %573 = vmatprep.subr.bf16.mxu0 0
        %574 = vmatpush1.bf16.msra.mxu0 0
        %575 = vmatprep.subr.bf16.mxu0 0
        %576 = vmatpush1.bf16.msra.mxu0 0
        %577 = vmatprep.subr.bf16.mxu0 0
        %578 = vmatpush1.bf16.msra.mxu0 0
        %579 = vmatprep.subr.bf16.mxu0 0
        %580 = vmatpush1.bf16.msra.mxu0 0
        %581 = vmatprep.subr.bf16.mxu0 0
        %582 = vmatpush1.bf16.msra.mxu0 0
        %583 = vmatprep.subr.bf16.mxu0 0
        %584 = vmatpush1.bf16.msra.mxu0 0
        %585 = vmatprep.mubr.bf16.mxu0 0
        %586 = vmatmul.mubr.bf16.gmra.mrb[0].mxu0 %v377
        %v587 = vpop.f32.mrb[0].mxu0
        %v588 = vadd.f32 %v328, %v587
        %v589 = vpop.f32.mrb[0].mxu0
        %v590 = vadd.f32 %v332, %v589
        %v591 = vpop.f32.mrb[0].mxu0
        %v592 = vadd.f32 %v328, %v591
        %v593 = vpop.f32.mrb[0].mxu0
        %v594 = vadd.f32 %v332, %v593
        %595 = vmatprep.mubr.bf16.mxu0 0
        %596 = vmatmul.mubr.bf16.gmra.mrb[0].mxu0 %v378
        %v597 = vpop.f32.mrb[0].mxu0
        %v598 = vadd.f32 %v328, %v597
        %v599 = vpop.f32.mrb[0].mxu0
        %v600 = vadd.f32 %v332, %v599
        %v601 = vpop.f32.mrb[0].mxu0
        %v602 = vadd.f32 %v328, %v601
        %v603 = vpop.f32.mrb[0].mxu0
        %v604 = vadd.f32 %v332, %v603
        %605 = vmatprep.mubr.bf16.mxu0 0
        %606 = vmatmul.mubr.bf16.gmra.mrb[0].mxu0 %v379
        %v607 = vpop.f32.mrb[0].mxu0
        %v608 = vadd.f32 %v328, %v607
        %v609 = vpop.f32.mrb[0].mxu0
        %v610 = vadd.f32 %v332, %v609
        %v611 = vpop.f32.mrb[0].mxu0
        %v612 = vadd.f32 %v328, %v611
        %v613 = vpop.f32.mrb[0].mxu0
        %v614 = vadd.f32 %v332, %v613
        %615 = vmatprep.mubr.bf16.mxu0 0
        %616 = vmatmul.mubr.bf16.gmra.mrb[0].mxu0 %v380
        %v617 = vpop.f32.mrb[0].mxu0
        %v618 = vadd.f32 %v328, %v617
        %v619 = vpop.f32.mrb[0].mxu0
        %v620 = vadd.f32 %v332, %v619
        %v621 = vpop.f32.mrb[0].mxu0
        %v622 = vadd.f32 %v328, %v621
        %v623 = vpop.f32.mrb[0].mxu0
        %v624 = vadd.f32 %v332, %v623
        %625 = vmatprep.mubr.bf16.mxu0 0
        %626 = vmatmul.mubr.bf16.gmra.mrb[0].mxu0 %v381
        %v627 = vpop.f32.mrb[0].mxu0
        %v628 = vadd.f32 %v328, %v627
        %v629 = vpop.f32.mrb[0].mxu0
        %v630 = vadd.f32 %v332, %v629
        %v631 = vpop.f32.mrb[0].mxu0
        %v632 = vadd.f32 %v328, %v631
        %v633 = vpop.f32.mrb[0].mxu0
        %v634 = vadd.f32 %v332, %v633
        %635 = vmatprep.mubr.bf16.mxu0 0
        %636 = vmatmul.mubr.bf16.gmra.mrb[0].mxu0 %v382
        %v637 = vpop.f32.mrb[0].mxu0
        %v638 = vadd.f32 %v328, %v637
        %v639 = vpop.f32.mrb[0].mxu0
        %v640 = vadd.f32 %v332, %v639
        %v641 = vpop.f32.mrb[0].mxu0
        %v642 = vadd.f32 %v328, %v641
        %v643 = vpop.f32.mrb[0].mxu0
        %v644 = vadd.f32 %v332, %v643
        %645 = vmatprep.mubr.bf16.mxu0 0
        %646 = vmatmul.mubr.bf16.gmra.mrb[0].mxu0 %v383
        %v647 = vpop.f32.mrb[0].mxu0
        %v648 = vadd.f32 %v328, %v647
        %v649 = vpop.f32.mrb[0].mxu0
        %v650 = vadd.f32 %v332, %v649
        %v651 = vpop.f32.mrb[0].mxu0
        %v652 = vadd.f32 %v328, %v651
        %v653 = vpop.f32.mrb[0].mxu0
        %v654 = vadd.f32 %v332, %v653
        %655 = vmatprep.mubr.bf16.mxu0 0
        %656 = vmatmul.mubr.bf16.gmra.mrb[0].mxu0 %v384
        %v657 = vpop.f32.mrb[0].mxu0
        %v658 = vadd.f32 %v328, %v657
        %v659 = vpop.f32.mrb[0].mxu0
        %v660 = vadd.f32 %v332, %v659
        %v661 = vpop.f32.mrb[0].mxu0
        %v662 = vadd.f32 %v328, %v661
        %v663 = vpop.f32.mrb[0].mxu0
        %v664 = vadd.f32 %v332, %v663
        %665 = vdwg.mxu0
        %666 = vmatprep.subr.bf16.mxu0 %v492
        %667 = vmatpush1.bf16.msra.mxu0 %v491
        %668 = vmatprep.subr.bf16.mxu0 %v496
        %669 = vmatpush1.bf16.msra.mxu0 %v495
        %670 = vmatprep.subr.bf16.mxu0 %v500
        %671 = vmatpush1.bf16.msra.mxu0 %v499
        %672 = vmatprep.subr.bf16.mxu0 %v504
        %673 = vmatpush1.bf16.msra.mxu0 %v503
        %674 = vmatprep.subr.bf16.mxu0 %v508
        %675 = vmatpush1.bf16.msra.mxu0 %v507
        %676 = vmatprep.subr.bf16.mxu0 %v512
        %677 = vmatpush1.bf16.msra.mxu0 %v511
        %678 = vmatprep.subr.bf16.mxu0 %v516
        %679 = vmatpush1.bf16.msra.mxu0 %v515
        %680 = vmatprep.subr.bf16.mxu0 %v520
        %681 = vmatpush1.bf16.msra.mxu0 %v519
        %682 = vmatprep.subr.bf16.mxu0 0
        %683 = vmatpush1.bf16.msra.mxu0 0
        %684 = vmatprep.subr.bf16.mxu0 0
        %685 = vmatpush1.bf16.msra.mxu0 0
        %686 = vmatprep.subr.bf16.mxu0 0
        %687 = vmatpush1.bf16.msra.mxu0 0
        %688 = vmatprep.subr.bf16.mxu0 0
        %689 = vmatpush1.bf16.msra.mxu0 0
        %690 = vmatprep.subr.bf16.mxu0 0
        %691 = vmatpush1.bf16.msra.mxu0 0
        %692 = vmatprep.subr.bf16.mxu0 0
        %693 = vmatpush1.bf16.msra.mxu0 0
        %694 = vmatprep.subr.bf16.mxu0 0
        %695 = vmatpush1.bf16.msra.mxu0 0
        %696 = vmatprep.subr.bf16.mxu0 0
        %697 = vmatpush1.bf16.msra.mxu0 0
        %698 = vmatprep.mubr.bf16.mxu0 0
        %699 = vmatmul.mubr.bf16.gmra.mrb[0].mxu0 %v377
        %v700 = vpop.f32.mrb[0].mxu0
        %v701 = vadd.f32 %v336, %v700
        %v702 = vpop.f32.mrb[0].mxu0
        %v703 = vadd.f32 %v340, %v702
        %v704 = vpop.f32.mrb[0].mxu0
        %v705 = vadd.f32 %v336, %v704
        %v706 = vpop.f32.mrb[0].mxu0
        %v707 = vadd.f32 %v340, %v706
        %708 = vmatprep.mubr.bf16.mxu0 0
        %709 = vmatmul.mubr.bf16.gmra.mrb[0].mxu0 %v378
        %v710 = vpop.f32.mrb[0].mxu0
        %v711 = vadd.f32 %v336, %v710
        %v712 = vpop.f32.mrb[0].mxu0
        %v713 = vadd.f32 %v340, %v712
        %v714 = vpop.f32.mrb[0].mxu0
        %v715 = vadd.f32 %v336, %v714
        %v716 = vpop.f32.mrb[0].mxu0
        %v717 = vadd.f32 %v340, %v716
        %718 = vmatprep.mubr.bf16.mxu0 0
        %719 = vmatmul.mubr.bf16.gmra.mrb[0].mxu0 %v379
        %v720 = vpop.f32.mrb[0].mxu0
        %v721 = vadd.f32 %v336, %v720
        %v722 = vpop.f32.mrb[0].mxu0
        %v723 = vadd.f32 %v340, %v722
        %v724 = vpop.f32.mrb[0].mxu0
        %v725 = vadd.f32 %v336, %v724
        %v726 = vpop.f32.mrb[0].mxu0
        %v727 = vadd.f32 %v340, %v726
        %728 = vmatprep.mubr.bf16.mxu0 0
        %729 = vmatmul.mubr.bf16.gmra.mrb[0].mxu0 %v380
        %v730 = vpop.f32.mrb[0].mxu0
        %v731 = vadd.f32 %v336, %v730
        %v732 = vpop.f32.mrb[0].mxu0
        %v733 = vadd.f32 %v340, %v732
        %v734 = vpop.f32.mrb[0].mxu0
        %v735 = vadd.f32 %v336, %v734
        %v736 = vpop.f32.mrb[0].mxu0
        %v737 = vadd.f32 %v340, %v736
        %738 = vmatprep.mubr.bf16.mxu0 0
        %739 = vmatmul.mubr.bf16.gmra.mrb[0].mxu0 %v381
        %v740 = vpop.f32.mrb[0].mxu0
        %v741 = vadd.f32 %v336, %v740
        %v742 = vpop.f32.mrb[0].mxu0
        %v743 = vadd.f32 %v340, %v742
        %v744 = vpop.f32.mrb[0].mxu0
        %v745 = vadd.f32 %v336, %v744
        %v746 = vpop.f32.mrb[0].mxu0
        %v747 = vadd.f32 %v340, %v746
        %748 = vmatprep.mubr.bf16.mxu0 0
        %749 = vmatmul.mubr.bf16.gmra.mrb[0].mxu0 %v382
        %v750 = vpop.f32.mrb[0].mxu0
        %v751 = vadd.f32 %v336, %v750
        %v752 = vpop.f32.mrb[0].mxu0
        %v753 = vadd.f32 %v340, %v752
        %v754 = vpop.f32.mrb[0].mxu0
        %v755 = vadd.f32 %v336, %v754
        %v756 = vpop.f32.mrb[0].mxu0
        %v757 = vadd.f32 %v340, %v756
        %758 = vmatprep.mubr.bf16.mxu0 0
        %759 = vmatmul.mubr.bf16.gmra.mrb[0].mxu0 %v383
        %v760 = vpop.f32.mrb[0].mxu0
        %v761 = vadd.f32 %v336, %v760
        %v762 = vpop.f32.mrb[0].mxu0
        %v763 = vadd.f32 %v340, %v762
        %v764 = vpop.f32.mrb[0].mxu0
        %v765 = vadd.f32 %v336, %v764
        %v766 = vpop.f32.mrb[0].mxu0
        %v767 = vadd.f32 %v340, %v766
        %768 = vmatprep.mubr.bf16.mxu0 0
        %769 = vmatmul.mubr.bf16.gmra.mrb[0].mxu0 %v384
        %v770 = vpop.f32.mrb[0].mxu0
        %v771 = vadd.f32 %v336, %v770
        %v772 = vpop.f32.mrb[0].mxu0
        %v773 = vadd.f32 %v340, %v772
        %v774 = vpop.f32.mrb[0].mxu0
        %v775 = vadd.f32 %v336, %v774
        %v776 = vpop.f32.mrb[0].mxu0
        %v777 = vadd.f32 %v340, %v776
        %778 = vdwg.mxu0
        %v779 = vmul.f32 %v588, 0.5
        %v780 = vmul.f32 %v590, 0.5
        %v781 = vmul.f32 %v701, 0.5
        %v782 = vmul.f32 %v703, 0.5
        %v783 = vmul.f32 %v592, 0.5
        %v784 = vmul.f32 %v594, 0.5
        %v785 = vmul.f32 %v705, 0.5
        %v786 = vmul.f32 %v707, 0.5
        %v787 = vmul.f32 %v598, 0.5
        %v788 = vmul.f32 %v600, 0.5
        %v789 = vmul.f32 %v711, 0.5
        %v790 = vmul.f32 %v713, 0.5
        %v791 = vmul.f32 %v602, 0.5
        %v792 = vmul.f32 %v604, 0.5
        %v793 = vmul.f32 %v715, 0.5
        %v794 = vmul.f32 %v717, 0.5
        %v795 = vmul.f32 %v608, 0.5
        %v796 = vmul.f32 %v610, 0.5
        %v797 = vmul.f32 %v721, 0.5
        %v798 = vmul.f32 %v723, 0.5
        %v799 = vmul.f32 %v612, 0.5
        %v800 = vmul.f32 %v614, 0.5
        %v801 = vmul.f32 %v725, 0.5
        %v802 = vmul.f32 %v727, 0.5
        %v803 = vmul.f32 %v618, 0.5
        %v804 = vmul.f32 %v620, 0.5
        %v805 = vmul.f32 %v731, 0.5
        %v806 = vmul.f32 %v733, 0.5
        %v807 = vmul.f32 %v622, 0.5
        %v808 = vmul.f32 %v624, 0.5
        %v809 = vmul.f32 %v735, 0.5
        %v810 = vmul.f32 %v737, 0.5
        %v811 = vmul.f32 %v628, 0.5
        %v812 = vmul.f32 %v630, 0.5
        %v813 = vmul.f32 %v741, 0.5
        %v814 = vmul.f32 %v743, 0.5
        %v815 = vmul.f32 %v632, 0.5
        %v816 = vmul.f32 %v634, 0.5
        %v817 = vmul.f32 %v745, 0.5
        %v818 = vmul.f32 %v747, 0.5
        %v819 = vmul.f32 %v638, 0.5
        %v820 = vmul.f32 %v640, 0.5
        %v821 = vmul.f32 %v751, 0.5
        %v822 = vmul.f32 %v753, 0.5
        %v823 = vmul.f32 %v642, 0.5
        %v824 = vmul.f32 %v644, 0.5
        %v825 = vmul.f32 %v755, 0.5
        %v826 = vmul.f32 %v757, 0.5
        %v827 = vmul.f32 %v648, 0.5
        %v828 = vmul.f32 %v650, 0.5
        %v829 = vmul.f32 %v761, 0.5
        %v830 = vmul.f32 %v763, 0.5
        %v831 = vmul.f32 %v652, 0.5
        %v832 = vmul.f32 %v654, 0.5
        %v833 = vmul.f32 %v765, 0.5
        %v834 = vmul.f32 %v767, 0.5
        %v835 = vmul.f32 %v658, 0.5
        %v836 = vmul.f32 %v660, 0.5
        %v837 = vmul.f32 %v771, 0.5
        %v838 = vmul.f32 %v773, 0.5
        %v839 = vmul.f32 %v662, 0.5
        %v840 = vmul.f32 %v664, 0.5
        %v841 = vmul.f32 %v775, 0.5
        %v842 = vmul.f32 %v777, 0.5
        %v843 = vmul.f32 %v588, 0.70710677
        %v844 = vmul.f32 %v590, 0.70710677
        %v845 = vmul.f32 %v701, 0.70710677
        %v846 = vmul.f32 %v703, 0.70710677
        %v847 = vmul.f32 %v592, 0.70710677
        %v848 = vmul.f32 %v594, 0.70710677
        %v849 = vmul.f32 %v705, 0.70710677
        %v850 = vmul.f32 %v707, 0.70710677
        %v851 = vmul.f32 %v598, 0.70710677
        %v852 = vmul.f32 %v600, 0.70710677
        %v853 = vmul.f32 %v711, 0.70710677
        %v854 = vmul.f32 %v713, 0.70710677
        %v855 = vmul.f32 %v602, 0.70710677
        %v856 = vmul.f32 %v604, 0.70710677
        %v857 = vmul.f32 %v715, 0.70710677
        %v858 = vmul.f32 %v717, 0.70710677
        %v859 = vmul.f32 %v608, 0.70710677
        %v860 = vmul.f32 %v610, 0.70710677
        %v861 = vmul.f32 %v721, 0.70710677
        %v862 = vmul.f32 %v723, 0.70710677
        %v863 = vmul.f32 %v612, 0.70710677
        %v864 = vmul.f32 %v614, 0.70710677
        %v865 = vmul.f32 %v725, 0.70710677
        %v866 = vmul.f32 %v727, 0.70710677
        %v867 = vmul.f32 %v618, 0.70710677
        %v868 = vmul.f32 %v620, 0.70710677
        %v869 = vmul.f32 %v731, 0.70710677
        %v870 = vmul.f32 %v733, 0.70710677
        %v871 = vmul.f32 %v622, 0.70710677
        %v872 = vmul.f32 %v624, 0.70710677
        %v873 = vmul.f32 %v735, 0.70710677
        %v874 = vmul.f32 %v737, 0.70710677
        %v875 = vmul.f32 %v628, 0.70710677
        %v876 = vmul.f32 %v630, 0.70710677
        %v877 = vmul.f32 %v741, 0.70710677
        %v878 = vmul.f32 %v743, 0.70710677
        %v879 = vmul.f32 %v632, 0.70710677
        %v880 = vmul.f32 %v634, 0.70710677
        %v881 = vmul.f32 %v745, 0.70710677
        %v882 = vmul.f32 %v747, 0.70710677
        %v883 = vmul.f32 %v638, 0.70710677
        %v884 = vmul.f32 %v640, 0.70710677
        %v885 = vmul.f32 %v751, 0.70710677
        %v886 = vmul.f32 %v753, 0.70710677
        %v887 = vmul.f32 %v642, 0.70710677
        %v888 = vmul.f32 %v644, 0.70710677
        %v889 = vmul.f32 %v755, 0.70710677
        %v890 = vmul.f32 %v757, 0.70710677
        %v891 = vmul.f32 %v648, 0.70710677
        %v892 = vmul.f32 %v650, 0.70710677
        %v893 = vmul.f32 %v761, 0.70710677
        %v894 = vmul.f32 %v763, 0.70710677
        %v895 = vmul.f32 %v652, 0.70710677
        %v896 = vmul.f32 %v654, 0.70710677
        %v897 = vmul.f32 %v765, 0.70710677
        %v898 = vmul.f32 %v767, 0.70710677
        %v899 = vmul.f32 %v658, 0.70710677
        %v900 = vmul.f32 %v660, 0.70710677
        %v901 = vmul.f32 %v771, 0.70710677
        %v902 = vmul.f32 %v773, 0.70710677
        %v903 = vmul.f32 %v662, 0.70710677
        %v904 = vmul.f32 %v664, 0.70710677
        %v905 = vmul.f32 %v775, 0.70710677
        %v906 = vmul.f32 %v777, 0.70710677
        %v907 = vand.u32 2147483647, %v843
        %v908 = vand.u32 2147483647, %v844
        %v909 = vand.u32 2147483647, %v845
        %v910 = vand.u32 2147483647, %v846
        %v911 = vand.u32 2147483647, %v847
        %v912 = vand.u32 2147483647, %v848
        %v913 = vand.u32 2147483647, %v849
        %v914 = vand.u32 2147483647, %v850
        %v915 = vand.u32 2147483647, %v851
        %v916 = vand.u32 2147483647, %v852
        %v917 = vand.u32 2147483647, %v853
        %v918 = vand.u32 2147483647, %v854
        %v919 = vand.u32 2147483647, %v855
        %v920 = vand.u32 2147483647, %v856
        %v921 = vand.u32 2147483647, %v857
        %v922 = vand.u32 2147483647, %v858
        %v923 = vand.u32 2147483647, %v859
        %v924 = vand.u32 2147483647, %v860
        %v925 = vand.u32 2147483647, %v861
        %v926 = vand.u32 2147483647, %v862
        %v927 = vand.u32 2147483647, %v863
        %v928 = vand.u32 2147483647, %v864
        %v929 = vand.u32 2147483647, %v865
        %v930 = vand.u32 2147483647, %v866
        %v931 = vand.u32 2147483647, %v867
        %v932 = vand.u32 2147483647, %v868
        %v933 = vand.u32 2147483647, %v869
        %v934 = vand.u32 2147483647, %v870
        %v935 = vand.u32 2147483647, %v871
        %v936 = vand.u32 2147483647, %v872
        %v937 = vand.u32 2147483647, %v873
        %v938 = vand.u32 2147483647, %v874
        %v939 = vand.u32 2147483647, %v875
        %v940 = vand.u32 2147483647, %v876
        %v941 = vand.u32 2147483647, %v877
        %v942 = vand.u32 2147483647, %v878
        %v943 = vand.u32 2147483647, %v879
        %v944 = vand.u32 2147483647, %v880
        %v945 = vand.u32 2147483647, %v881
        %v946 = vand.u32 2147483647, %v882
        %v947 = vand.u32 2147483647, %v883
        %v948 = vand.u32 2147483647, %v884
        %v949 = vand.u32 2147483647, %v885
        %v950 = vand.u32 2147483647, %v886
        %v951 = vand.u32 2147483647, %v887
        %v952 = vand.u32 2147483647, %v888
        %v953 = vand.u32 2147483647, %v889
        %v954 = vand.u32 2147483647, %v890
        %v955 = vand.u32 2147483647, %v891
        %v956 = vand.u32 2147483647, %v892
        %v957 = vand.u32 2147483647, %v893
        %v958 = vand.u32 2147483647, %v894
        %v959 = vand.u32 2147483647, %v895
        %v960 = vand.u32 2147483647, %v896
        %v961 = vand.u32 2147483647, %v897
        %v962 = vand.u32 2147483647, %v898
        %v963 = vand.u32 2147483647, %v899
        %v964 = vand.u32 2147483647, %v900
        %v965 = vand.u32 2147483647, %v901
        %v966 = vand.u32 2147483647, %v902
        %v967 = vand.u32 2147483647, %v903
        %v968 = vand.u32 2147483647, %v904
        %v969 = vand.u32 2147483647, %v905
        %v970 = vand.u32 2147483647, %v906
        %v971 = vmul.f32 %v907, 0.3275911
        %v972 = vmul.f32 %v908, 0.3275911
        %v973 = vmul.f32 %v909, 0.3275911
        %v974 = vmul.f32 %v910, 0.3275911
        %v975 = vmul.f32 %v911, 0.3275911
        %v976 = vmul.f32 %v912, 0.3275911
        %v977 = vmul.f32 %v913, 0.3275911
        %v978 = vmul.f32 %v914, 0.3275911
        %v979 = vmul.f32 %v915, 0.3275911
        %v980 = vmul.f32 %v916, 0.3275911
        %v981 = vmul.f32 %v917, 0.3275911
        %v982 = vmul.f32 %v918, 0.3275911
        %v983 = vmul.f32 %v919, 0.3275911
        %v984 = vmul.f32 %v920, 0.3275911
        %v985 = vmul.f32 %v921, 0.3275911
        %v986 = vmul.f32 %v922, 0.3275911
        %v987 = vmul.f32 %v923, 0.3275911
        %v988 = vmul.f32 %v924, 0.3275911
        %v989 = vmul.f32 %v925, 0.3275911
        %v990 = vmul.f32 %v926, 0.3275911
        %v991 = vmul.f32 %v927, 0.3275911
        %v992 = vmul.f32 %v928, 0.3275911
        %v993 = vmul.f32 %v929, 0.3275911
        %v994 = vmul.f32 %v930, 0.3275911
        %v995 = vmul.f32 %v931, 0.3275911
        %v996 = vmul.f32 %v932, 0.3275911
        %v997 = vmul.f32 %v933, 0.3275911
        %v998 = vmul.f32 %v934, 0.3275911
        %v999 = vmul.f32 %v935, 0.3275911
        %v1000 = vmul.f32 %v936, 0.3275911
        %v1001 = vmul.f32 %v937, 0.3275911
        %v1002 = vmul.f32 %v938, 0.3275911
        %v1003 = vmul.f32 %v939, 0.3275911
        %v1004 = vmul.f32 %v940, 0.3275911
        %v1005 = vmul.f32 %v941, 0.3275911
        %v1006 = vmul.f32 %v942, 0.3275911
        %v1007 = vmul.f32 %v943, 0.3275911
        %v1008 = vmul.f32 %v944, 0.3275911
        %v1009 = vmul.f32 %v945, 0.3275911
        %v1010 = vmul.f32 %v946, 0.3275911
        %v1011 = vmul.f32 %v947, 0.3275911
        %v1012 = vmul.f32 %v948, 0.3275911
        %v1013 = vmul.f32 %v949, 0.3275911
        %v1014 = vmul.f32 %v950, 0.3275911
        %v1015 = vmul.f32 %v951, 0.3275911
        %v1016 = vmul.f32 %v952, 0.3275911
        %v1017 = vmul.f32 %v953, 0.3275911
        %v1018 = vmul.f32 %v954, 0.3275911
        %v1019 = vmul.f32 %v955, 0.3275911
        %v1020 = vmul.f32 %v956, 0.3275911
        %v1021 = vmul.f32 %v957, 0.3275911
        %v1022 = vmul.f32 %v958, 0.3275911
        %v1023 = vmul.f32 %v959, 0.3275911
        %v1024 = vmul.f32 %v960, 0.3275911
        %v1025 = vmul.f32 %v961, 0.3275911
        %v1026 = vmul.f32 %v962, 0.3275911
        %v1027 = vmul.f32 %v963, 0.3275911
        %v1028 = vmul.f32 %v964, 0.3275911
        %v1029 = vmul.f32 %v965, 0.3275911
        %v1030 = vmul.f32 %v966, 0.3275911
        %v1031 = vmul.f32 %v967, 0.3275911
        %v1032 = vmul.f32 %v968, 0.3275911
        %v1033 = vmul.f32 %v969, 0.3275911
        %v1034 = vmul.f32 %v970, 0.3275911
        %v1035 = vadd.f32 %v971, 1.0
        %v1036 = vadd.f32 %v972, 1.0
        %v1037 = vadd.f32 %v973, 1.0
        %v1038 = vadd.f32 %v974, 1.0
        %v1039 = vadd.f32 %v975, 1.0
        %v1040 = vadd.f32 %v976, 1.0
        %v1041 = vadd.f32 %v977, 1.0
        %v1042 = vadd.f32 %v978, 1.0
        %v1043 = vadd.f32 %v979, 1.0
        %v1044 = vadd.f32 %v980, 1.0
        %v1045 = vadd.f32 %v981, 1.0
        %v1046 = vadd.f32 %v982, 1.0
        %v1047 = vadd.f32 %v983, 1.0
        %v1048 = vadd.f32 %v984, 1.0
        %v1049 = vadd.f32 %v985, 1.0
        %v1050 = vadd.f32 %v986, 1.0
        %v1051 = vadd.f32 %v987, 1.0
        %v1052 = vadd.f32 %v988, 1.0
        %v1053 = vadd.f32 %v989, 1.0
        %v1054 = vadd.f32 %v990, 1.0
        %v1055 = vadd.f32 %v991, 1.0
        %v1056 = vadd.f32 %v992, 1.0
        %v1057 = vadd.f32 %v993, 1.0
        %v1058 = vadd.f32 %v994, 1.0
        %v1059 = vadd.f32 %v995, 1.0
        %v1060 = vadd.f32 %v996, 1.0
        %v1061 = vadd.f32 %v997, 1.0
        %v1062 = vadd.f32 %v998, 1.0
        %v1063 = vadd.f32 %v999, 1.0
        %v1064 = vadd.f32 %v1000, 1.0
        %v1065 = vadd.f32 %v1001, 1.0
        %v1066 = vadd.f32 %v1002, 1.0
        %v1067 = vadd.f32 %v1003, 1.0
        %v1068 = vadd.f32 %v1004, 1.0
        %v1069 = vadd.f32 %v1005, 1.0
        %v1070 = vadd.f32 %v1006, 1.0
        %v1071 = vadd.f32 %v1007, 1.0
        %v1072 = vadd.f32 %v1008, 1.0
        %v1073 = vadd.f32 %v1009, 1.0
        %v1074 = vadd.f32 %v1010, 1.0
        %v1075 = vadd.f32 %v1011, 1.0
        %v1076 = vadd.f32 %v1012, 1.0
        %v1077 = vadd.f32 %v1013, 1.0
        %v1078 = vadd.f32 %v1014, 1.0
        %v1079 = vadd.f32 %v1015, 1.0
        %v1080 = vadd.f32 %v1016, 1.0
        %v1081 = vadd.f32 %v1017, 1.0
        %v1082 = vadd.f32 %v1018, 1.0
        %v1083 = vadd.f32 %v1019, 1.0
        %v1084 = vadd.f32 %v1020, 1.0
        %v1085 = vadd.f32 %v1021, 1.0
        %v1086 = vadd.f32 %v1022, 1.0
        %v1087 = vadd.f32 %v1023, 1.0
        %v1088 = vadd.f32 %v1024, 1.0
        %v1089 = vadd.f32 %v1025, 1.0
        %v1090 = vadd.f32 %v1026, 1.0
        %v1091 = vadd.f32 %v1027, 1.0
        %v1092 = vadd.f32 %v1028, 1.0
        %v1093 = vadd.f32 %v1029, 1.0
        %v1094 = vadd.f32 %v1030, 1.0
        %v1095 = vadd.f32 %v1031, 1.0
        %v1096 = vadd.f32 %v1032, 1.0
        %v1097 = vadd.f32 %v1033, 1.0
        %v1098 = vadd.f32 %v1034, 1.0
        %v1099 = vrcp.pop %v1035
        %v1100 = vrcp.pop %v1036
        %v1101 = vrcp.pop %v1037
        %v1102 = vrcp.pop %v1038
        %v1103 = vrcp.pop %v1039
        %v1104 = vrcp.pop %v1040
        %v1105 = vrcp.pop %v1041
        %v1106 = vrcp.pop %v1042
        %v1107 = vrcp.pop %v1043
        %v1108 = vrcp.pop %v1044
        %v1109 = vrcp.pop %v1045
        %v1110 = vrcp.pop %v1046
        %v1111 = vrcp.pop %v1047
        %v1112 = vrcp.pop %v1048
        %v1113 = vrcp.pop %v1049
        %v1114 = vrcp.pop %v1050
        %v1115 = vrcp.pop %v1051
        %v1116 = vrcp.pop %v1052
        %v1117 = vrcp.pop %v1053
        %v1118 = vrcp.pop %v1054
        %v1119 = vrcp.pop %v1055
        %v1120 = vrcp.pop %v1056
        %v1121 = vrcp.pop %v1057
        %v1122 = vrcp.pop %v1058
        %v1123 = vrcp.pop %v1059
        %v1124 = vrcp.pop %v1060
        %v1125 = vrcp.pop %v1061
        %v1126 = vrcp.pop %v1062
        %v1127 = vrcp.pop %v1063
        %v1128 = vrcp.pop %v1064
        %v1129 = vrcp.pop %v1065
        %v1130 = vrcp.pop %v1066
        %v1131 = vrcp.pop %v1067
        %v1132 = vrcp.pop %v1068
        %v1133 = vrcp.pop %v1069
        %v1134 = vrcp.pop %v1070
        %v1135 = vrcp.pop %v1071
        %v1136 = vrcp.pop %v1072
        %v1137 = vrcp.pop %v1073
        %v1138 = vrcp.pop %v1074
        %v1139 = vrcp.pop %v1075
        %v1140 = vrcp.pop %v1076
        %v1141 = vrcp.pop %v1077
        %v1142 = vrcp.pop %v1078
        %v1143 = vrcp.pop %v1079
        %v1144 = vrcp.pop %v1080
        %v1145 = vrcp.pop %v1081
        %v1146 = vrcp.pop %v1082
        %v1147 = vrcp.pop %v1083
        %v1148 = vrcp.pop %v1084
        %v1149 = vrcp.pop %v1085
        %v1150 = vrcp.pop %v1086
        %v1151 = vrcp.pop %v1087
        %v1152 = vrcp.pop %v1088
        %v1153 = vrcp.pop %v1089
        %v1154 = vrcp.pop %v1090
        %v1155 = vrcp.pop %v1091
        %v1156 = vrcp.pop %v1092
        %v1157 = vrcp.pop %v1093
        %v1158 = vrcp.pop %v1094
        %v1159 = vrcp.pop %v1095
        %v1160 = vrcp.pop %v1096
        %v1161 = vrcp.pop %v1097
        %v1162 = vrcp.pop %v1098
        %v1163 = vmul.f32 %v1099, 1.0614054
        %v1164 = vmul.f32 %v1100, 1.0614054
        %v1165 = vmul.f32 %v1101, 1.0614054
        %v1166 = vmul.f32 %v1102, 1.0614054
        %v1167 = vmul.f32 %v1103, 1.0614054
        %v1168 = vmul.f32 %v1104, 1.0614054
        %v1169 = vmul.f32 %v1105, 1.0614054
        %v1170 = vmul.f32 %v1106, 1.0614054
        %v1171 = vmul.f32 %v1107, 1.0614054
        %v1172 = vmul.f32 %v1108, 1.0614054
        %v1173 = vmul.f32 %v1109, 1.0614054
        %v1174 = vmul.f32 %v1110, 1.0614054
        %v1175 = vmul.f32 %v1111, 1.0614054
        %v1176 = vmul.f32 %v1112, 1.0614054
        %v1177 = vmul.f32 %v1113, 1.0614054
        %v1178 = vmul.f32 %v1114, 1.0614054
        %v1179 = vmul.f32 %v1115, 1.0614054
        %v1180 = vmul.f32 %v1116, 1.0614054
        %v1181 = vmul.f32 %v1117, 1.0614054
        %v1182 = vmul.f32 %v1118, 1.0614054
        %v1183 = vmul.f32 %v1119, 1.0614054
        %v1184 = vmul.f32 %v1120, 1.0614054
        %v1185 = vmul.f32 %v1121, 1.0614054
        %v1186 = vmul.f32 %v1122, 1.0614054
        %v1187 = vmul.f32 %v1123, 1.0614054
        %v1188 = vmul.f32 %v1124, 1.0614054
        %v1189 = vmul.f32 %v1125, 1.0614054
        %v1190 = vmul.f32 %v1126, 1.0614054
        %v1191 = vmul.f32 %v1127, 1.0614054
        %v1192 = vmul.f32 %v1128, 1.0614054
        %v1193 = vmul.f32 %v1129, 1.0614054
        %v1194 = vmul.f32 %v1130, 1.0614054
        %v1195 = vmul.f32 %v1131, 1.0614054
        %v1196 = vmul.f32 %v1132, 1.0614054
        %v1197 = vmul.f32 %v1133, 1.0614054
        %v1198 = vmul.f32 %v1134, 1.0614054
        %v1199 = vmul.f32 %v1135, 1.0614054
        %v1200 = vmul.f32 %v1136, 1.0614054
        %v1201 = vmul.f32 %v1137, 1.0614054
        %v1202 = vmul.f32 %v1138, 1.0614054
        %v1203 = vmul.f32 %v1139, 1.0614054
        %v1204 = vmul.f32 %v1140, 1.0614054
        %v1205 = vmul.f32 %v1141, 1.0614054
        %v1206 = vmul.f32 %v1142, 1.0614054
        %v1207 = vmul.f32 %v1143, 1.0614054
        %v1208 = vmul.f32 %v1144, 1.0614054
        %v1209 = vmul.f32 %v1145, 1.0614054
        %v1210 = vmul.f32 %v1146, 1.0614054
        %v1211 = vmul.f32 %v1147, 1.0614054
        %v1212 = vmul.f32 %v1148, 1.0614054
        %v1213 = vmul.f32 %v1149, 1.0614054
        %v1214 = vmul.f32 %v1150, 1.0614054
        %v1215 = vmul.f32 %v1151, 1.0614054
        %v1216 = vmul.f32 %v1152, 1.0614054
        %v1217 = vmul.f32 %v1153, 1.0614054
        %v1218 = vmul.f32 %v1154, 1.0614054
        %v1219 = vmul.f32 %v1155, 1.0614054
        %v1220 = vmul.f32 %v1156, 1.0614054
        %v1221 = vmul.f32 %v1157, 1.0614054
        %v1222 = vmul.f32 %v1158, 1.0614054
        %v1223 = vmul.f32 %v1159, 1.0614054
        %v1224 = vmul.f32 %v1160, 1.0614054
        %v1225 = vmul.f32 %v1161, 1.0614054
        %v1226 = vmul.f32 %v1162, 1.0614054
        %v1227 = vadd.f32 %v1163, -1.4531521
        %v1228 = vadd.f32 %v1164, -1.4531521
        %v1229 = vadd.f32 %v1165, -1.4531521
        %v1230 = vadd.f32 %v1166, -1.4531521
        %v1231 = vadd.f32 %v1167, -1.4531521
        %v1232 = vadd.f32 %v1168, -1.4531521
        %v1233 = vadd.f32 %v1169, -1.4531521
        %v1234 = vadd.f32 %v1170, -1.4531521
        %v1235 = vadd.f32 %v1171, -1.4531521
        %v1236 = vadd.f32 %v1172, -1.4531521
        %v1237 = vadd.f32 %v1173, -1.4531521
        %v1238 = vadd.f32 %v1174, -1.4531521
        %v1239 = vadd.f32 %v1175, -1.4531521
        %v1240 = vadd.f32 %v1176, -1.4531521
        %v1241 = vadd.f32 %v1177, -1.4531521
        %v1242 = vadd.f32 %v1178, -1.4531521
        %v1243 = vadd.f32 %v1179, -1.4531521
        %v1244 = vadd.f32 %v1180, -1.4531521
        %v1245 = vadd.f32 %v1181, -1.4531521
        %v1246 = vadd.f32 %v1182, -1.4531521
        %v1247 = vadd.f32 %v1183, -1.4531521
        %v1248 = vadd.f32 %v1184, -1.4531521
        %v1249 = vadd.f32 %v1185, -1.4531521
        %v1250 = vadd.f32 %v1186, -1.4531521
        %v1251 = vadd.f32 %v1187, -1.4531521
        %v1252 = vadd.f32 %v1188, -1.4531521
        %v1253 = vadd.f32 %v1189, -1.4531521
        %v1254 = vadd.f32 %v1190, -1.4531521
        %v1255 = vadd.f32 %v1191, -1.4531521
        %v1256 = vadd.f32 %v1192, -1.4531521
        %v1257 = vadd.f32 %v1193, -1.4531521
        %v1258 = vadd.f32 %v1194, -1.4531521
        %v1259 = vadd.f32 %v1195, -1.4531521
        %v1260 = vadd.f32 %v1196, -1.4531521
        %v1261 = vadd.f32 %v1197, -1.4531521
        %v1262 = vadd.f32 %v1198, -1.4531521
        %v1263 = vadd.f32 %v1199, -1.4531521
        %v1264 = vadd.f32 %v1200, -1.4531521
        %v1265 = vadd.f32 %v1201, -1.4531521
        %v1266 = vadd.f32 %v1202, -1.4531521
        %v1267 = vadd.f32 %v1203, -1.4531521
        %v1268 = vadd.f32 %v1204, -1.4531521
        %v1269 = vadd.f32 %v1205, -1.4531521
        %v1270 = vadd.f32 %v1206, -1.4531521
        %v1271 = vadd.f32 %v1207, -1.4531521
        %v1272 = vadd.f32 %v1208, -1.4531521
        %v1273 = vadd.f32 %v1209, -1.4531521
        %v1274 = vadd.f32 %v1210, -1.4531521
        %v1275 = vadd.f32 %v1211, -1.4531521
        %v1276 = vadd.f32 %v1212, -1.4531521
        %v1277 = vadd.f32 %v1213, -1.4531521
        %v1278 = vadd.f32 %v1214, -1.4531521
        %v1279 = vadd.f32 %v1215, -1.4531521
        %v1280 = vadd.f32 %v1216, -1.4531521
        %v1281 = vadd.f32 %v1217, -1.4531521
        %v1282 = vadd.f32 %v1218, -1.4531521
        %v1283 = vadd.f32 %v1219, -1.4531521
        %v1284 = vadd.f32 %v1220, -1.4531521
        %v1285 = vadd.f32 %v1221, -1.4531521
        %v1286 = vadd.f32 %v1222, -1.4531521
        %v1287 = vadd.f32 %v1223, -1.4531521
        %v1288 = vadd.f32 %v1224, -1.4531521
        %v1289 = vadd.f32 %v1225, -1.4531521
        %v1290 = vadd.f32 %v1226, -1.4531521
        %v1291 = vmul.f32 %v1227, %v1099
        %v1292 = vmul.f32 %v1228, %v1100
        %v1293 = vmul.f32 %v1229, %v1101
        %v1294 = vmul.f32 %v1230, %v1102
        %v1295 = vmul.f32 %v1231, %v1103
        %v1296 = vmul.f32 %v1232, %v1104
        %v1297 = vmul.f32 %v1233, %v1105
        %v1298 = vmul.f32 %v1234, %v1106
        %v1299 = vmul.f32 %v1235, %v1107
        %v1300 = vmul.f32 %v1236, %v1108
        %v1301 = vmul.f32 %v1237, %v1109
        %v1302 = vmul.f32 %v1238, %v1110
        %v1303 = vmul.f32 %v1239, %v1111
        %v1304 = vmul.f32 %v1240, %v1112
        %v1305 = vmul.f32 %v1241, %v1113
        %v1306 = vmul.f32 %v1242, %v1114
        %v1307 = vmul.f32 %v1243, %v1115
        %v1308 = vmul.f32 %v1244, %v1116
        %v1309 = vmul.f32 %v1245, %v1117
        %v1310 = vmul.f32 %v1246, %v1118
        %v1311 = vmul.f32 %v1247, %v1119
        %v1312 = vmul.f32 %v1248, %v1120
        %v1313 = vmul.f32 %v1249, %v1121
        %v1314 = vmul.f32 %v1250, %v1122
        %v1315 = vmul.f32 %v1251, %v1123
        %v1316 = vmul.f32 %v1252, %v1124
        %v1317 = vmul.f32 %v1253, %v1125
        %v1318 = vmul.f32 %v1254, %v1126
        %v1319 = vmul.f32 %v1255, %v1127
        %v1320 = vmul.f32 %v1256, %v1128
        %v1321 = vmul.f32 %v1257, %v1129
        %v1322 = vmul.f32 %v1258, %v1130
        %v1323 = vmul.f32 %v1259, %v1131
        %v1324 = vmul.f32 %v1260, %v1132
        %v1325 = vmul.f32 %v1261, %v1133
        %v1326 = vmul.f32 %v1262, %v1134
        %v1327 = vmul.f32 %v1263, %v1135
        %v1328 = vmul.f32 %v1264, %v1136
        %v1329 = vmul.f32 %v1265, %v1137
        %v1330 = vmul.f32 %v1266, %v1138
        %v1331 = vmul.f32 %v1267, %v1139
        %v1332 = vmul.f32 %v1268, %v1140
        %v1333 = vmul.f32 %v1269, %v1141
        %v1334 = vmul.f32 %v1270, %v1142
        %v1335 = vmul.f32 %v1271, %v1143
        %v1336 = vmul.f32 %v1272, %v1144
        %v1337 = vmul.f32 %v1273, %v1145
        %v1338 = vmul.f32 %v1274, %v1146
        %v1339 = vmul.f32 %v1275, %v1147
        %v1340 = vmul.f32 %v1276, %v1148
        %v1341 = vmul.f32 %v1277, %v1149
        %v1342 = vmul.f32 %v1278, %v1150
        %v1343 = vmul.f32 %v1279, %v1151
        %v1344 = vmul.f32 %v1280, %v1152
        %v1345 = vmul.f32 %v1281, %v1153
        %v1346 = vmul.f32 %v1282, %v1154
        %v1347 = vmul.f32 %v1283, %v1155
        %v1348 = vmul.f32 %v1284, %v1156
        %v1349 = vmul.f32 %v1285, %v1157
        %v1350 = vmul.f32 %v1286, %v1158
        %v1351 = vmul.f32 %v1287, %v1159
        %v1352 = vmul.f32 %v1288, %v1160
        %v1353 = vmul.f32 %v1289, %v1161
        %v1354 = vmul.f32 %v1290, %v1162
        %v1355 = vadd.f32 %v1291, 1.4214138
        %v1356 = vadd.f32 %v1292, 1.4214138
        %v1357 = vadd.f32 %v1293, 1.4214138
        %v1358 = vadd.f32 %v1294, 1.4214138
        %v1359 = vadd.f32 %v1295, 1.4214138
        %v1360 = vadd.f32 %v1296, 1.4214138
        %v1361 = vadd.f32 %v1297, 1.4214138
        %v1362 = vadd.f32 %v1298, 1.4214138
        %v1363 = vadd.f32 %v1299, 1.4214138
        %v1364 = vadd.f32 %v1300, 1.4214138
        %v1365 = vadd.f32 %v1301, 1.4214138
        %v1366 = vadd.f32 %v1302, 1.4214138
        %v1367 = vadd.f32 %v1303, 1.4214138
        %v1368 = vadd.f32 %v1304, 1.4214138
        %v1369 = vadd.f32 %v1305, 1.4214138
        %v1370 = vadd.f32 %v1306, 1.4214138
        %v1371 = vadd.f32 %v1307, 1.4214138
        %v1372 = vadd.f32 %v1308, 1.4214138
        %v1373 = vadd.f32 %v1309, 1.4214138
        %v1374 = vadd.f32 %v1310, 1.4214138
        %v1375 = vadd.f32 %v1311, 1.4214138
        %v1376 = vadd.f32 %v1312, 1.4214138
        %v1377 = vadd.f32 %v1313, 1.4214138
        %v1378 = vadd.f32 %v1314, 1.4214138
        %v1379 = vadd.f32 %v1315, 1.4214138
        %v1380 = vadd.f32 %v1316, 1.4214138
        %v1381 = vadd.f32 %v1317, 1.4214138
        %v1382 = vadd.f32 %v1318, 1.4214138
        %v1383 = vadd.f32 %v1319, 1.4214138
        %v1384 = vadd.f32 %v1320, 1.4214138
        %v1385 = vadd.f32 %v1321, 1.4214138
        %v1386 = vadd.f32 %v1322, 1.4214138
        %v1387 = vadd.f32 %v1323, 1.4214138
        %v1388 = vadd.f32 %v1324, 1.4214138
        %v1389 = vadd.f32 %v1325, 1.4214138
        %v1390 = vadd.f32 %v1326, 1.4214138
        %v1391 = vadd.f32 %v1327, 1.4214138
        %v1392 = vadd.f32 %v1328, 1.4214138
        %v1393 = vadd.f32 %v1329, 1.4214138
        %v1394 = vadd.f32 %v1330, 1.4214138
        %v1395 = vadd.f32 %v1331, 1.4214138
        %v1396 = vadd.f32 %v1332, 1.4214138
        %v1397 = vadd.f32 %v1333, 1.4214138
        %v1398 = vadd.f32 %v1334, 1.4214138
        %v1399 = vadd.f32 %v1335, 1.4214138
        %v1400 = vadd.f32 %v1336, 1.4214138
        %v1401 = vadd.f32 %v1337, 1.4214138
        %v1402 = vadd.f32 %v1338, 1.4214138
        %v1403 = vadd.f32 %v1339, 1.4214138
        %v1404 = vadd.f32 %v1340, 1.4214138
        %v1405 = vadd.f32 %v1341, 1.4214138
        %v1406 = vadd.f32 %v1342, 1.4214138
        %v1407 = vadd.f32 %v1343, 1.4214138
        %v1408 = vadd.f32 %v1344, 1.4214138
        %v1409 = vadd.f32 %v1345, 1.4214138
        %v1410 = vadd.f32 %v1346, 1.4214138
        %v1411 = vadd.f32 %v1347, 1.4214138
        %v1412 = vadd.f32 %v1348, 1.4214138
        %v1413 = vadd.f32 %v1349, 1.4214138
        %v1414 = vadd.f32 %v1350, 1.4214138
        %v1415 = vadd.f32 %v1351, 1.4214138
        %v1416 = vadd.f32 %v1352, 1.4214138
        %v1417 = vadd.f32 %v1353, 1.4214138
        %v1418 = vadd.f32 %v1354, 1.4214138
        %v1419 = vmul.f32 %v1355, %v1099
        %v1420 = vmul.f32 %v1356, %v1100
        %v1421 = vmul.f32 %v1357, %v1101
        %v1422 = vmul.f32 %v1358, %v1102
        %v1423 = vmul.f32 %v1359, %v1103
        %v1424 = vmul.f32 %v1360, %v1104
        %v1425 = vmul.f32 %v1361, %v1105
        %v1426 = vmul.f32 %v1362, %v1106
        %v1427 = vmul.f32 %v1363, %v1107
        %v1428 = vmul.f32 %v1364, %v1108
        %v1429 = vmul.f32 %v1365, %v1109
        %v1430 = vmul.f32 %v1366, %v1110
        %v1431 = vmul.f32 %v1367, %v1111
        %v1432 = vmul.f32 %v1368, %v1112
        %v1433 = vmul.f32 %v1369, %v1113
        %v1434 = vmul.f32 %v1370, %v1114
        %v1435 = vmul.f32 %v1371, %v1115
        %v1436 = vmul.f32 %v1372, %v1116
        %v1437 = vmul.f32 %v1373, %v1117
        %v1438 = vmul.f32 %v1374, %v1118
        %v1439 = vmul.f32 %v1375, %v1119
        %v1440 = vmul.f32 %v1376, %v1120
        %v1441 = vmul.f32 %v1377, %v1121
        %v1442 = vmul.f32 %v1378, %v1122
        %v1443 = vmul.f32 %v1379, %v1123
        %v1444 = vmul.f32 %v1380, %v1124
        %v1445 = vmul.f32 %v1381, %v1125
        %v1446 = vmul.f32 %v1382, %v1126
        %v1447 = vmul.f32 %v1383, %v1127
        %v1448 = vmul.f32 %v1384, %v1128
        %v1449 = vmul.f32 %v1385, %v1129
        %v1450 = vmul.f32 %v1386, %v1130
        %v1451 = vmul.f32 %v1387, %v1131
        %v1452 = vmul.f32 %v1388, %v1132
        %v1453 = vmul.f32 %v1389, %v1133
        %v1454 = vmul.f32 %v1390, %v1134
        %v1455 = vmul.f32 %v1391, %v1135
        %v1456 = vmul.f32 %v1392, %v1136
        %v1457 = vmul.f32 %v1393, %v1137
        %v1458 = vmul.f32 %v1394, %v1138
        %v1459 = vmul.f32 %v1395, %v1139
        %v1460 = vmul.f32 %v1396, %v1140
        %v1461 = vmul.f32 %v1397, %v1141
        %v1462 = vmul.f32 %v1398, %v1142
        %v1463 = vmul.f32 %v1399, %v1143
        %v1464 = vmul.f32 %v1400, %v1144
        %v1465 = vmul.f32 %v1401, %v1145
        %v1466 = vmul.f32 %v1402, %v1146
        %v1467 = vmul.f32 %v1403, %v1147
        %v1468 = vmul.f32 %v1404, %v1148
        %v1469 = vmul.f32 %v1405, %v1149
        %v1470 = vmul.f32 %v1406, %v1150
        %v1471 = vmul.f32 %v1407, %v1151
        %v1472 = vmul.f32 %v1408, %v1152
        %v1473 = vmul.f32 %v1409, %v1153
        %v1474 = vmul.f32 %v1410, %v1154
        %v1475 = vmul.f32 %v1411, %v1155
        %v1476 = vmul.f32 %v1412, %v1156
        %v1477 = vmul.f32 %v1413, %v1157
        %v1478 = vmul.f32 %v1414, %v1158
        %v1479 = vmul.f32 %v1415, %v1159
        %v1480 = vmul.f32 %v1416, %v1160
        %v1481 = vmul.f32 %v1417, %v1161
        %v1482 = vmul.f32 %v1418, %v1162
        %v1483 = vadd.f32 %v1419, -0.28449672
        %v1484 = vadd.f32 %v1420, -0.28449672
        %v1485 = vadd.f32 %v1421, -0.28449672
        %v1486 = vadd.f32 %v1422, -0.28449672
        %v1487 = vadd.f32 %v1423, -0.28449672
        %v1488 = vadd.f32 %v1424, -0.28449672
        %v1489 = vadd.f32 %v1425, -0.28449672
        %v1490 = vadd.f32 %v1426, -0.28449672
        %v1491 = vadd.f32 %v1427, -0.28449672
        %v1492 = vadd.f32 %v1428, -0.28449672
        %v1493 = vadd.f32 %v1429, -0.28449672
        %v1494 = vadd.f32 %v1430, -0.28449672
        %v1495 = vadd.f32 %v1431, -0.28449672
        %v1496 = vadd.f32 %v1432, -0.28449672
        %v1497 = vadd.f32 %v1433, -0.28449672
        %v1498 = vadd.f32 %v1434, -0.28449672
        %v1499 = vadd.f32 %v1435, -0.28449672
        %v1500 = vadd.f32 %v1436, -0.28449672
        %v1501 = vadd.f32 %v1437, -0.28449672
        %v1502 = vadd.f32 %v1438, -0.28449672
        %v1503 = vadd.f32 %v1439, -0.28449672
        %v1504 = vadd.f32 %v1440, -0.28449672
        %v1505 = vadd.f32 %v1441, -0.28449672
        %v1506 = vadd.f32 %v1442, -0.28449672
        %v1507 = vadd.f32 %v1443, -0.28449672
        %v1508 = vadd.f32 %v1444, -0.28449672
        %v1509 = vadd.f32 %v1445, -0.28449672
        %v1510 = vadd.f32 %v1446, -0.28449672
        %v1511 = vadd.f32 %v1447, -0.28449672
        %v1512 = vadd.f32 %v1448, -0.28449672
        %v1513 = vadd.f32 %v1449, -0.28449672
        %v1514 = vadd.f32 %v1450, -0.28449672
        %v1515 = vadd.f32 %v1451, -0.28449672
        %v1516 = vadd.f32 %v1452, -0.28449672
        %v1517 = vadd.f32 %v1453, -0.28449672
        %v1518 = vadd.f32 %v1454, -0.28449672
        %v1519 = vadd.f32 %v1455, -0.28449672
        %v1520 = vadd.f32 %v1456, -0.28449672
        %v1521 = vadd.f32 %v1457, -0.28449672
        %v1522 = vadd.f32 %v1458, -0.28449672
        %v1523 = vadd.f32 %v1459, -0.28449672
        %v1524 = vadd.f32 %v1460, -0.28449672
        %v1525 = vadd.f32 %v1461, -0.28449672
        %v1526 = vadd.f32 %v1462, -0.28449672
        %v1527 = vadd.f32 %v1463, -0.28449672
        %v1528 = vadd.f32 %v1464, -0.28449672
        %v1529 = vadd.f32 %v1465, -0.28449672
        %v1530 = vadd.f32 %v1466, -0.28449672
        %v1531 = vadd.f32 %v1467, -0.28449672
        %v1532 = vadd.f32 %v1468, -0.28449672
        %v1533 = vadd.f32 %v1469, -0.28449672
        %v1534 = vadd.f32 %v1470, -0.28449672
        %v1535 = vadd.f32 %v1471, -0.28449672
        %v1536 = vadd.f32 %v1472, -0.28449672
        %v1537 = vadd.f32 %v1473, -0.28449672
        %v1538 = vadd.f32 %v1474, -0.28449672
        %v1539 = vadd.f32 %v1475, -0.28449672
        %v1540 = vadd.f32 %v1476, -0.28449672
        %v1541 = vadd.f32 %v1477, -0.28449672
        %v1542 = vadd.f32 %v1478, -0.28449672
        %v1543 = vadd.f32 %v1479, -0.28449672
        %v1544 = vadd.f32 %v1480, -0.28449672
        %v1545 = vadd.f32 %v1481, -0.28449672
        %v1546 = vadd.f32 %v1482, -0.28449672
        %v1547 = vmul.f32 %v1483, %v1099
        %v1548 = vmul.f32 %v1484, %v1100
        %v1549 = vmul.f32 %v1485, %v1101
        %v1550 = vmul.f32 %v1486, %v1102
        %v1551 = vmul.f32 %v1487, %v1103
        %v1552 = vmul.f32 %v1488, %v1104
        %v1553 = vmul.f32 %v1489, %v1105
        %v1554 = vmul.f32 %v1490, %v1106
        %v1555 = vmul.f32 %v1491, %v1107
        %v1556 = vmul.f32 %v1492, %v1108
        %v1557 = vmul.f32 %v1493, %v1109
        %v1558 = vmul.f32 %v1494, %v1110
        %v1559 = vmul.f32 %v1495, %v1111
        %v1560 = vmul.f32 %v1496, %v1112
        %v1561 = vmul.f32 %v1497, %v1113
        %v1562 = vmul.f32 %v1498, %v1114
        %v1563 = vmul.f32 %v1499, %v1115
        %v1564 = vmul.f32 %v1500, %v1116
        %v1565 = vmul.f32 %v1501, %v1117
        %v1566 = vmul.f32 %v1502, %v1118
        %v1567 = vmul.f32 %v1503, %v1119
        %v1568 = vmul.f32 %v1504, %v1120
        %v1569 = vmul.f32 %v1505, %v1121
        %v1570 = vmul.f32 %v1506, %v1122
        %v1571 = vmul.f32 %v1507, %v1123
        %v1572 = vmul.f32 %v1508, %v1124
        %v1573 = vmul.f32 %v1509, %v1125
        %v1574 = vmul.f32 %v1510, %v1126
        %v1575 = vmul.f32 %v1511, %v1127
        %v1576 = vmul.f32 %v1512, %v1128
        %v1577 = vmul.f32 %v1513, %v1129
        %v1578 = vmul.f32 %v1514, %v1130
        %v1579 = vmul.f32 %v1515, %v1131
        %v1580 = vmul.f32 %v1516, %v1132
        %v1581 = vmul.f32 %v1517, %v1133
        %v1582 = vmul.f32 %v1518, %v1134
        %v1583 = vmul.f32 %v1519, %v1135
        %v1584 = vmul.f32 %v1520, %v1136
        %v1585 = vmul.f32 %v1521, %v1137
        %v1586 = vmul.f32 %v1522, %v1138
        %v1587 = vmul.f32 %v1523, %v1139
        %v1588 = vmul.f32 %v1524, %v1140
        %v1589 = vmul.f32 %v1525, %v1141
        %v1590 = vmul.f32 %v1526, %v1142
        %v1591 = vmul.f32 %v1527, %v1143
        %v1592 = vmul.f32 %v1528, %v1144
        %v1593 = vmul.f32 %v1529, %v1145
        %v1594 = vmul.f32 %v1530, %v1146
        %v1595 = vmul.f32 %v1531, %v1147
        %v1596 = vmul.f32 %v1532, %v1148
        %v1597 = vmul.f32 %v1533, %v1149
        %v1598 = vmul.f32 %v1534, %v1150
        %v1599 = vmul.f32 %v1535, %v1151
        %v1600 = vmul.f32 %v1536, %v1152
        %v1601 = vmul.f32 %v1537, %v1153
        %v1602 = vmul.f32 %v1538, %v1154
        %v1603 = vmul.f32 %v1539, %v1155
        %v1604 = vmul.f32 %v1540, %v1156
        %v1605 = vmul.f32 %v1541, %v1157
        %v1606 = vmul.f32 %v1542, %v1158
        %v1607 = vmul.f32 %v1543, %v1159
        %v1608 = vmul.f32 %v1544, %v1160
        %v1609 = vmul.f32 %v1545, %v1161
        %v1610 = vmul.f32 %v1546, %v1162
        %v1611 = vadd.f32 %v1547, 0.2548296
        %v1612 = vadd.f32 %v1548, 0.2548296
        %v1613 = vadd.f32 %v1549, 0.2548296
        %v1614 = vadd.f32 %v1550, 0.2548296
        %v1615 = vadd.f32 %v1551, 0.2548296
        %v1616 = vadd.f32 %v1552, 0.2548296
        %v1617 = vadd.f32 %v1553, 0.2548296
        %v1618 = vadd.f32 %v1554, 0.2548296
        %v1619 = vadd.f32 %v1555, 0.2548296
        %v1620 = vadd.f32 %v1556, 0.2548296
        %v1621 = vadd.f32 %v1557, 0.2548296
        %v1622 = vadd.f32 %v1558, 0.2548296
        %v1623 = vadd.f32 %v1559, 0.2548296
        %v1624 = vadd.f32 %v1560, 0.2548296
        %v1625 = vadd.f32 %v1561, 0.2548296
        %v1626 = vadd.f32 %v1562, 0.2548296
        %v1627 = vadd.f32 %v1563, 0.2548296
        %v1628 = vadd.f32 %v1564, 0.2548296
        %v1629 = vadd.f32 %v1565, 0.2548296
        %v1630 = vadd.f32 %v1566, 0.2548296
        %v1631 = vadd.f32 %v1567, 0.2548296
        %v1632 = vadd.f32 %v1568, 0.2548296
        %v1633 = vadd.f32 %v1569, 0.2548296
        %v1634 = vadd.f32 %v1570, 0.2548296
        %v1635 = vadd.f32 %v1571, 0.2548296
        %v1636 = vadd.f32 %v1572, 0.2548296
        %v1637 = vadd.f32 %v1573, 0.2548296
        %v1638 = vadd.f32 %v1574, 0.2548296
        %v1639 = vadd.f32 %v1575, 0.2548296
        %v1640 = vadd.f32 %v1576, 0.2548296
        %v1641 = vadd.f32 %v1577, 0.2548296
        %v1642 = vadd.f32 %v1578, 0.2548296
        %v1643 = vadd.f32 %v1579, 0.2548296
        %v1644 = vadd.f32 %v1580, 0.2548296
        %v1645 = vadd.f32 %v1581, 0.2548296
        %v1646 = vadd.f32 %v1582, 0.2548296
        %v1647 = vadd.f32 %v1583, 0.2548296
        %v1648 = vadd.f32 %v1584, 0.2548296
        %v1649 = vadd.f32 %v1585, 0.2548296
        %v1650 = vadd.f32 %v1586, 0.2548296
        %v1651 = vadd.f32 %v1587, 0.2548296
        %v1652 = vadd.f32 %v1588, 0.2548296
        %v1653 = vadd.f32 %v1589, 0.2548296
        %v1654 = vadd.f32 %v1590, 0.2548296
        %v1655 = vadd.f32 %v1591, 0.2548296
        %v1656 = vadd.f32 %v1592, 0.2548296
        %v1657 = vadd.f32 %v1593, 0.2548296
        %v1658 = vadd.f32 %v1594, 0.2548296
        %v1659 = vadd.f32 %v1595, 0.2548296
        %v1660 = vadd.f32 %v1596, 0.2548296
        %v1661 = vadd.f32 %v1597, 0.2548296
        %v1662 = vadd.f32 %v1598, 0.2548296
        %v1663 = vadd.f32 %v1599, 0.2548296
        %v1664 = vadd.f32 %v1600, 0.2548296
        %v1665 = vadd.f32 %v1601, 0.2548296
        %v1666 = vadd.f32 %v1602, 0.2548296
        %v1667 = vadd.f32 %v1603, 0.2548296
        %v1668 = vadd.f32 %v1604, 0.2548296
        %v1669 = vadd.f32 %v1605, 0.2548296
        %v1670 = vadd.f32 %v1606, 0.2548296
        %v1671 = vadd.f32 %v1607, 0.2548296
        %v1672 = vadd.f32 %v1608, 0.2548296
        %v1673 = vadd.f32 %v1609, 0.2548296
        %v1674 = vadd.f32 %v1610, 0.2548296
        %v1675 = vmul.f32 %v1611, %v1099
        %v1676 = vmul.f32 %v1612, %v1100
        %v1677 = vmul.f32 %v1613, %v1101
        %v1678 = vmul.f32 %v1614, %v1102
        %v1679 = vmul.f32 %v1615, %v1103
        %v1680 = vmul.f32 %v1616, %v1104
        %v1681 = vmul.f32 %v1617, %v1105
        %v1682 = vmul.f32 %v1618, %v1106
        %v1683 = vmul.f32 %v1619, %v1107
        %v1684 = vmul.f32 %v1620, %v1108
        %v1685 = vmul.f32 %v1621, %v1109
        %v1686 = vmul.f32 %v1622, %v1110
        %v1687 = vmul.f32 %v1623, %v1111
        %v1688 = vmul.f32 %v1624, %v1112
        %v1689 = vmul.f32 %v1625, %v1113
        %v1690 = vmul.f32 %v1626, %v1114
        %v1691 = vmul.f32 %v1627, %v1115
        %v1692 = vmul.f32 %v1628, %v1116
        %v1693 = vmul.f32 %v1629, %v1117
        %v1694 = vmul.f32 %v1630, %v1118
        %v1695 = vmul.f32 %v1631, %v1119
        %v1696 = vmul.f32 %v1632, %v1120
        %v1697 = vmul.f32 %v1633, %v1121
        %v1698 = vmul.f32 %v1634, %v1122
        %v1699 = vmul.f32 %v1635, %v1123
        %v1700 = vmul.f32 %v1636, %v1124
        %v1701 = vmul.f32 %v1637, %v1125
        %v1702 = vmul.f32 %v1638, %v1126
        %v1703 = vmul.f32 %v1639, %v1127
        %v1704 = vmul.f32 %v1640, %v1128
        %v1705 = vmul.f32 %v1641, %v1129
        %v1706 = vmul.f32 %v1642, %v1130
        %v1707 = vmul.f32 %v1643, %v1131
        %v1708 = vmul.f32 %v1644, %v1132
        %v1709 = vmul.f32 %v1645, %v1133
        %v1710 = vmul.f32 %v1646, %v1134
        %v1711 = vmul.f32 %v1647, %v1135
        %v1712 = vmul.f32 %v1648, %v1136
        %v1713 = vmul.f32 %v1649, %v1137
        %v1714 = vmul.f32 %v1650, %v1138
        %v1715 = vmul.f32 %v1651, %v1139
        %v1716 = vmul.f32 %v1652, %v1140
        %v1717 = vmul.f32 %v1653, %v1141
        %v1718 = vmul.f32 %v1654, %v1142
        %v1719 = vmul.f32 %v1655, %v1143
        %v1720 = vmul.f32 %v1656, %v1144
        %v1721 = vmul.f32 %v1657, %v1145
        %v1722 = vmul.f32 %v1658, %v1146
        %v1723 = vmul.f32 %v1659, %v1147
        %v1724 = vmul.f32 %v1660, %v1148
        %v1725 = vmul.f32 %v1661, %v1149
        %v1726 = vmul.f32 %v1662, %v1150
        %v1727 = vmul.f32 %v1663, %v1151
        %v1728 = vmul.f32 %v1664, %v1152
        %v1729 = vmul.f32 %v1665, %v1153
        %v1730 = vmul.f32 %v1666, %v1154
        %v1731 = vmul.f32 %v1667, %v1155
        %v1732 = vmul.f32 %v1668, %v1156
        %v1733 = vmul.f32 %v1669, %v1157
        %v1734 = vmul.f32 %v1670, %v1158
        %v1735 = vmul.f32 %v1671, %v1159
        %v1736 = vmul.f32 %v1672, %v1160
        %v1737 = vmul.f32 %v1673, %v1161
        %v1738 = vmul.f32 %v1674, %v1162
        %v1739 = vsub.f32 0.0, %v907
        %v1740 = vsub.f32 0.0, %v908
        %v1741 = vsub.f32 0.0, %v909
        %v1742 = vsub.f32 0.0, %v910
        %v1743 = vsub.f32 0.0, %v911
        %v1744 = vsub.f32 0.0, %v912
        %v1745 = vsub.f32 0.0, %v913
        %v1746 = vsub.f32 0.0, %v914
        %v1747 = vsub.f32 0.0, %v915
        %v1748 = vsub.f32 0.0, %v916
        %v1749 = vsub.f32 0.0, %v917
        %v1750 = vsub.f32 0.0, %v918
        %v1751 = vsub.f32 0.0, %v919
        %v1752 = vsub.f32 0.0, %v920
        %v1753 = vsub.f32 0.0, %v921
        %v1754 = vsub.f32 0.0, %v922
        %v1755 = vsub.f32 0.0, %v923
        %v1756 = vsub.f32 0.0, %v924
        %v1757 = vsub.f32 0.0, %v925
        %v1758 = vsub.f32 0.0, %v926
        %v1759 = vsub.f32 0.0, %v927
        %v1760 = vsub.f32 0.0, %v928
        %v1761 = vsub.f32 0.0, %v929
        %v1762 = vsub.f32 0.0, %v930
        %v1763 = vsub.f32 0.0, %v931
        %v1764 = vsub.f32 0.0, %v932
        %v1765 = vsub.f32 0.0, %v933
        %v1766 = vsub.f32 0.0, %v934
        %v1767 = vsub.f32 0.0, %v935
        %v1768 = vsub.f32 0.0, %v936
        %v1769 = vsub.f32 0.0, %v937
        %v1770 = vsub.f32 0.0, %v938
        %v1771 = vsub.f32 0.0, %v939
        %v1772 = vsub.f32 0.0, %v940
        %v1773 = vsub.f32 0.0, %v941
        %v1774 = vsub.f32 0.0, %v942
        %v1775 = vsub.f32 0.0, %v943
        %v1776 = vsub.f32 0.0, %v944
        %v1777 = vsub.f32 0.0, %v945
        %v1778 = vsub.f32 0.0, %v946
        %v1779 = vsub.f32 0.0, %v947
        %v1780 = vsub.f32 0.0, %v948
        %v1781 = vsub.f32 0.0, %v949
        %v1782 = vsub.f32 0.0, %v950
        %v1783 = vsub.f32 0.0, %v951
        %v1784 = vsub.f32 0.0, %v952
        %v1785 = vsub.f32 0.0, %v953
        %v1786 = vsub.f32 0.0, %v954
        %v1787 = vsub.f32 0.0, %v955
        %v1788 = vsub.f32 0.0, %v956
        %v1789 = vsub.f32 0.0, %v957
        %v1790 = vsub.f32 0.0, %v958
        %v1791 = vsub.f32 0.0, %v959
        %v1792 = vsub.f32 0.0, %v960
        %v1793 = vsub.f32 0.0, %v961
        %v1794 = vsub.f32 0.0, %v962
        %v1795 = vsub.f32 0.0, %v963
        %v1796 = vsub.f32 0.0, %v964
        %v1797 = vsub.f32 0.0, %v965
        %v1798 = vsub.f32 0.0, %v966
        %v1799 = vsub.f32 0.0, %v967
        %v1800 = vsub.f32 0.0, %v968
        %v1801 = vsub.f32 0.0, %v969
        %v1802 = vsub.f32 0.0, %v970
        %v1803 = vmul.f32 %v1739, %v907
        %v1804 = vmul.f32 %v1740, %v908
        %v1805 = vmul.f32 %v1741, %v909
        %v1806 = vmul.f32 %v1742, %v910
        %v1807 = vmul.f32 %v1743, %v911
        %v1808 = vmul.f32 %v1744, %v912
        %v1809 = vmul.f32 %v1745, %v913
        %v1810 = vmul.f32 %v1746, %v914
        %v1811 = vmul.f32 %v1747, %v915
        %v1812 = vmul.f32 %v1748, %v916
        %v1813 = vmul.f32 %v1749, %v917
        %v1814 = vmul.f32 %v1750, %v918
        %v1815 = vmul.f32 %v1751, %v919
        %v1816 = vmul.f32 %v1752, %v920
        %v1817 = vmul.f32 %v1753, %v921
        %v1818 = vmul.f32 %v1754, %v922
        %v1819 = vmul.f32 %v1755, %v923
        %v1820 = vmul.f32 %v1756, %v924
        %v1821 = vmul.f32 %v1757, %v925
        %v1822 = vmul.f32 %v1758, %v926
        %v1823 = vmul.f32 %v1759, %v927
        %v1824 = vmul.f32 %v1760, %v928
        %v1825 = vmul.f32 %v1761, %v929
        %v1826 = vmul.f32 %v1762, %v930
        %v1827 = vmul.f32 %v1763, %v931
        %v1828 = vmul.f32 %v1764, %v932
        %v1829 = vmul.f32 %v1765, %v933
        %v1830 = vmul.f32 %v1766, %v934
        %v1831 = vmul.f32 %v1767, %v935
        %v1832 = vmul.f32 %v1768, %v936
        %v1833 = vmul.f32 %v1769, %v937
        %v1834 = vmul.f32 %v1770, %v938
        %v1835 = vmul.f32 %v1771, %v939
        %v1836 = vmul.f32 %v1772, %v940
        %v1837 = vmul.f32 %v1773, %v941
        %v1838 = vmul.f32 %v1774, %v942
        %v1839 = vmul.f32 %v1775, %v943
        %v1840 = vmul.f32 %v1776, %v944
        %v1841 = vmul.f32 %v1777, %v945
        %v1842 = vmul.f32 %v1778, %v946
        %v1843 = vmul.f32 %v1779, %v947
        %v1844 = vmul.f32 %v1780, %v948
        %v1845 = vmul.f32 %v1781, %v949
        %v1846 = vmul.f32 %v1782, %v950
        %v1847 = vmul.f32 %v1783, %v951
        %v1848 = vmul.f32 %v1784, %v952
        %v1849 = vmul.f32 %v1785, %v953
        %v1850 = vmul.f32 %v1786, %v954
        %v1851 = vmul.f32 %v1787, %v955
        %v1852 = vmul.f32 %v1788, %v956
        %v1853 = vmul.f32 %v1789, %v957
        %v1854 = vmul.f32 %v1790, %v958
        %v1855 = vmul.f32 %v1791, %v959
        %v1856 = vmul.f32 %v1792, %v960
        %v1857 = vmul.f32 %v1793, %v961
        %v1858 = vmul.f32 %v1794, %v962
        %v1859 = vmul.f32 %v1795, %v963
        %v1860 = vmul.f32 %v1796, %v964
        %v1861 = vmul.f32 %v1797, %v965
        %v1862 = vmul.f32 %v1798, %v966
        %v1863 = vmul.f32 %v1799, %v967
        %v1864 = vmul.f32 %v1800, %v968
        %v1865 = vmul.f32 %v1801, %v969
        %v1866 = vmul.f32 %v1802, %v970
        %v1867 = vmul.f32 %v1803, 1.442695
        %v1868 = vpow.pop %v1867
        %v1869 = vmul.f32 %v1804, 1.442695
        %v1870 = vpow.pop %v1869
        %v1871 = vmul.f32 %v1805, 1.442695
        %v1872 = vpow.pop %v1871
        %v1873 = vmul.f32 %v1806, 1.442695
        %v1874 = vpow.pop %v1873
        %v1875 = vmul.f32 %v1807, 1.442695
        %v1876 = vpow.pop %v1875
        %v1877 = vmul.f32 %v1808, 1.442695
        %v1878 = vpow.pop %v1877
        %v1879 = vmul.f32 %v1809, 1.442695
        %v1880 = vpow.pop %v1879
        %v1881 = vmul.f32 %v1810, 1.442695
        %v1882 = vpow.pop %v1881
        %v1883 = vmul.f32 %v1811, 1.442695
        %v1884 = vpow.pop %v1883
        %v1885 = vmul.f32 %v1812, 1.442695
        %v1886 = vpow.pop %v1885
        %v1887 = vmul.f32 %v1813, 1.442695
        %v1888 = vpow.pop %v1887
        %v1889 = vmul.f32 %v1814, 1.442695
        %v1890 = vpow.pop %v1889
        %v1891 = vmul.f32 %v1815, 1.442695
        %v1892 = vpow.pop %v1891
        %v1893 = vmul.f32 %v1816, 1.442695
        %v1894 = vpow.pop %v1893
        %v1895 = vmul.f32 %v1817, 1.442695
        %v1896 = vpow.pop %v1895
        %v1897 = vmul.f32 %v1818, 1.442695
        %v1898 = vpow.pop %v1897
        %v1899 = vmul.f32 %v1819, 1.442695
        %v1900 = vpow.pop %v1899
        %v1901 = vmul.f32 %v1820, 1.442695
        %v1902 = vpow.pop %v1901
        %v1903 = vmul.f32 %v1821, 1.442695
        %v1904 = vpow.pop %v1903
        %v1905 = vmul.f32 %v1822, 1.442695
        %v1906 = vpow.pop %v1905
        %v1907 = vmul.f32 %v1823, 1.442695
        %v1908 = vpow.pop %v1907
        %v1909 = vmul.f32 %v1824, 1.442695
        %v1910 = vpow.pop %v1909
        %v1911 = vmul.f32 %v1825, 1.442695
        %v1912 = vpow.pop %v1911
        %v1913 = vmul.f32 %v1826, 1.442695
        %v1914 = vpow.pop %v1913
        %v1915 = vmul.f32 %v1827, 1.442695
        %v1916 = vpow.pop %v1915
        %v1917 = vmul.f32 %v1828, 1.442695
        %v1918 = vpow.pop %v1917
        %v1919 = vmul.f32 %v1829, 1.442695
        %v1920 = vpow.pop %v1919
        %v1921 = vmul.f32 %v1830, 1.442695
        %v1922 = vpow.pop %v1921
        %v1923 = vmul.f32 %v1831, 1.442695
        %v1924 = vpow.pop %v1923
        %v1925 = vmul.f32 %v1832, 1.442695
        %v1926 = vpow.pop %v1925
        %v1927 = vmul.f32 %v1833, 1.442695
        %v1928 = vpow.pop %v1927
        %v1929 = vmul.f32 %v1834, 1.442695
        %v1930 = vpow.pop %v1929
        %v1931 = vmul.f32 %v1835, 1.442695
        %v1932 = vpow.pop %v1931
        %v1933 = vmul.f32 %v1836, 1.442695
        %v1934 = vpow.pop %v1933
        %v1935 = vmul.f32 %v1837, 1.442695
        %v1936 = vpow.pop %v1935
        %v1937 = vmul.f32 %v1838, 1.442695
        %v1938 = vpow.pop %v1937
        %v1939 = vmul.f32 %v1839, 1.442695
        %v1940 = vpow.pop %v1939
        %v1941 = vmul.f32 %v1840, 1.442695
        %v1942 = vpow.pop %v1941
        %v1943 = vmul.f32 %v1841, 1.442695
        %v1944 = vpow.pop %v1943
        %v1945 = vmul.f32 %v1842, 1.442695
        %v1946 = vpow.pop %v1945
        %v1947 = vmul.f32 %v1843, 1.442695
        %v1948 = vpow.pop %v1947
        %v1949 = vmul.f32 %v1844, 1.442695
        %v1950 = vpow.pop %v1949
        %v1951 = vmul.f32 %v1845, 1.442695
        %v1952 = vpow.pop %v1951
        %v1953 = vmul.f32 %v1846, 1.442695
        %v1954 = vpow.pop %v1953
        %v1955 = vmul.f32 %v1847, 1.442695
        %v1956 = vpow.pop %v1955
        %v1957 = vmul.f32 %v1848, 1.442695
        %v1958 = vpow.pop %v1957
        %v1959 = vmul.f32 %v1849, 1.442695
        %v1960 = vpow.pop %v1959
        %v1961 = vmul.f32 %v1850, 1.442695
        %v1962 = vpow.pop %v1961
        %v1963 = vmul.f32 %v1851, 1.442695
        %v1964 = vpow.pop %v1963
        %v1965 = vmul.f32 %v1852, 1.442695
        %v1966 = vpow.pop %v1965
        %v1967 = vmul.f32 %v1853, 1.442695
        %v1968 = vpow.pop %v1967
        %v1969 = vmul.f32 %v1854, 1.442695
        %v1970 = vpow.pop %v1969
        %v1971 = vmul.f32 %v1855, 1.442695
        %v1972 = vpow.pop %v1971
        %v1973 = vmul.f32 %v1856, 1.442695
        %v1974 = vpow.pop %v1973
        %v1975 = vmul.f32 %v1857, 1.442695
        %v1976 = vpow.pop %v1975
        %v1977 = vmul.f32 %v1858, 1.442695
        %v1978 = vpow.pop %v1977
        %v1979 = vmul.f32 %v1859, 1.442695
        %v1980 = vpow.pop %v1979
        %v1981 = vmul.f32 %v1860, 1.442695
        %v1982 = vpow.pop %v1981
        %v1983 = vmul.f32 %v1861, 1.442695
        %v1984 = vpow.pop %v1983
        %v1985 = vmul.f32 %v1862, 1.442695
        %v1986 = vpow.pop %v1985
        %v1987 = vmul.f32 %v1863, 1.442695
        %v1988 = vpow.pop %v1987
        %v1989 = vmul.f32 %v1864, 1.442695
        %v1990 = vpow.pop %v1989
        %v1991 = vmul.f32 %v1865, 1.442695
        %v1992 = vpow.pop %v1991
        %v1993 = vmul.f32 %v1866, 1.442695
        %v1994 = vpow.pop %v1993
        %v1995 = vmul.f32 %v1675, %v1868
        %v1996 = vmul.f32 %v1676, %v1870
        %v1997 = vmul.f32 %v1677, %v1872
        %v1998 = vmul.f32 %v1678, %v1874
        %v1999 = vmul.f32 %v1679, %v1876
        %v2000 = vmul.f32 %v1680, %v1878
        %v2001 = vmul.f32 %v1681, %v1880
        %v2002 = vmul.f32 %v1682, %v1882
        %v2003 = vmul.f32 %v1683, %v1884
        %v2004 = vmul.f32 %v1684, %v1886
        %v2005 = vmul.f32 %v1685, %v1888
        %v2006 = vmul.f32 %v1686, %v1890
        %v2007 = vmul.f32 %v1687, %v1892
        %v2008 = vmul.f32 %v1688, %v1894
        %v2009 = vmul.f32 %v1689, %v1896
        %v2010 = vmul.f32 %v1690, %v1898
        %v2011 = vmul.f32 %v1691, %v1900
        %v2012 = vmul.f32 %v1692, %v1902
        %v2013 = vmul.f32 %v1693, %v1904
        %v2014 = vmul.f32 %v1694, %v1906
        %v2015 = vmul.f32 %v1695, %v1908
        %v2016 = vmul.f32 %v1696, %v1910
        %v2017 = vmul.f32 %v1697, %v1912
        %v2018 = vmul.f32 %v1698, %v1914
        %v2019 = vmul.f32 %v1699, %v1916
        %v2020 = vmul.f32 %v1700, %v1918
        %v2021 = vmul.f32 %v1701, %v1920
        %v2022 = vmul.f32 %v1702, %v1922
        %v2023 = vmul.f32 %v1703, %v1924
        %v2024 = vmul.f32 %v1704, %v1926
        %v2025 = vmul.f32 %v1705, %v1928
        %v2026 = vmul.f32 %v1706, %v1930
        %v2027 = vmul.f32 %v1707, %v1932
        %v2028 = vmul.f32 %v1708, %v1934
        %v2029 = vmul.f32 %v1709, %v1936
        %v2030 = vmul.f32 %v1710, %v1938
        %v2031 = vmul.f32 %v1711, %v1940
        %v2032 = vmul.f32 %v1712, %v1942
        %v2033 = vmul.f32 %v1713, %v1944
        %v2034 = vmul.f32 %v1714, %v1946
        %v2035 = vmul.f32 %v1715, %v1948
        %v2036 = vmul.f32 %v1716, %v1950
        %v2037 = vmul.f32 %v1717, %v1952
        %v2038 = vmul.f32 %v1718, %v1954
        %v2039 = vmul.f32 %v1719, %v1956
        %v2040 = vmul.f32 %v1720, %v1958
        %v2041 = vmul.f32 %v1721, %v1960
        %v2042 = vmul.f32 %v1722, %v1962
        %v2043 = vmul.f32 %v1723, %v1964
        %v2044 = vmul.f32 %v1724, %v1966
        %v2045 = vmul.f32 %v1725, %v1968
        %v2046 = vmul.f32 %v1726, %v1970
        %v2047 = vmul.f32 %v1727, %v1972
        %v2048 = vmul.f32 %v1728, %v1974
        %v2049 = vmul.f32 %v1729, %v1976
        %v2050 = vmul.f32 %v1730, %v1978
        %v2051 = vmul.f32 %v1731, %v1980
        %v2052 = vmul.f32 %v1732, %v1982
        %v2053 = vmul.f32 %v1733, %v1984
        %v2054 = vmul.f32 %v1734, %v1986
        %v2055 = vmul.f32 %v1735, %v1988
        %v2056 = vmul.f32 %v1736, %v1990
        %v2057 = vmul.f32 %v1737, %v1992
        %v2058 = vmul.f32 %v1738, %v1994
        %v2059 = vsub.f32 1.0, %v1995
        %v2060 = vsub.f32 1.0, %v1996
        %v2061 = vsub.f32 1.0, %v1997
        %v2062 = vsub.f32 1.0, %v1998
        %v2063 = vsub.f32 1.0, %v1999
        %v2064 = vsub.f32 1.0, %v2000
        %v2065 = vsub.f32 1.0, %v2001
        %v2066 = vsub.f32 1.0, %v2002
        %v2067 = vsub.f32 1.0, %v2003
        %v2068 = vsub.f32 1.0, %v2004
        %v2069 = vsub.f32 1.0, %v2005
        %v2070 = vsub.f32 1.0, %v2006
        %v2071 = vsub.f32 1.0, %v2007
        %v2072 = vsub.f32 1.0, %v2008
        %v2073 = vsub.f32 1.0, %v2009
        %v2074 = vsub.f32 1.0, %v2010
        %v2075 = vsub.f32 1.0, %v2011
        %v2076 = vsub.f32 1.0, %v2012
        %v2077 = vsub.f32 1.0, %v2013
        %v2078 = vsub.f32 1.0, %v2014
        %v2079 = vsub.f32 1.0, %v2015
        %v2080 = vsub.f32 1.0, %v2016
        %v2081 = vsub.f32 1.0, %v2017
        %v2082 = vsub.f32 1.0, %v2018
        %v2083 = vsub.f32 1.0, %v2019
        %v2084 = vsub.f32 1.0, %v2020
        %v2085 = vsub.f32 1.0, %v2021
        %v2086 = vsub.f32 1.0, %v2022
        %v2087 = vsub.f32 1.0, %v2023
        %v2088 = vsub.f32 1.0, %v2024
        %v2089 = vsub.f32 1.0, %v2025
        %v2090 = vsub.f32 1.0, %v2026
        %v2091 = vsub.f32 1.0, %v2027
        %v2092 = vsub.f32 1.0, %v2028
        %v2093 = vsub.f32 1.0, %v2029
        %v2094 = vsub.f32 1.0, %v2030
        %v2095 = vsub.f32 1.0, %v2031
        %v2096 = vsub.f32 1.0, %v2032
        %v2097 = vsub.f32 1.0, %v2033
        %v2098 = vsub.f32 1.0, %v2034
        %v2099 = vsub.f32 1.0, %v2035
        %v2100 = vsub.f32 1.0, %v2036
        %v2101 = vsub.f32 1.0, %v2037
        %v2102 = vsub.f32 1.0, %v2038
        %v2103 = vsub.f32 1.0, %v2039
        %v2104 = vsub.f32 1.0, %v2040
        %v2105 = vsub.f32 1.0, %v2041
        %v2106 = vsub.f32 1.0, %v2042
        %v2107 = vsub.f32 1.0, %v2043
        %v2108 = vsub.f32 1.0, %v2044
        %v2109 = vsub.f32 1.0, %v2045
        %v2110 = vsub.f32 1.0, %v2046
        %v2111 = vsub.f32 1.0, %v2047
        %v2112 = vsub.f32 1.0, %v2048
        %v2113 = vsub.f32 1.0, %v2049
        %v2114 = vsub.f32 1.0, %v2050
        %v2115 = vsub.f32 1.0, %v2051
        %v2116 = vsub.f32 1.0, %v2052
        %v2117 = vsub.f32 1.0, %v2053
        %v2118 = vsub.f32 1.0, %v2054
        %v2119 = vsub.f32 1.0, %v2055
        %v2120 = vsub.f32 1.0, %v2056
        %v2121 = vsub.f32 1.0, %v2057
        %v2122 = vsub.f32 1.0, %v2058
        %vm2123 = vcmp.ge.f32.partialorder %v843, 0.0
        %vm2124 = vcmp.ge.f32.partialorder %v844, 0.0
        %vm2125 = vcmp.ge.f32.partialorder %v845, 0.0
        %vm2126 = vcmp.ge.f32.partialorder %v846, 0.0
        %vm2127 = vcmp.ge.f32.partialorder %v847, 0.0
        %vm2128 = vcmp.ge.f32.partialorder %v848, 0.0
        %vm2129 = vcmp.ge.f32.partialorder %v849, 0.0
        %vm2130 = vcmp.ge.f32.partialorder %v850, 0.0
        %vm2131 = vcmp.ge.f32.partialorder %v851, 0.0
        %vm2132 = vcmp.ge.f32.partialorder %v852, 0.0
        %vm2133 = vcmp.ge.f32.partialorder %v853, 0.0
        %vm2134 = vcmp.ge.f32.partialorder %v854, 0.0
        %vm2135 = vcmp.ge.f32.partialorder %v855, 0.0
        %vm2136 = vcmp.ge.f32.partialorder %v856, 0.0
        %vm2137 = vcmp.ge.f32.partialorder %v857, 0.0
        %vm2138 = vcmp.ge.f32.partialorder %v858, 0.0
        %vm2139 = vcmp.ge.f32.partialorder %v859, 0.0
        %vm2140 = vcmp.ge.f32.partialorder %v860, 0.0
        %vm2141 = vcmp.ge.f32.partialorder %v861, 0.0
        %vm2142 = vcmp.ge.f32.partialorder %v862, 0.0
        %vm2143 = vcmp.ge.f32.partialorder %v863, 0.0
        %vm2144 = vcmp.ge.f32.partialorder %v864, 0.0
        %vm2145 = vcmp.ge.f32.partialorder %v865, 0.0
        %vm2146 = vcmp.ge.f32.partialorder %v866, 0.0
        %vm2147 = vcmp.ge.f32.partialorder %v867, 0.0
        %vm2148 = vcmp.ge.f32.partialorder %v868, 0.0
        %vm2149 = vcmp.ge.f32.partialorder %v869, 0.0
        %vm2150 = vcmp.ge.f32.partialorder %v870, 0.0
        %vm2151 = vcmp.ge.f32.partialorder %v871, 0.0
        %vm2152 = vcmp.ge.f32.partialorder %v872, 0.0
        %vm2153 = vcmp.ge.f32.partialorder %v873, 0.0
        %vm2154 = vcmp.ge.f32.partialorder %v874, 0.0
        %vm2155 = vcmp.ge.f32.partialorder %v875, 0.0
        %vm2156 = vcmp.ge.f32.partialorder %v876, 0.0
        %vm2157 = vcmp.ge.f32.partialorder %v877, 0.0
        %vm2158 = vcmp.ge.f32.partialorder %v878, 0.0
        %vm2159 = vcmp.ge.f32.partialorder %v879, 0.0
        %vm2160 = vcmp.ge.f32.partialorder %v880, 0.0
        %vm2161 = vcmp.ge.f32.partialorder %v881, 0.0
        %vm2162 = vcmp.ge.f32.partialorder %v882, 0.0
        %vm2163 = vcmp.ge.f32.partialorder %v883, 0.0
        %vm2164 = vcmp.ge.f32.partialorder %v884, 0.0
        %vm2165 = vcmp.ge.f32.partialorder %v885, 0.0
        %vm2166 = vcmp.ge.f32.partialorder %v886, 0.0
        %vm2167 = vcmp.ge.f32.partialorder %v887, 0.0
        %vm2168 = vcmp.ge.f32.partialorder %v888, 0.0
        %vm2169 = vcmp.ge.f32.partialorder %v889, 0.0
        %vm2170 = vcmp.ge.f32.partialorder %v890, 0.0
        %vm2171 = vcmp.ge.f32.partialorder %v891, 0.0
        %vm2172 = vcmp.ge.f32.partialorder %v892, 0.0
        %vm2173 = vcmp.ge.f32.partialorder %v893, 0.0
        %vm2174 = vcmp.ge.f32.partialorder %v894, 0.0
        %vm2175 = vcmp.ge.f32.partialorder %v895, 0.0
        %vm2176 = vcmp.ge.f32.partialorder %v896, 0.0
        %vm2177 = vcmp.ge.f32.partialorder %v897, 0.0
        %vm2178 = vcmp.ge.f32.partialorder %v898, 0.0
        %vm2179 = vcmp.ge.f32.partialorder %v899, 0.0
        %vm2180 = vcmp.ge.f32.partialorder %v900, 0.0
        %vm2181 = vcmp.ge.f32.partialorder %v901, 0.0
        %vm2182 = vcmp.ge.f32.partialorder %v902, 0.0
        %vm2183 = vcmp.ge.f32.partialorder %v903, 0.0
        %vm2184 = vcmp.ge.f32.partialorder %v904, 0.0
        %vm2185 = vcmp.ge.f32.partialorder %v905, 0.0
        %vm2186 = vcmp.ge.f32.partialorder %v906, 0.0
        %v2187 = vsub.f32 0.0, %v2059
        %v2188 = vsub.f32 0.0, %v2060
        %v2189 = vsub.f32 0.0, %v2061
        %v2190 = vsub.f32 0.0, %v2062
        %v2191 = vsub.f32 0.0, %v2063
        %v2192 = vsub.f32 0.0, %v2064
        %v2193 = vsub.f32 0.0, %v2065
        %v2194 = vsub.f32 0.0, %v2066
        %v2195 = vsub.f32 0.0, %v2067
        %v2196 = vsub.f32 0.0, %v2068
        %v2197 = vsub.f32 0.0, %v2069
        %v2198 = vsub.f32 0.0, %v2070
        %v2199 = vsub.f32 0.0, %v2071
        %v2200 = vsub.f32 0.0, %v2072
        %v2201 = vsub.f32 0.0, %v2073
        %v2202 = vsub.f32 0.0, %v2074
        %v2203 = vsub.f32 0.0, %v2075
        %v2204 = vsub.f32 0.0, %v2076
        %v2205 = vsub.f32 0.0, %v2077
        %v2206 = vsub.f32 0.0, %v2078
        %v2207 = vsub.f32 0.0, %v2079
        %v2208 = vsub.f32 0.0, %v2080
        %v2209 = vsub.f32 0.0, %v2081
        %v2210 = vsub.f32 0.0, %v2082
        %v2211 = vsub.f32 0.0, %v2083
        %v2212 = vsub.f32 0.0, %v2084
        %v2213 = vsub.f32 0.0, %v2085
        %v2214 = vsub.f32 0.0, %v2086
        %v2215 = vsub.f32 0.0, %v2087
        %v2216 = vsub.f32 0.0, %v2088
        %v2217 = vsub.f32 0.0, %v2089
        %v2218 = vsub.f32 0.0, %v2090
        %v2219 = vsub.f32 0.0, %v2091
        %v2220 = vsub.f32 0.0, %v2092
        %v2221 = vsub.f32 0.0, %v2093
        %v2222 = vsub.f32 0.0, %v2094
        %v2223 = vsub.f32 0.0, %v2095
        %v2224 = vsub.f32 0.0, %v2096
        %v2225 = vsub.f32 0.0, %v2097
        %v2226 = vsub.f32 0.0, %v2098
        %v2227 = vsub.f32 0.0, %v2099
        %v2228 = vsub.f32 0.0, %v2100
        %v2229 = vsub.f32 0.0, %v2101
        %v2230 = vsub.f32 0.0, %v2102
        %v2231 = vsub.f32 0.0, %v2103
        %v2232 = vsub.f32 0.0, %v2104
        %v2233 = vsub.f32 0.0, %v2105
        %v2234 = vsub.f32 0.0, %v2106
        %v2235 = vsub.f32 0.0, %v2107
        %v2236 = vsub.f32 0.0, %v2108
        %v2237 = vsub.f32 0.0, %v2109
        %v2238 = vsub.f32 0.0, %v2110
        %v2239 = vsub.f32 0.0, %v2111
        %v2240 = vsub.f32 0.0, %v2112
        %v2241 = vsub.f32 0.0, %v2113
        %v2242 = vsub.f32 0.0, %v2114
        %v2243 = vsub.f32 0.0, %v2115
        %v2244 = vsub.f32 0.0, %v2116
        %v2245 = vsub.f32 0.0, %v2117
        %v2246 = vsub.f32 0.0, %v2118
        %v2247 = vsub.f32 0.0, %v2119
        %v2248 = vsub.f32 0.0, %v2120
        %v2249 = vsub.f32 0.0, %v2121
        %v2250 = vsub.f32 0.0, %v2122
        %v2251 = vsel %vm2123, %v2059, %v2187
        %v2252 = vsel %vm2124, %v2060, %v2188
        %v2253 = vsel %vm2125, %v2061, %v2189
        %v2254 = vsel %vm2126, %v2062, %v2190
        %v2255 = vsel %vm2127, %v2063, %v2191
        %v2256 = vsel %vm2128, %v2064, %v2192
        %v2257 = vsel %vm2129, %v2065, %v2193
        %v2258 = vsel %vm2130, %v2066, %v2194
        %v2259 = vsel %vm2131, %v2067, %v2195
        %v2260 = vsel %vm2132, %v2068, %v2196
        %v2261 = vsel %vm2133, %v2069, %v2197
        %v2262 = vsel %vm2134, %v2070, %v2198
        %v2263 = vsel %vm2135, %v2071, %v2199
        %v2264 = vsel %vm2136, %v2072, %v2200
        %v2265 = vsel %vm2137, %v2073, %v2201
        %v2266 = vsel %vm2138, %v2074, %v2202
        %v2267 = vsel %vm2139, %v2075, %v2203
        %v2268 = vsel %vm2140, %v2076, %v2204
        %v2269 = vsel %vm2141, %v2077, %v2205
        %v2270 = vsel %vm2142, %v2078, %v2206
        %v2271 = vsel %vm2143, %v2079, %v2207
        %v2272 = vsel %vm2144, %v2080, %v2208
        %v2273 = vsel %vm2145, %v2081, %v2209
        %v2274 = vsel %vm2146, %v2082, %v2210
        %v2275 = vsel %vm2147, %v2083, %v2211
        %v2276 = vsel %vm2148, %v2084, %v2212
        %v2277 = vsel %vm2149, %v2085, %v2213
        %v2278 = vsel %vm2150, %v2086, %v2214
        %v2279 = vsel %vm2151, %v2087, %v2215
        %v2280 = vsel %vm2152, %v2088, %v2216
        %v2281 = vsel %vm2153, %v2089, %v2217
        %v2282 = vsel %vm2154, %v2090, %v2218
        %v2283 = vsel %vm2155, %v2091, %v2219
        %v2284 = vsel %vm2156, %v2092, %v2220
        %v2285 = vsel %vm2157, %v2093, %v2221
        %v2286 = vsel %vm2158, %v2094, %v2222
        %v2287 = vsel %vm2159, %v2095, %v2223
        %v2288 = vsel %vm2160, %v2096, %v2224
        %v2289 = vsel %vm2161, %v2097, %v2225
        %v2290 = vsel %vm2162, %v2098, %v2226
        %v2291 = vsel %vm2163, %v2099, %v2227
        %v2292 = vsel %vm2164, %v2100, %v2228
        %v2293 = vsel %vm2165, %v2101, %v2229
        %v2294 = vsel %vm2166, %v2102, %v2230
        %v2295 = vsel %vm2167, %v2103, %v2231
        %v2296 = vsel %vm2168, %v2104, %v2232
        %v2297 = vsel %vm2169, %v2105, %v2233
        %v2298 = vsel %vm2170, %v2106, %v2234
        %v2299 = vsel %vm2171, %v2107, %v2235
        %v2300 = vsel %vm2172, %v2108, %v2236
        %v2301 = vsel %vm2173, %v2109, %v2237
        %v2302 = vsel %vm2174, %v2110, %v2238
        %v2303 = vsel %vm2175, %v2111, %v2239
        %v2304 = vsel %vm2176, %v2112, %v2240
        %v2305 = vsel %vm2177, %v2113, %v2241
        %v2306 = vsel %vm2178, %v2114, %v2242
        %v2307 = vsel %vm2179, %v2115, %v2243
        %v2308 = vsel %vm2180, %v2116, %v2244
        %v2309 = vsel %vm2181, %v2117, %v2245
        %v2310 = vsel %vm2182, %v2118, %v2246
        %v2311 = vsel %vm2183, %v2119, %v2247
        %v2312 = vsel %vm2184, %v2120, %v2248
        %v2313 = vsel %vm2185, %v2121, %v2249
        %v2314 = vsel %vm2186, %v2122, %v2250
        %v2315 = vadd.f32 %v2251, 1.0
        %v2316 = vadd.f32 %v2252, 1.0
        %v2317 = vadd.f32 %v2253, 1.0
        %v2318 = vadd.f32 %v2254, 1.0
        %v2319 = vadd.f32 %v2255, 1.0
        %v2320 = vadd.f32 %v2256, 1.0
        %v2321 = vadd.f32 %v2257, 1.0
        %v2322 = vadd.f32 %v2258, 1.0
        %v2323 = vadd.f32 %v2259, 1.0
        %v2324 = vadd.f32 %v2260, 1.0
        %v2325 = vadd.f32 %v2261, 1.0
        %v2326 = vadd.f32 %v2262, 1.0
        %v2327 = vadd.f32 %v2263, 1.0
        %v2328 = vadd.f32 %v2264, 1.0
        %v2329 = vadd.f32 %v2265, 1.0
        %v2330 = vadd.f32 %v2266, 1.0
        %v2331 = vadd.f32 %v2267, 1.0
        %v2332 = vadd.f32 %v2268, 1.0
        %v2333 = vadd.f32 %v2269, 1.0
        %v2334 = vadd.f32 %v2270, 1.0
        %v2335 = vadd.f32 %v2271, 1.0
        %v2336 = vadd.f32 %v2272, 1.0
        %v2337 = vadd.f32 %v2273, 1.0
        %v2338 = vadd.f32 %v2274, 1.0
        %v2339 = vadd.f32 %v2275, 1.0
        %v2340 = vadd.f32 %v2276, 1.0
        %v2341 = vadd.f32 %v2277, 1.0
        %v2342 = vadd.f32 %v2278, 1.0
        %v2343 = vadd.f32 %v2279, 1.0
        %v2344 = vadd.f32 %v2280, 1.0
        %v2345 = vadd.f32 %v2281, 1.0
        %v2346 = vadd.f32 %v2282, 1.0
        %v2347 = vadd.f32 %v2283, 1.0
        %v2348 = vadd.f32 %v2284, 1.0
        %v2349 = vadd.f32 %v2285, 1.0
        %v2350 = vadd.f32 %v2286, 1.0
        %v2351 = vadd.f32 %v2287, 1.0
        %v2352 = vadd.f32 %v2288, 1.0
        %v2353 = vadd.f32 %v2289, 1.0
        %v2354 = vadd.f32 %v2290, 1.0
        %v2355 = vadd.f32 %v2291, 1.0
        %v2356 = vadd.f32 %v2292, 1.0
        %v2357 = vadd.f32 %v2293, 1.0
        %v2358 = vadd.f32 %v2294, 1.0
        %v2359 = vadd.f32 %v2295, 1.0
        %v2360 = vadd.f32 %v2296, 1.0
        %v2361 = vadd.f32 %v2297, 1.0
        %v2362 = vadd.f32 %v2298, 1.0
        %v2363 = vadd.f32 %v2299, 1.0
        %v2364 = vadd.f32 %v2300, 1.0
        %v2365 = vadd.f32 %v2301, 1.0
        %v2366 = vadd.f32 %v2302, 1.0
        %v2367 = vadd.f32 %v2303, 1.0
        %v2368 = vadd.f32 %v2304, 1.0
        %v2369 = vadd.f32 %v2305, 1.0
        %v2370 = vadd.f32 %v2306, 1.0
        %v2371 = vadd.f32 %v2307, 1.0
        %v2372 = vadd.f32 %v2308, 1.0
        %v2373 = vadd.f32 %v2309, 1.0
        %v2374 = vadd.f32 %v2310, 1.0
        %v2375 = vadd.f32 %v2311, 1.0
        %v2376 = vadd.f32 %v2312, 1.0
        %v2377 = vadd.f32 %v2313, 1.0
        %v2378 = vadd.f32 %v2314, 1.0
        %v2379 = vmul.f32 %v779, %v2315
        %v2380 = vmul.f32 %v780, %v2316
        %v2381 = vmul.f32 %v781, %v2317
        %v2382 = vmul.f32 %v782, %v2318
        %v2383 = vmul.f32 %v783, %v2319
        %v2384 = vmul.f32 %v784, %v2320
        %v2385 = vmul.f32 %v785, %v2321
        %v2386 = vmul.f32 %v786, %v2322
        %v2387 = vmul.f32 %v787, %v2323
        %v2388 = vmul.f32 %v788, %v2324
        %v2389 = vmul.f32 %v789, %v2325
        %v2390 = vmul.f32 %v790, %v2326
        %v2391 = vmul.f32 %v791, %v2327
        %v2392 = vmul.f32 %v792, %v2328
        %v2393 = vmul.f32 %v793, %v2329
        %v2394 = vmul.f32 %v794, %v2330
        %v2395 = vmul.f32 %v795, %v2331
        %v2396 = vmul.f32 %v796, %v2332
        %v2397 = vmul.f32 %v797, %v2333
        %v2398 = vmul.f32 %v798, %v2334
        %v2399 = vmul.f32 %v799, %v2335
        %v2400 = vmul.f32 %v800, %v2336
        %v2401 = vmul.f32 %v801, %v2337
        %v2402 = vmul.f32 %v802, %v2338
        %v2403 = vmul.f32 %v803, %v2339
        %v2404 = vmul.f32 %v804, %v2340
        %v2405 = vmul.f32 %v805, %v2341
        %v2406 = vmul.f32 %v806, %v2342
        %v2407 = vmul.f32 %v807, %v2343
        %v2408 = vmul.f32 %v808, %v2344
        %v2409 = vmul.f32 %v809, %v2345
        %v2410 = vmul.f32 %v810, %v2346
        %v2411 = vmul.f32 %v811, %v2347
        %v2412 = vmul.f32 %v812, %v2348
        %v2413 = vmul.f32 %v813, %v2349
        %v2414 = vmul.f32 %v814, %v2350
        %v2415 = vmul.f32 %v815, %v2351
        %v2416 = vmul.f32 %v816, %v2352
        %v2417 = vmul.f32 %v817, %v2353
        %v2418 = vmul.f32 %v818, %v2354
        %v2419 = vmul.f32 %v819, %v2355
        %v2420 = vmul.f32 %v820, %v2356
        %v2421 = vmul.f32 %v821, %v2357
        %v2422 = vmul.f32 %v822, %v2358
        %v2423 = vmul.f32 %v823, %v2359
        %v2424 = vmul.f32 %v824, %v2360
        %v2425 = vmul.f32 %v825, %v2361
        %v2426 = vmul.f32 %v826, %v2362
        %v2427 = vmul.f32 %v827, %v2363
        %v2428 = vmul.f32 %v828, %v2364
        %v2429 = vmul.f32 %v829, %v2365
        %v2430 = vmul.f32 %v830, %v2366
        %v2431 = vmul.f32 %v831, %v2367
        %v2432 = vmul.f32 %v832, %v2368
        %v2433 = vmul.f32 %v833, %v2369
        %v2434 = vmul.f32 %v834, %v2370
        %v2435 = vmul.f32 %v835, %v2371
        %v2436 = vmul.f32 %v836, %v2372
        %v2437 = vmul.f32 %v837, %v2373
        %v2438 = vmul.f32 %v838, %v2374
        %v2439 = vmul.f32 %v839, %v2375
        %v2440 = vmul.f32 %v840, %v2376
        %v2441 = vmul.f32 %v841, %v2377
        %v2442 = vmul.f32 %v842, %v2378
        %v2443 = vpack.c.bf16 %v2383, %v2379
        %v2444 = vpack.c.bf16 %v2384, %v2380
        %v2445 = vpack.c.bf16 %v2385, %v2381
        %v2446 = vpack.c.bf16 %v2386, %v2382
        %v2447 = vpack.c.bf16 %v2391, %v2387
        %v2448 = vpack.c.bf16 %v2392, %v2388
        %v2449 = vpack.c.bf16 %v2393, %v2389
        %v2450 = vpack.c.bf16 %v2394, %v2390
        %v2451 = vpack.c.bf16 %v2399, %v2395
        %v2452 = vpack.c.bf16 %v2400, %v2396
        %v2453 = vpack.c.bf16 %v2401, %v2397
        %v2454 = vpack.c.bf16 %v2402, %v2398
        %v2455 = vpack.c.bf16 %v2407, %v2403
        %v2456 = vpack.c.bf16 %v2408, %v2404
        %v2457 = vpack.c.bf16 %v2409, %v2405
        %v2458 = vpack.c.bf16 %v2410, %v2406
        %v2459 = vpack.c.bf16 %v2415, %v2411
        %v2460 = vpack.c.bf16 %v2416, %v2412
        %v2461 = vpack.c.bf16 %v2417, %v2413
        %v2462 = vpack.c.bf16 %v2418, %v2414
        %v2463 = vpack.c.bf16 %v2423, %v2419
        %v2464 = vpack.c.bf16 %v2424, %v2420
        %v2465 = vpack.c.bf16 %v2425, %v2421
        %v2466 = vpack.c.bf16 %v2426, %v2422
        %v2467 = vpack.c.bf16 %v2431, %v2427
        %v2468 = vpack.c.bf16 %v2432, %v2428
        %v2469 = vpack.c.bf16 %v2433, %v2429
        %v2470 = vpack.c.bf16 %v2434, %v2430
        %v2471 = vpack.c.bf16 %v2439, %v2435
        %v2472 = vpack.c.bf16 %v2440, %v2436
        %v2473 = vpack.c.bf16 %v2441, %v2437
        %v2474 = vpack.c.bf16 %v2442, %v2438
        %v2475 = vld [vmem:[#allocation7] sm:$0xf]
        %v2476 = vld [vmem:[#allocation7 + $0x4] sm:$0xf]
        %v2477 = vld [vmem:[#allocation7 + $0x8] sm:$0xf]
        %v2478 = vld [vmem:[#allocation7 + $0xc] sm:$0xf]
        %v2479 = vld [vmem:[#allocation7 + $0x10] sm:$0xf]
        %v2480 = vld [vmem:[#allocation7 + $0x14] sm:$0xf]
        %v2481 = vld [vmem:[#allocation7 + $0x18] sm:$0xf]
        %v2482 = vld [vmem:[#allocation7 + $0x1c] sm:$0xf]
        %v2483 = vld [vmem:[#allocation7 + $0x20] sm:$0xf]
        %v2484 = vld [vmem:[#allocation7 + $0x24] sm:$0xf]
        %v2485 = vld [vmem:[#allocation7 + $0x28] sm:$0xf]
        %v2486 = vld [vmem:[#allocation7 + $0x2c] sm:$0xf]
        %v2487 = vld [vmem:[#allocation7 + $0x30] sm:$0xf]
        %v2488 = vld [vmem:[#allocation7 + $0x34] sm:$0xf]
        %v2489 = vld [vmem:[#allocation7 + $0x38] sm:$0xf]
        %v2490 = vld [vmem:[#allocation7 + $0x3c] sm:$0xf]
        %v2491 = vld [vmem:[#allocation7 + $0x40] sm:$0xf]
        %v2492 = vld [vmem:[#allocation7 + $0x44] sm:$0xf]
        %v2493 = vld [vmem:[#allocation7 + $0x48] sm:$0xf]
        %v2494 = vld [vmem:[#allocation7 + $0x4c] sm:$0xf]
        %v2495 = vld [vmem:[#allocation7 + $0x50] sm:$0xf]
        %v2496 = vld [vmem:[#allocation7 + $0x54] sm:$0xf]
        %v2497 = vld [vmem:[#allocation7 + $0x58] sm:$0xf]
        %v2498 = vld [vmem:[#allocation7 + $0x5c] sm:$0xf]
        %v2499 = vld [vmem:[#allocation7 + $0x60] sm:$0xf]
        %v2500 = vld [vmem:[#allocation7 + $0x64] sm:$0xf]
        %v2501 = vld [vmem:[#allocation7 + $0x68] sm:$0xf]
        %v2502 = vld [vmem:[#allocation7 + $0x6c] sm:$0xf]
        %v2503 = vld [vmem:[#allocation7 + $0x70] sm:$0xf]
        %v2504 = vld [vmem:[#allocation7 + $0x74] sm:$0xf]
        %v2505 = vld [vmem:[#allocation7 + $0x78] sm:$0xf]
        %v2506 = vld [vmem:[#allocation7 + $0x7c] sm:$0xf]
        %v2507 = vld [vmem:[#allocation7 + $0x80] sm:$0xf]
        %v2508 = vld [vmem:[#allocation7 + $0x84] sm:$0xf]
        %v2509 = vld [vmem:[#allocation7 + $0x88] sm:$0xf]
        %v2510 = vld [vmem:[#allocation7 + $0x8c] sm:$0xf]
        %v2511 = vld [vmem:[#allocation7 + $0x90] sm:$0xf]
        %v2512 = vld [vmem:[#allocation7 + $0x94] sm:$0xf]
        %v2513 = vld [vmem:[#allocation7 + $0x98] sm:$0xf]
        %v2514 = vld [vmem:[#allocation7 + $0x9c] sm:$0xf]
        %v2515 = vld [vmem:[#allocation7 + $0xa0] sm:$0xf]
        %v2516 = vld [vmem:[#allocation7 + $0xa4] sm:$0xf]
        %v2517 = vld [vmem:[#allocation7 + $0xa8] sm:$0xf]
        %v2518 = vld [vmem:[#allocation7 + $0xac] sm:$0xf]
        %v2519 = vld [vmem:[#allocation7 + $0xb0] sm:$0xf]
        %v2520 = vld [vmem:[#allocation7 + $0xb4] sm:$0xf]
        %v2521 = vld [vmem:[#allocation7 + $0xb8] sm:$0xf]
        %v2522 = vld [vmem:[#allocation7 + $0xbc] sm:$0xf]
        %v2523 = vld [vmem:[#allocation7 + $0xc0] sm:$0xf]
        %v2524 = vld [vmem:[#allocation7 + $0xc4] sm:$0xf]
        %v2525 = vld [vmem:[#allocation7 + $0xc8] sm:$0xf]
        %v2526 = vld [vmem:[#allocation7 + $0xcc] sm:$0xf]
        %v2527 = vld [vmem:[#allocation7 + $0xd0] sm:$0xf]
        %v2528 = vld [vmem:[#allocation7 + $0xd4] sm:$0xf]
        %v2529 = vld [vmem:[#allocation7 + $0xd8] sm:$0xf]
        %v2530 = vld [vmem:[#allocation7 + $0xdc] sm:$0xf]
        %v2531 = vld [vmem:[#allocation7 + $0xe0] sm:$0xf]
        %v2532 = vld [vmem:[#allocation7 + $0xe4] sm:$0xf]
        %v2533 = vld [vmem:[#allocation7 + $0xe8] sm:$0xf]
        %v2534 = vld [vmem:[#allocation7 + $0xec] sm:$0xf]
        %v2535 = vld [vmem:[#allocation7 + $0xf0] sm:$0xf]
        %v2536 = vld [vmem:[#allocation7 + $0xf4] sm:$0xf]
        %v2537 = vld [vmem:[#allocation7 + $0xf8] sm:$0xf]
        %v2538 = vld [vmem:[#allocation7 + $0xfc] sm:$0xf]
        %v2539 = vld [vmem:[%s4] sm:$0x1]
        %v2541 = vlaneseq
        %v2542 = vshrl.u32 %v2541, 7
        %v2543 = vsub.s32 0, %v2542
        %v2544 = vrot.slane %v2539, %v2543
        %v2610 = vunpack.c.l.b16 %v2475
        %v2611 = vunpack.c.l.b16 %v2476
        %v2612 = vunpack.c.l.b16 %v2477
        %v2613 = vunpack.c.l.b16 %v2478
        %v2614 = vunpack.c.l.b16 %v2479
        %v2615 = vunpack.c.l.b16 %v2480
        %v2616 = vunpack.c.l.b16 %v2481
        %v2617 = vunpack.c.l.b16 %v2482
        %v2618 = vunpack.c.l.b16 %v2483
        %v2619 = vunpack.c.l.b16 %v2484
        %v2620 = vunpack.c.l.b16 %v2485
        %v2621 = vunpack.c.l.b16 %v2486
        %v2622 = vunpack.c.l.b16 %v2487
        %v2623 = vunpack.c.l.b16 %v2488
        %v2624 = vunpack.c.l.b16 %v2489
        %v2625 = vunpack.c.l.b16 %v2490
        %v2626 = vunpack.c.l.b16 %v2491
        %v2627 = vunpack.c.l.b16 %v2492
        %v2628 = vunpack.c.l.b16 %v2493
        %v2629 = vunpack.c.l.b16 %v2494
        %v2630 = vunpack.c.l.b16 %v2495
        %v2631 = vunpack.c.l.b16 %v2496
        %v2632 = vunpack.c.l.b16 %v2497
        %v2633 = vunpack.c.l.b16 %v2498
        %v2634 = vunpack.c.l.b16 %v2499
        %v2635 = vunpack.c.l.b16 %v2500
        %v2636 = vunpack.c.l.b16 %v2501
        %v2637 = vunpack.c.l.b16 %v2502
        %v2638 = vunpack.c.l.b16 %v2503
        %v2639 = vunpack.c.l.b16 %v2504
        %v2640 = vunpack.c.l.b16 %v2505
        %v2641 = vunpack.c.l.b16 %v2506
        %v2642 = vunpack.c.l.b16 %v2507
        %v2643 = vunpack.c.l.b16 %v2508
        %v2644 = vunpack.c.l.b16 %v2509
        %v2645 = vunpack.c.l.b16 %v2510
        %v2646 = vunpack.c.l.b16 %v2511
        %v2647 = vunpack.c.l.b16 %v2512
        %v2648 = vunpack.c.l.b16 %v2513
        %v2649 = vunpack.c.l.b16 %v2514
        %v2650 = vunpack.c.l.b16 %v2515
        %v2651 = vunpack.c.l.b16 %v2516
        %v2652 = vunpack.c.l.b16 %v2517
        %v2653 = vunpack.c.l.b16 %v2518
        %v2654 = vunpack.c.l.b16 %v2519
        %v2655 = vunpack.c.l.b16 %v2520
        %v2656 = vunpack.c.l.b16 %v2521
        %v2657 = vunpack.c.l.b16 %v2522
        %v2658 = vunpack.c.l.b16 %v2523
        %v2659 = vunpack.c.l.b16 %v2524
        %v2660 = vunpack.c.l.b16 %v2525
        %v2661 = vunpack.c.l.b16 %v2526
        %v2662 = vunpack.c.l.b16 %v2527
        %v2663 = vunpack.c.l.b16 %v2528
        %v2664 = vunpack.c.l.b16 %v2529
        %v2665 = vunpack.c.l.b16 %v2530
        %v2666 = vunpack.c.l.b16 %v2531
        %v2667 = vunpack.c.l.b16 %v2532
        %v2668 = vunpack.c.l.b16 %v2533
        %v2669 = vunpack.c.l.b16 %v2534
        %v2670 = vunpack.c.l.b16 %v2535
        %v2671 = vunpack.c.l.b16 %v2536
        %v2672 = vunpack.c.l.b16 %v2537
        %v2673 = vunpack.c.l.b16 %v2538
        %v2674 = vpack.c.b16 %v2611, %v2610
        %v2675 = vpack.c.b16 %v2613, %v2612
        %v2676 = vpack.c.b16 %v2615, %v2614
        %v2677 = vpack.c.b16 %v2617, %v2616
        %v2678 = vpack.c.b16 %v2619, %v2618
        %v2679 = vpack.c.b16 %v2621, %v2620
        %v2680 = vpack.c.b16 %v2623, %v2622
        %v2681 = vpack.c.b16 %v2625, %v2624
        %v2682 = vpack.c.b16 %v2627, %v2626
        %v2683 = vpack.c.b16 %v2629, %v2628
        %v2684 = vpack.c.b16 %v2631, %v2630
        %v2685 = vpack.c.b16 %v2633, %v2632
        %v2686 = vpack.c.b16 %v2635, %v2634
        %v2687 = vpack.c.b16 %v2637, %v2636
        %v2688 = vpack.c.b16 %v2639, %v2638
        %v2689 = vpack.c.b16 %v2641, %v2640
        %v2690 = vpack.c.b16 %v2643, %v2642
        %v2691 = vpack.c.b16 %v2645, %v2644
        %v2692 = vpack.c.b16 %v2647, %v2646
        %v2693 = vpack.c.b16 %v2649, %v2648
        %v2694 = vpack.c.b16 %v2651, %v2650
        %v2695 = vpack.c.b16 %v2653, %v2652
        %v2696 = vpack.c.b16 %v2655, %v2654
        %v2697 = vpack.c.b16 %v2657, %v2656
        %v2698 = vpack.c.b16 %v2659, %v2658
        %v2699 = vpack.c.b16 %v2661, %v2660
        %v2700 = vpack.c.b16 %v2663, %v2662
        %v2701 = vpack.c.b16 %v2665, %v2664
        %v2702 = vpack.c.b16 %v2667, %v2666
        %v2703 = vpack.c.b16 %v2669, %v2668
        %v2704 = vpack.c.b16 %v2671, %v2670
        %v2705 = vpack.c.b16 %v2673, %v2672
        %2738 = vmatprep.subr.bf16.mxu0 0
        %2739 = vmatpush1.bf16.msra.mxu0 %v2674
        %2740 = vmatprep.subr.bf16.mxu0 0
        %2741 = vmatpush1.bf16.msra.mxu0 %v2675
        %2742 = vmatprep.subr.bf16.mxu0 0
        %2743 = vmatpush1.bf16.msra.mxu0 %v2676
        %2744 = vmatprep.subr.bf16.mxu0 0
        %2745 = vmatpush1.bf16.msra.mxu0 %v2677
        %2746 = vmatprep.subr.bf16.mxu0 0
        %2747 = vmatpush1.bf16.msra.mxu0 %v2678
        %2748 = vmatprep.subr.bf16.mxu0 0
        %2749 = vmatpush1.bf16.msra.mxu0 %v2679
        %2750 = vmatprep.subr.bf16.mxu0 0
        %2751 = vmatpush1.bf16.msra.mxu0 %v2680
        %2752 = vmatprep.subr.bf16.mxu0 0
        %2753 = vmatpush1.bf16.msra.mxu0 %v2681
        %2754 = vmatprep.subr.bf16.mxu0 0
        %2755 = vmatpush1.bf16.msra.mxu0 %v2682
        %2756 = vmatprep.subr.bf16.mxu0 0
        %2757 = vmatpush1.bf16.msra.mxu0 %v2683
        %2758 = vmatprep.subr.bf16.mxu0 0
        %2759 = vmatpush1.bf16.msra.mxu0 %v2684
        %2760 = vmatprep.subr.bf16.mxu0 0
        %2761 = vmatpush1.bf16.msra.mxu0 %v2685
        %2762 = vmatprep.subr.bf16.mxu0 0
        %2763 = vmatpush1.bf16.msra.mxu0 %v2686
        %2764 = vmatprep.subr.bf16.mxu0 0
        %2765 = vmatpush1.bf16.msra.mxu0 %v2687
        %2766 = vmatprep.subr.bf16.mxu0 0
        %2767 = vmatpush1.bf16.msra.mxu0 %v2688
        %2768 = vmatprep.subr.bf16.mxu0 0
        %2769 = vmatpush1.bf16.msra.mxu0 %v2689
        %2770 = vmatprep.mubr.bf16.mxu0 %v2444
        %2771 = vmatmul.mubr.bf16.gmra.mrb[0].mxu0 %v2443
        %v2772 = vpop.f32.mrb[0].mxu0
        %v2773 = vadd.f32 %v2544, %v2772
        %v2774 = vpop.f32.mrb[0].mxu0
        %v2775 = vpop.f32.mrb[0].mxu0
        %v2776 = vadd.f32 %v2544, %v2775
        %v2777 = vpop.f32.mrb[0].mxu0
        %2778 = vmatprep.mubr.bf16.mxu0 %v2448
        %2779 = vmatmul.mubr.bf16.gmra.mrb[0].mxu0 %v2447
        %v2780 = vpop.f32.mrb[0].mxu0
        %v2781 = vadd.f32 %v2544, %v2780
        %v2782 = vpop.f32.mrb[0].mxu0
        %v2783 = vpop.f32.mrb[0].mxu0
        %v2784 = vadd.f32 %v2544, %v2783
        %v2785 = vpop.f32.mrb[0].mxu0
        %2786 = vmatprep.mubr.bf16.mxu0 %v2452
        %2787 = vmatmul.mubr.bf16.gmra.mrb[0].mxu0 %v2451
        %v2788 = vpop.f32.mrb[0].mxu0
        %v2789 = vadd.f32 %v2544, %v2788
        %v2790 = vpop.f32.mrb[0].mxu0
        %v2791 = vpop.f32.mrb[0].mxu0
        %v2792 = vadd.f32 %v2544, %v2791
        %v2793 = vpop.f32.mrb[0].mxu0
        %2794 = vmatprep.mubr.bf16.mxu0 %v2456
        %2795 = vmatmul.mubr.bf16.gmra.mrb[0].mxu0 %v2455
        %v2796 = vpop.f32.mrb[0].mxu0
        %v2797 = vadd.f32 %v2544, %v2796
        %v2798 = vpop.f32.mrb[0].mxu0
        %v2799 = vpop.f32.mrb[0].mxu0
        %v2800 = vadd.f32 %v2544, %v2799
        %v2801 = vpop.f32.mrb[0].mxu0
        %2802 = vmatprep.mubr.bf16.mxu0 %v2460
        %2803 = vmatmul.mubr.bf16.gmra.mrb[0].mxu0 %v2459
        %v2804 = vpop.f32.mrb[0].mxu0
        %v2805 = vadd.f32 %v2544, %v2804
        %v2806 = vpop.f32.mrb[0].mxu0
        %v2807 = vpop.f32.mrb[0].mxu0
        %v2808 = vadd.f32 %v2544, %v2807
        %v2809 = vpop.f32.mrb[0].mxu0
        %2810 = vmatprep.mubr.bf16.mxu0 %v2464
        %2811 = vmatmul.mubr.bf16.gmra.mrb[0].mxu0 %v2463
        %v2812 = vpop.f32.mrb[0].mxu0
        %v2813 = vadd.f32 %v2544, %v2812
        %v2814 = vpop.f32.mrb[0].mxu0
        %v2815 = vpop.f32.mrb[0].mxu0
        %v2816 = vadd.f32 %v2544, %v2815
        %v2817 = vpop.f32.mrb[0].mxu0
        %2818 = vmatprep.mubr.bf16.mxu0 %v2468
        %2819 = vmatmul.mubr.bf16.gmra.mrb[0].mxu0 %v2467
        %v2820 = vpop.f32.mrb[0].mxu0
        %v2821 = vadd.f32 %v2544, %v2820
        %v2822 = vpop.f32.mrb[0].mxu0
        %v2823 = vpop.f32.mrb[0].mxu0
        %v2824 = vadd.f32 %v2544, %v2823
        %v2825 = vpop.f32.mrb[0].mxu0
        %2826 = vmatprep.mubr.bf16.mxu0 %v2472
        %2827 = vmatmul.mubr.bf16.gmra.mrb[0].mxu0 %v2471
        %v2828 = vpop.f32.mrb[0].mxu0
        %v2829 = vadd.f32 %v2544, %v2828
        %v2830 = vpop.f32.mrb[0].mxu0
        %v2831 = vpop.f32.mrb[0].mxu0
        %v2832 = vadd.f32 %v2544, %v2831
        %v2833 = vpop.f32.mrb[0].mxu0
        %2834 = vdwg.mxu0
        %2835 = vmatprep.subr.bf16.mxu0 0
        %2836 = vmatpush1.bf16.msra.mxu0 %v2690
        %2837 = vmatprep.subr.bf16.mxu0 0
        %2838 = vmatpush1.bf16.msra.mxu0 %v2691
        %2839 = vmatprep.subr.bf16.mxu0 0
        %2840 = vmatpush1.bf16.msra.mxu0 %v2692
        %2841 = vmatprep.subr.bf16.mxu0 0
        %2842 = vmatpush1.bf16.msra.mxu0 %v2693
        %2843 = vmatprep.subr.bf16.mxu0 0
        %2844 = vmatpush1.bf16.msra.mxu0 %v2694
        %2845 = vmatprep.subr.bf16.mxu0 0
        %2846 = vmatpush1.bf16.msra.mxu0 %v2695
        %2847 = vmatprep.subr.bf16.mxu0 0
        %2848 = vmatpush1.bf16.msra.mxu0 %v2696
        %2849 = vmatprep.subr.bf16.mxu0 0
        %2850 = vmatpush1.bf16.msra.mxu0 %v2697
        %2851 = vmatprep.subr.bf16.mxu0 0
        %2852 = vmatpush1.bf16.msra.mxu0 %v2698
        %2853 = vmatprep.subr.bf16.mxu0 0
        %2854 = vmatpush1.bf16.msra.mxu0 %v2699
        %2855 = vmatprep.subr.bf16.mxu0 0
        %2856 = vmatpush1.bf16.msra.mxu0 %v2700
        %2857 = vmatprep.subr.bf16.mxu0 0
        %2858 = vmatpush1.bf16.msra.mxu0 %v2701
        %2859 = vmatprep.subr.bf16.mxu0 0
        %2860 = vmatpush1.bf16.msra.mxu0 %v2702
        %2861 = vmatprep.subr.bf16.mxu0 0
        %2862 = vmatpush1.bf16.msra.mxu0 %v2703
        %2863 = vmatprep.subr.bf16.mxu0 0
        %2864 = vmatpush1.bf16.msra.mxu0 %v2704
        %2865 = vmatprep.subr.bf16.mxu0 0
        %2866 = vmatpush1.bf16.msra.mxu0 %v2705
        %2867 = vmatprep.mubr.bf16.mxu0 %v2446
        %2868 = vmatmul.mubr.bf16.gmra.mrb[0].mxu0 %v2445
        %v2869 = vpop.f32.mrb[0].mxu0
        %v2870 = vadd.f32 %v2773, %v2869
        %v2871 = vpop.f32.mrb[0].mxu0
        %v2872 = vpop.f32.mrb[0].mxu0
        %v2873 = vadd.f32 %v2776, %v2872
        %v2874 = vpop.f32.mrb[0].mxu0
        %2875 = vmatprep.mubr.bf16.mxu0 %v2450
        %2876 = vmatmul.mubr.bf16.gmra.mrb[0].mxu0 %v2449
        %v2877 = vpop.f32.mrb[0].mxu0
        %v2878 = vadd.f32 %v2781, %v2877
        %v2879 = vpop.f32.mrb[0].mxu0
        %v2880 = vpop.f32.mrb[0].mxu0
        %v2881 = vadd.f32 %v2784, %v2880
        %v2882 = vpop.f32.mrb[0].mxu0
        %2883 = vmatprep.mubr.bf16.mxu0 %v2454
        %2884 = vmatmul.mubr.bf16.gmra.mrb[0].mxu0 %v2453
        %v2885 = vpop.f32.mrb[0].mxu0
        %v2886 = vadd.f32 %v2789, %v2885
        %v2887 = vpop.f32.mrb[0].mxu0
        %v2888 = vpop.f32.mrb[0].mxu0
        %v2889 = vadd.f32 %v2792, %v2888
        %v2890 = vpop.f32.mrb[0].mxu0
        %2891 = vmatprep.mubr.bf16.mxu0 %v2458
        %2892 = vmatmul.mubr.bf16.gmra.mrb[0].mxu0 %v2457
        %v2893 = vpop.f32.mrb[0].mxu0
        %v2894 = vadd.f32 %v2797, %v2893
        %v2895 = vpop.f32.mrb[0].mxu0
        %v2896 = vpop.f32.mrb[0].mxu0
        %v2897 = vadd.f32 %v2800, %v2896
        %v2898 = vpop.f32.mrb[0].mxu0
        %2899 = vmatprep.mubr.bf16.mxu0 %v2462
        %2900 = vmatmul.mubr.bf16.gmra.mrb[0].mxu0 %v2461
        %v2901 = vpop.f32.mrb[0].mxu0
        %v2902 = vadd.f32 %v2805, %v2901
        %v2903 = vpop.f32.mrb[0].mxu0
        %v2904 = vpop.f32.mrb[0].mxu0
        %v2905 = vadd.f32 %v2808, %v2904
        %v2906 = vpop.f32.mrb[0].mxu0
        %2907 = vmatprep.mubr.bf16.mxu0 %v2466
        %2908 = vmatmul.mubr.bf16.gmra.mrb[0].mxu0 %v2465
        %v2909 = vpop.f32.mrb[0].mxu0
        %v2910 = vadd.f32 %v2813, %v2909
        %v2911 = vpop.f32.mrb[0].mxu0
        %v2912 = vpop.f32.mrb[0].mxu0
        %v2913 = vadd.f32 %v2816, %v2912
        %v2914 = vpop.f32.mrb[0].mxu0
        %2915 = vmatprep.mubr.bf16.mxu0 %v2470
        %2916 = vmatmul.mubr.bf16.gmra.mrb[0].mxu0 %v2469
        %v2917 = vpop.f32.mrb[0].mxu0
        %v2918 = vadd.f32 %v2821, %v2917
        %v2919 = vpop.f32.mrb[0].mxu0
        %v2920 = vpop.f32.mrb[0].mxu0
        %v2921 = vadd.f32 %v2824, %v2920
        %v2922 = vpop.f32.mrb[0].mxu0
        %2923 = vmatprep.mubr.bf16.mxu0 %v2474
        %2924 = vmatmul.mubr.bf16.gmra.mrb[0].mxu0 %v2473
        %v2925 = vpop.f32.mrb[0].mxu0
        %v2926 = vadd.f32 %v2829, %v2925
        %v2927 = vpop.f32.mrb[0].mxu0
        %v2928 = vpop.f32.mrb[0].mxu0
        %v2929 = vadd.f32 %v2832, %v2928
        %v2930 = vpop.f32.mrb[0].mxu0
        %2931 = vdwg.mxu0
        %2932 = vst [vmem:[%s271] sm:$0xff] %v2870
        %2933 = vst [vmem:[%s271 + $0x8] sm:$0xff] %v2873
        %2934 = vst [vmem:[%s271 + $0x10] sm:$0xff] %v2878
        %2935 = vst [vmem:[%s271 + $0x18] sm:$0xff] %v2881
        %2936 = vst [vmem:[%s271 + $0x20] sm:$0xff] %v2886
        %2937 = vst [vmem:[%s271 + $0x28] sm:$0xff] %v2889
        %2938 = vst [vmem:[%s271 + $0x30] sm:$0xff] %v2894
        %2939 = vst [vmem:[%s271 + $0x38] sm:$0xff] %v2897
        %2940 = vst [vmem:[%s271 + $0x40] sm:$0xff] %v2902
        %2941 = vst [vmem:[%s271 + $0x48] sm:$0xff] %v2905
        %2942 = vst [vmem:[%s271 + $0x50] sm:$0xff] %v2910
        %2943 = vst [vmem:[%s271 + $0x58] sm:$0xff] %v2913
        %2944 = vst [vmem:[%s271 + $0x60] sm:$0xff] %v2918
        %2945 = vst [vmem:[%s271 + $0x68] sm:$0xff] %v2921
        %2946 = vst [vmem:[%s271 + $0x70] sm:$0xff] %v2926
        %2947 = vst [vmem:[%s271 + $0x78] sm:$0xff] %v2929
        %s2948 = sand.u32 %s141, 1
        %s2949 = scalar_lea.sflag [#allocation4], %s2948
        %s2950 = sand.u32 %s141, 1
        %s2951 = smul.addr %s2950, 128
        %s2952 = scalar_lea.vmem [#allocation8], %s2951
        // Predicated region
        $region53: #{tpu_custom_call.1} parent=39 // pred_check
          %p2953 = pneg %p151
        $region54: #{tpu_custom_call.1} parent=39 // pred_check_branch
          %2955 = sbr.rel (%p2953) target = $region56
        $region55: #{tpu_custom_call.1} parent=39 // pred_region
          %s2956 = smul.u32 16, %s23
          %s2958 = ssub.s32 2048, 2048
          %2959 = vsyncadd %s2949, %s2958
          %s2960 = smul.addr %s2956, 128
          %s2961 = scalar_lea.hbm %s5, %s2960
          %s2962 = sshll.u32 %s2952, 4
          %s2963 = int_to_ptr.vmem [resolvable:$true] %s2962
          %2968 = dma.vmem_to_hbm [thread:$0]  %s2963, 2048, %s2961, %s2949, 128, 128, 8
        $region56: #{tpu_custom_call.1} parent=39 // pred_fallthru
          _
      $region40: #{tpu_custom_call.1} parent=5 // pred_fallthru
        _
      %p2969 = scmp.le.s32.totalorder 2, %s18
      // Predicated region
      $region57: #{tpu_custom_call.1} parent=5 // pred_check
        %p2970 = pneg %p2969
      $region58: #{tpu_custom_call.1} parent=5 // pred_check_branch
        %2972 = sbr.rel (%p2970) target = $region60
      $region59: #{tpu_custom_call.1} parent=5 // pred_region
        %s2973 = ssub.s32 %s18, 2
        // Predicated region
        $region61: #{tpu_custom_call.1} parent=59 // pred_check
          %p2974 = pneg %p157
        $region62: #{tpu_custom_call.1} parent=59 // pred_check_branch
          %2976 = sbr.rel (%p2974) target = $region64
        $region63: #{tpu_custom_call.1} parent=59 // pred_region
          %s2977 = sand.u32 %s142, 1
          %s2978 = scalar_lea.sflag [#allocation4], %s2977
          %s2979 = sand.u32 %s142, 1
          %s2980 = smul.addr %s2979, 128
          %s2981 = scalar_lea.vmem [#allocation8], %s2980
          %2982 = dma.done %s2978, 2048
        $region64: #{tpu_custom_call.1} parent=59 // pred_fallthru
          _
      $region60: #{tpu_custom_call.1} parent=5 // pred_fallthru
        _
    $region6: #{tpu_custom_call.1} parent=1 // loop_footer
      %s22 = sadd.s32 1, %s18
    $region7: #{tpu_custom_call.1} parent=1 // loop_footer_branch
      %17 = sbr.rel target = $region3
    $region8: #{tpu_custom_call.1} parent=1 // loop_exit
      _
    %2983 = vsyncpa [#allocation3], 1
    %s2984 = scalar_lea.sflag [#allocation3], 1
    %2985 = vsyncpa %s2984, 1
    %2986 = vsyncpa [#allocation6], 1
    %2987 = vsyncpa [#allocation4], 1
    %s2988 = scalar_lea.sflag [#allocation4], 1
    %2989 = vsyncpa %s2988, 1

</llo_original>
